<compile_context>
chip_gen: v5e
topology: v5e:2x2
jax: 0.10.0
libtpu: 0.0.40
codegen_flags: <defaults>
</compile_context>

<pallas_src>
import functools

import jax
import jax.numpy as jnp
import numpy as np
from jax import lax
from jax.experimental import pallas as pl
from jax.experimental.pallas import tpu as pltpu

N_JOINTS = 17
IN_FEAT = 3
OUT_FEAT = 51            # 17 * 3
OUT_PAD = 128            # lane-dense padded output width (sliced back to 51 outside the kernel)


def _normalized_adjacency():
    # COCO-17 skeleton + self loops, symmetric normalization D^-1/2 (A+I) D^-1/2
    edges = [(0, 1), (0, 2), (1, 3), (2, 4), (0, 5), (0, 6), (5, 7), (7, 9),
             (6, 8), (8, 10), (5, 11), (6, 12), (11, 13), (13, 15), (12, 14),
             (14, 16), (5, 6), (11, 12)]
    A = np.zeros((N_JOINTS, N_JOINTS), dtype=np.float32)
    for i, j in edges:
        A[i, j] = 1.0
        A[j, i] = 1.0
    A += np.eye(N_JOINTS, dtype=np.float32)
    dinv = 1.0 / np.sqrt(A.sum(axis=1))
    return jnp.asarray(A * dinv[:, None] * dinv[None, :])


def tennis_shot_kernel(x_ref, pos_ref,
                       w1f, b1f, w2f, b2f,          # adjacency-folded GCN weights
                       wgi, wpi, bgi,               # pool / pos-layer-2 folded GRU input gates
                       pw1, pb1,                    # positional encoder layer 1
                       wh, bhn,                     # GRU hidden weights (lane-padded gates)
                       wo, bo,                      # padded output projection
                       o_ref, seq_ref,
                       *, T, B_blk, GP):
    f32 = jnp.float32
    TB = T * B_blk

    # ---- 2-layer GCN, adjacency pre-folded into the weights, batched over all (t, b) frames ----
    x = x_ref[...].reshape(TB, N_JOINTS * IN_FEAT)                            # (TB, 51)
    h = jnp.maximum(jnp.dot(x, w1f[...], preferred_element_type=f32) + b1f[...], 0.0)
    h = jnp.maximum(jnp.dot(h, w2f[...], preferred_element_type=f32) + b2f[...], 0.0)  # (TB, 17D)

    # ---- positional encoder layer 1 on the VPU (K=2 contraction wastes an MXU push) ----
    p = pos_ref[...].reshape(TB, 2)
    pw1_m = pw1[...]
    ph = jnp.maximum(p[:, 0:1] * pw1_m[0:1, :] + p[:, 1:2] * pw1_m[1:2, :] + pb1[...], 0.0)

    # ---- GRU input-side gate pre-activations with mean-pool and pos layer 2 folded in ----
    #   gates = (h @ pool + ph @ pw2 + pb2) @ Wi + bi   ==   h @ wgi + ph @ wpi + bgi
    gates_in = (jnp.dot(h, wgi[...], preferred_element_type=f32)
                + jnp.dot(ph, wpi[...], preferred_element_type=f32)
                + bgi[...])                                                   # (TB, 3*GP)
    gates_in = gates_in.reshape(T, B_blk, 3 * GP)

    # ---- GRU recurrence (fully unrolled; each gate sits in its own 128-lane-aligned slab) ----
    wh_m = wh[...]                                                            # (GP, 3GP)
    bhn_b = jnp.broadcast_to(bhn[...], (B_blk, GP))                           # hoisted broadcast
    h_t = jnp.zeros((B_blk, GP), f32)                                         # padded lanes stay 0
    for t in range(T):
        g_in = gates_in[t]                                                    # (B_blk, 3GP)
        g_h = jnp.dot(h_t, wh_m, preferred_element_type=f32)                  # (B_blk, 3GP)
        r = jax.nn.sigmoid(g_in[:, :GP] + g_h[:, :GP])
        z = jax.nn.sigmoid(g_in[:, GP:2 * GP] + g_h[:, GP:2 * GP])
        n = jnp.tanh(g_in[:, 2 * GP:] + r * (g_h[:, 2 * GP:] + bhn_b))
        h_t = (1.0 - z) * n + z * h_t
        seq_ref[t] = h_t                                                      # tile-aligned write

    # ---- output projection over all steps at once, lane-dense (padded to 128 columns) ----
    seq = seq_ref[...].reshape(TB, GP)
    out = jnp.dot(seq, wo[...], preferred_element_type=f32) + bo[...]         # (TB, 128)
    o_ref[...] = out.reshape(T, B_blk, OUT_PAD)


def tennis_shot_embedder(x, global_pos, adj, params, *, D, b_blk=None):
    (gw1, gb1, gw2, gb2, pw1, pb1, pw2, pb2,
     wir, wiz, win_, bir, biz, bin_,
     whr, whz, whn, bhr, bhz, bhn, wout, bout) = params

    B, T = x.shape[0], x.shape[1]
    f32 = jnp.float32

    # --- block sizing: multiple of 8 (sublane tile); target T*b_blk >= 256 to fill the MXU M dim.
    #     grid=1 on small batches (best for single-TC chips); larger batches split into >=256-row
    #     blocks so a multi-block grid can feed both v7x TensorCores. ---
    if b_blk is None:
        b_need = max(8, ((pl.cdiv(256, T) + 7) // 8) * 8)
        b_blk = min(b_need, ((B + 7) // 8) * 8)
    assert b_blk % 8 == 0, b_blk
    B_pad = ((B + b_blk - 1) // b_blk) * b_blk
    G = B_pad // b_blk

    GP = ((D + 127) // 128) * 128        # lane-padded per-gate / hidden width

    eye_d = jnp.eye(D, dtype=f32)
    adj_t = adj.T.astype(f32)

    # --- GCN with the adjacency folded into the weights (exact: relu follows both matmuls) ---
    adjb = jnp.kron(adj_t, eye_d)                             # (17D, 17D) used only for bias folds
    w1f = jnp.kron(adj_t, gw1)                                # (51, 17D)
    b1f = jnp.tile(gb1, (1, N_JOINTS)) @ adjb                 # (1, 17D)
    w2f = jnp.kron(adj_t, gw2)                                # (17D, 17D)
    b2f = jnp.tile(gb2, (1, N_JOINTS)) @ adjb                 # (1, 17D)
    pool = jnp.tile(eye_d / N_JOINTS, (N_JOINTS, 1))          # (17D, D) mean over joints

    # --- GRU gate weights: lane-pad each gate to GP, fold r/z hidden biases into the input bias ---
    def pad_gates(mats, rows):
        out = jnp.zeros((rows, 3 * GP), f32)
        for g, m in enumerate(mats):
            out = out.at[:m.shape[0], g * GP:g * GP + m.shape[1]].set(m)
        return out

    wi_p = pad_gates([wir, wiz, win_], D)                      # (D, 3GP)
    bi_p = pad_gates([bir + bhr, biz + bhz, bin_], 1)          # (1, 3GP) — bhr/bhz folded in
    wh_p = pad_gates([whr, whz, whn], GP)                      # (GP, 3GP), rows >= D are zero
    bhn_p = jnp.zeros((1, GP), f32).at[:, :D].set(bhn)         # (1, GP)

    # --- fold mean-pool and positional second layer directly into the GRU input gates ---
    wgi = pool @ wi_p                                          # (17D, 3GP)
    wpi = pw2 @ wi_p                                           # (D, 3GP)
    bgi = pb2 @ wi_p + bi_p                                    # (1, 3GP)

    # --- lane-dense padded output projection (rows >= D zero, cols >= 51 zero) ---
    wo = jnp.zeros((GP, OUT_PAD), f32).at[:D, :OUT_FEAT].set(wout)
    bo = jnp.zeros((1, OUT_PAD), f32).at[:, :OUT_FEAT].set(bout)

    weights = (w1f, b1f, w2f, b2f, wgi, wpi, bgi, pw1, pb1, wh_p, bhn_p, wo, bo)

    # --- pad batch to a multiple of b_blk, go (t, b)-major inside each block ---
    if B_pad != B:
        x = jnp.pad(x, ((0, B_pad - B), (0, 0), (0, 0), (0, 0)))
        global_pos = jnp.pad(global_pos, ((0, B_pad - B), (0, 0), (0, 0)))
    x_k = x.reshape(G, b_blk, T, N_JOINTS * IN_FEAT).transpose(0, 2, 1, 3)    # (G, T, b_blk, 51)
    p_k = global_pos.reshape(G, b_blk, T, 2).transpose(0, 2, 1, 3)            # (G, T, b_blk, 2)

    kernel = functools.partial(tennis_shot_kernel, T=T, B_blk=b_blk, GP=GP)
    out = pl.pallas_call(
        kernel,
        out_shape=jax.ShapeDtypeStruct((G, T, b_blk, OUT_PAD), f32),
        grid_spec=pltpu.PrefetchScalarGridSpec(
            num_scalar_prefetch=0,
            grid=(G,),
            in_specs=[
                pl.BlockSpec((None, T, b_blk, N_JOINTS * IN_FEAT), lambda g: (g, 0, 0, 0)),
                pl.BlockSpec((None, T, b_blk, 2), lambda g: (g, 0, 0, 0)),
            ] + [pl.BlockSpec(w.shape, lambda g: (0, 0)) for w in weights],
            out_specs=pl.BlockSpec((None, T, b_blk, OUT_PAD), lambda g: (g, 0, 0, 0)),
            scratch_shapes=[pltpu.VMEM((T, b_blk, GP), f32)],
        ),
        compiler_params=pltpu.CompilerParams(dimension_semantics=("parallel",)),
    )(x_k, p_k, *weights)

    out = out[..., :OUT_FEAT]                                   # (G, T, b_blk, 51)
    out = out.transpose(0, 2, 1, 3).reshape(B_pad, T, N_JOINTS, IN_FEAT)
    return out[:B]


def reference(x, global_pos, adj, params, *, D):
    (gw1, gb1, gw2, gb2, pw1, pb1, pw2, pb2,
     wir, wiz, win_, bir, biz, bin_,
     whr, whz, whn, bhr, bhz, bhn, wout, bout) = params
    B, T = x.shape[0], x.shape[1]
    h = jnp.einsum('btnf,fd->btnd', x, gw1) + gb1[0]
    h = jax.nn.relu(jnp.einsum('nm,btmd->btnd', adj, h))
    h = jnp.einsum('btnd,de->btne', h, gw2) + gb2[0]
    h = jax.nn.relu(jnp.einsum('nm,btmd->btnd', adj, h))
    graph_emb = h.mean(axis=2)                                  # (B, T, D)
    ph = jax.nn.relu(global_pos @ pw1 + pb1[0])
    pos_emb = ph @ pw2 + pb2[0]
    comb = graph_emb + pos_emb

    def step(hprev, xt):
        r = jax.nn.sigmoid(xt @ wir + bir[0] + hprev @ whr + bhr[0])
        z = jax.nn.sigmoid(xt @ wiz + biz[0] + hprev @ whz + bhz[0])
        n = jnp.tanh(xt @ win_ + bin_[0] + r * (hprev @ whn + bhn[0]))
        hn = (1.0 - z) * n + z * hprev
        return hn, hn

    xs = jnp.swapaxes(comb, 0, 1)                               # (T, B, D)
    _, seq = lax.scan(step, jnp.zeros((B, D), jnp.float32), xs)
    seq = jnp.swapaxes(seq, 0, 1)                               # (B, T, D)
    out = seq @ wout + bout[0]
    return out.reshape(B, T, N_JOINTS, 3)


if __name__ == "__main__":
    B, T, D = 4, 8, 32
    key = jax.random.PRNGKey(0)
    ks = jax.random.split(key, 32)

    x = jax.random.normal(ks[0], (B, T, N_JOINTS, IN_FEAT), jnp.float32)
    global_pos = jax.random.normal(ks[1], (B, T, 2), jnp.float32)
    adj = _normalized_adjacency()

    def w(k, shape, scale=0.2):
        return scale * jax.random.normal(k, shape, jnp.float32)

    params = (
        # graph module (GCN)
        w(ks[2], (IN_FEAT, D)), w(ks[3], (1, D)),
        w(ks[4], (D, D)),       w(ks[5], (1, D)),
        # positional encoding MLP
        w(ks[6], (2, D)),       w(ks[7], (1, D)),
        w(ks[8], (D, D)),       w(ks[9], (1, D)),
        # GRU input weights / biases
        w(ks[10], (D, D)), w(ks[11], (D, D)), w(ks[12], (D, D)),
        w(ks[13], (1, D)), w(ks[14], (1, D)), w(ks[15], (1, D)),
        # GRU hidden weights / biases
        w(ks[16], (D, D)), w(ks[17], (D, D)), w(ks[18], (D, D)),
        w(ks[19], (1, D)), w(ks[20], (1, D)), w(ks[21], (1, D)),
        # output MLP
        w(ks[22], (D, OUT_FEAT)), w(ks[23], (1, OUT_FEAT)),
    )

    out = tennis_shot_embedder(x, global_pos, adj, params, D=D)
    out = jax.block_until_ready(out)

    ref = reference(x, global_pos, adj, params, D=D)
    assert out.shape == (B, T, 17, 3), out.shape
    assert bool(jnp.all(jnp.isfinite(out)))
    max_err = float(jnp.max(jnp.abs(out - ref)))
    assert bool(jnp.allclose(out, ref, rtol=1e-4, atol=1e-4)), max_err
    print("KERNEL_OK")
</pallas_src>

<mosaic_0001>
module attributes {stable_mosaic.version = 11 : i64} {
  func.func @tennis_shot_kernel(%arg0: i32, %arg1: memref<1x8x8x51xf32, #tpu.memory_space<vmem>>, %arg2: memref<1x8x8x2xf32, #tpu.memory_space<vmem>>, %arg3: memref<51x544xf32, #tpu.memory_space<vmem>>, %arg4: memref<1x544xf32, #tpu.memory_space<vmem>>, %arg5: memref<544x544xf32, #tpu.memory_space<vmem>>, %arg6: memref<1x544xf32, #tpu.memory_space<vmem>>, %arg7: memref<544x384xf32, #tpu.memory_space<vmem>>, %arg8: memref<32x384xf32, #tpu.memory_space<vmem>>, %arg9: memref<1x384xf32, #tpu.memory_space<vmem>>, %arg10: memref<2x32xf32, #tpu.memory_space<vmem>>, %arg11: memref<1x32xf32, #tpu.memory_space<vmem>>, %arg12: memref<128x384xf32, #tpu.memory_space<vmem>>, %arg13: memref<1x128xf32, #tpu.memory_space<vmem>>, %arg14: memref<128x128xf32, #tpu.memory_space<vmem>>, %arg15: memref<1x128xf32, #tpu.memory_space<vmem>>, %arg16: memref<1x8x8x128xf32, #tpu.memory_space<vmem>>, %arg17: memref<8x8x128xf32, #tpu.memory_space<vmem>>) attributes {dimension_semantics = [#tpu.dimension_semantics<parallel>], iteration_bounds = array<i64: 1>, scalar_prefetch = 0 : i64, scratch_operands = 1 : i64, tpu.core_type = #tpu.core_type<tc>, window_params = [{transform_indices = @transform_0, window_bounds = array<i64: 1, 8, 8, 51>}, {transform_indices = @transform_1, window_bounds = array<i64: 1, 8, 8, 2>}, {pipeline_mode = #tpu.pipeline_mode<synchronous>, transform_indices = @transform_2, window_bounds = array<i64: 51, 544>}, {pipeline_mode = #tpu.pipeline_mode<synchronous>, transform_indices = @transform_3, window_bounds = array<i64: 1, 544>}, {pipeline_mode = #tpu.pipeline_mode<synchronous>, transform_indices = @transform_4, window_bounds = array<i64: 544, 544>}, {pipeline_mode = #tpu.pipeline_mode<synchronous>, transform_indices = @transform_5, window_bounds = array<i64: 1, 544>}, {pipeline_mode = #tpu.pipeline_mode<synchronous>, transform_indices = @transform_6, window_bounds = array<i64: 544, 384>}, {pipeline_mode = #tpu.pipeline_mode<synchronous>, transform_indices = @transform_7, window_bounds = array<i64: 32, 384>}, {pipeline_mode = #tpu.pipeline_mode<synchronous>, transform_indices = @transform_8, window_bounds = array<i64: 1, 384>}, {pipeline_mode = #tpu.pipeline_mode<synchronous>, transform_indices = @transform_9, window_bounds = array<i64: 2, 32>}, {pipeline_mode = #tpu.pipeline_mode<synchronous>, transform_indices = @transform_10, window_bounds = array<i64: 1, 32>}, {pipeline_mode = #tpu.pipeline_mode<synchronous>, transform_indices = @transform_11, window_bounds = array<i64: 128, 384>}, {pipeline_mode = #tpu.pipeline_mode<synchronous>, transform_indices = @transform_12, window_bounds = array<i64: 1, 128>}, {pipeline_mode = #tpu.pipeline_mode<synchronous>, transform_indices = @transform_13, window_bounds = array<i64: 128, 128>}, {pipeline_mode = #tpu.pipeline_mode<synchronous>, transform_indices = @transform_14, window_bounds = array<i64: 1, 128>}, {transform_indices = @transform_15, window_bounds = array<i64: 1, 8, 8, 128>}]} {
    %c0 = arith.constant 0 : index
    %c0_0 = arith.constant 0 : index
    %c0_1 = arith.constant 0 : index
    %c0_2 = arith.constant 0 : index
    %0 = vector.load %arg1[%c0, %c0_0, %c0_1, %c0_2] : memref<1x8x8x51xf32, #tpu.memory_space<vmem>>, vector<1x8x8x51xf32>
    %1 = vector.shape_cast %0 : vector<1x8x8x51xf32> to vector<8x8x51xf32>
    %2 = vector.shape_cast %1 : vector<8x8x51xf32> to vector<64x51xf32>
    %c0_3 = arith.constant 0 : index
    %c0_4 = arith.constant 0 : index
    %3 = vector.load %arg3[%c0_3, %c0_4] : memref<51x544xf32, #tpu.memory_space<vmem>>, vector<51x544xf32>
    %cst = arith.constant dense<0.000000e+00> : vector<64x544xf32>
    %4 = tpu.matmul %2, %3, %cst {dimension_numbers = #tpu.dot_dimension_numbers<[1], [0], [0], [1], [0, 0, 1, 1], [], []>} : vector<64x51xf32>, vector<51x544xf32>, vector<64x544xf32> -> vector<64x544xf32>
    %c0_5 = arith.constant 0 : index
    %c0_6 = arith.constant 0 : index
    %5 = vector.load %arg4[%c0_5, %c0_6] : memref<1x544xf32, #tpu.memory_space<vmem>>, vector<1x544xf32>
    %6 = vector.broadcast %5 : vector<1x544xf32> to vector<64x544xf32>
    %7 = arith.addf %4, %6 : vector<64x544xf32>
    %cst_7 = arith.constant 0.000000e+00 : f32
    %8 = vector.broadcast %cst_7 : f32 to vector<64x544xf32>
    %9 = arith.maximumf %7, %8 : vector<64x544xf32>
    %c0_8 = arith.constant 0 : index
    %c0_9 = arith.constant 0 : index
    %10 = vector.load %arg5[%c0_8, %c0_9] : memref<544x544xf32, #tpu.memory_space<vmem>>, vector<544x544xf32>
    %cst_10 = arith.constant dense<0.000000e+00> : vector<64x544xf32>
    %11 = tpu.matmul %9, %10, %cst_10 {dimension_numbers = #tpu.dot_dimension_numbers<[1], [0], [0], [1], [0, 0, 1, 1], [], []>} : vector<64x544xf32>, vector<544x544xf32>, vector<64x544xf32> -> vector<64x544xf32>
    %c0_11 = arith.constant 0 : index
    %c0_12 = arith.constant 0 : index
    %12 = vector.load %arg6[%c0_11, %c0_12] : memref<1x544xf32, #tpu.memory_space<vmem>>, vector<1x544xf32>
    %13 = vector.broadcast %12 : vector<1x544xf32> to vector<64x544xf32>
    %14 = arith.addf %11, %13 : vector<64x544xf32>
    %cst_13 = arith.constant 0.000000e+00 : f32
    %15 = vector.broadcast %cst_13 : f32 to vector<64x544xf32>
    %16 = arith.maximumf %14, %15 : vector<64x544xf32>
    %c0_14 = arith.constant 0 : index
    %c0_15 = arith.constant 0 : index
    %c0_16 = arith.constant 0 : index
    %c0_17 = arith.constant 0 : index
    %17 = vector.load %arg2[%c0_14, %c0_15, %c0_16, %c0_17] : memref<1x8x8x2xf32, #tpu.memory_space<vmem>>, vector<1x8x8x2xf32>
    %18 = vector.shape_cast %17 : vector<1x8x8x2xf32> to vector<8x8x2xf32>
    %19 = vector.shape_cast %18 : vector<8x8x2xf32> to vector<64x2xf32>
    %c0_18 = arith.constant 0 : index
    %c0_19 = arith.constant 0 : index
    %20 = vector.load %arg10[%c0_18, %c0_19] : memref<2x32xf32, #tpu.memory_space<vmem>>, vector<2x32xf32>
    %21 = vector.extract_strided_slice %19 {offsets = [0, 0], sizes = [64, 1], strides = [1, 1]} : vector<64x2xf32> to vector<64x1xf32>
    %22 = vector.extract_strided_slice %20 {offsets = [0, 0], sizes = [1, 32], strides = [1, 1]} : vector<2x32xf32> to vector<1x32xf32>
    %23 = vector.broadcast %21 : vector<64x1xf32> to vector<64x32xf32>
    %24 = vector.broadcast %22 : vector<1x32xf32> to vector<64x32xf32>
    %25 = arith.mulf %23, %24 : vector<64x32xf32>
    %26 = vector.extract_strided_slice %19 {offsets = [0, 1], sizes = [64, 1], strides = [1, 1]} : vector<64x2xf32> to vector<64x1xf32>
    %27 = vector.extract_strided_slice %20 {offsets = [1, 0], sizes = [1, 32], strides = [1, 1]} : vector<2x32xf32> to vector<1x32xf32>
    %28 = vector.broadcast %26 : vector<64x1xf32> to vector<64x32xf32>
    %29 = vector.broadcast %27 : vector<1x32xf32> to vector<64x32xf32>
    %30 = arith.mulf %28, %29 : vector<64x32xf32>
    %31 = arith.addf %25, %30 : vector<64x32xf32>
    %c0_20 = arith.constant 0 : index
    %c0_21 = arith.constant 0 : index
    %32 = vector.load %arg11[%c0_20, %c0_21] : memref<1x32xf32, #tpu.memory_space<vmem>>, vector<1x32xf32>
    %33 = vector.broadcast %32 : vector<1x32xf32> to vector<64x32xf32>
    %34 = arith.addf %31, %33 : vector<64x32xf32>
    %cst_22 = arith.constant 0.000000e+00 : f32
    %35 = vector.broadcast %cst_22 : f32 to vector<64x32xf32>
    %36 = arith.maximumf %34, %35 : vector<64x32xf32>
    %c0_23 = arith.constant 0 : index
    %c0_24 = arith.constant 0 : index
    %37 = vector.load %arg7[%c0_23, %c0_24] : memref<544x384xf32, #tpu.memory_space<vmem>>, vector<544x384xf32>
    %cst_25 = arith.constant dense<0.000000e+00> : vector<64x384xf32>
    %38 = tpu.matmul %16, %37, %cst_25 {dimension_numbers = #tpu.dot_dimension_numbers<[1], [0], [0], [1], [0, 0, 1, 1], [], []>} : vector<64x544xf32>, vector<544x384xf32>, vector<64x384xf32> -> vector<64x384xf32>
    %c0_26 = arith.constant 0 : index
    %c0_27 = arith.constant 0 : index
    %39 = vector.load %arg8[%c0_26, %c0_27] : memref<32x384xf32, #tpu.memory_space<vmem>>, vector<32x384xf32>
    %cst_28 = arith.constant dense<0.000000e+00> : vector<64x384xf32>
    %40 = tpu.matmul %36, %39, %cst_28 {dimension_numbers = #tpu.dot_dimension_numbers<[1], [0], [0], [1], [0, 0, 1, 1], [], []>} : vector<64x32xf32>, vector<32x384xf32>, vector<64x384xf32> -> vector<64x384xf32>
    %41 = arith.addf %38, %40 : vector<64x384xf32>
    %c0_29 = arith.constant 0 : index
    %c0_30 = arith.constant 0 : index
    %42 = vector.load %arg9[%c0_29, %c0_30] : memref<1x384xf32, #tpu.memory_space<vmem>>, vector<1x384xf32>
    %43 = vector.broadcast %42 : vector<1x384xf32> to vector<64x384xf32>
    %44 = arith.addf %41, %43 : vector<64x384xf32>
    %45 = vector.shape_cast %44 : vector<64x384xf32> to vector<8x8x384xf32>
    %c0_31 = arith.constant 0 : index
    %c0_32 = arith.constant 0 : index
    %46 = vector.load %arg12[%c0_31, %c0_32] : memref<128x384xf32, #tpu.memory_space<vmem>>, vector<128x384xf32>
    %c0_33 = arith.constant 0 : index
    %c0_34 = arith.constant 0 : index
    %47 = vector.load %arg13[%c0_33, %c0_34] : memref<1x128xf32, #tpu.memory_space<vmem>>, vector<1x128xf32>
    %48 = vector.shape_cast %47 : vector<1x128xf32> to vector<1x128xf32>
    %49 = vector.broadcast %48 : vector<1x128xf32> to vector<8x128xf32>
    %cst_35 = arith.constant 0.000000e+00 : f32
    %50 = vector.broadcast %cst_35 : f32 to vector<8x128xf32>
    %51 = vector.extract_strided_slice %45 {offsets = [0, 0, 0], sizes = [1, 8, 384], strides = [1, 1, 1]} : vector<8x8x384xf32> to vector<1x8x384xf32>
    %52 = vector.shape_cast %51 : vector<1x8x384xf32> to vector<8x384xf32>
    %cst_36 = arith.constant dense<0.000000e+00> : vector<8x384xf32>
    %53 = tpu.matmul %50, %46, %cst_36 {dimension_numbers = #tpu.dot_dimension_numbers<[1], [0], [0], [1], [0, 0, 1, 1], [], []>} : vector<8x128xf32>, vector<128x384xf32>, vector<8x384xf32> -> vector<8x384xf32>
    %54 = vector.extract_strided_slice %52 {offsets = [0, 0], sizes = [8, 128], strides = [1, 1]} : vector<8x384xf32> to vector<8x128xf32>
    %55 = vector.extract_strided_slice %53 {offsets = [0, 0], sizes = [8, 128], strides = [1, 1]} : vector<8x384xf32> to vector<8x128xf32>
    %56 = arith.addf %54, %55 : vector<8x128xf32>
    %57 = arith.negf %56 : vector<8x128xf32>
    %58 = math.exp %57 : vector<8x128xf32>
    %cst_37 = arith.constant 1.000000e+00 : f32
    %59 = vector.broadcast %cst_37 : f32 to vector<8x128xf32>
    %60 = arith.addf %59, %58 : vector<8x128xf32>
    %61 = arith.divf %59, %60 : vector<8x128xf32>
    %62 = vector.extract_strided_slice %52 {offsets = [0, 128], sizes = [8, 128], strides = [1, 1]} : vector<8x384xf32> to vector<8x128xf32>
    %63 = vector.extract_strided_slice %53 {offsets = [0, 128], sizes = [8, 128], strides = [1, 1]} : vector<8x384xf32> to vector<8x128xf32>
    %64 = arith.addf %62, %63 : vector<8x128xf32>
    %65 = arith.negf %64 : vector<8x128xf32>
    %66 = math.exp %65 : vector<8x128xf32>
    %cst_38 = arith.constant 1.000000e+00 : f32
    %67 = vector.broadcast %cst_38 : f32 to vector<8x128xf32>
    %68 = arith.addf %67, %66 : vector<8x128xf32>
    %69 = arith.divf %67, %68 : vector<8x128xf32>
    %70 = vector.extract_strided_slice %52 {offsets = [0, 256], sizes = [8, 128], strides = [1, 1]} : vector<8x384xf32> to vector<8x128xf32>
    %71 = vector.extract_strided_slice %53 {offsets = [0, 256], sizes = [8, 128], strides = [1, 1]} : vector<8x384xf32> to vector<8x128xf32>
    %72 = arith.addf %71, %49 : vector<8x128xf32>
    %73 = arith.mulf %61, %72 : vector<8x128xf32>
    %74 = arith.addf %70, %73 : vector<8x128xf32>
    %75 = math.tanh %74 : vector<8x128xf32>
    %cst_39 = arith.constant 1.000000e+00 : f32
    %76 = vector.broadcast %cst_39 : f32 to vector<8x128xf32>
    %77 = arith.subf %76, %69 : vector<8x128xf32>
    %78 = arith.mulf %77, %75 : vector<8x128xf32>
    %79 = arith.mulf %69, %50 : vector<8x128xf32>
    %80 = arith.addf %78, %79 : vector<8x128xf32>
    %c0_40 = arith.constant 0 : index
    %c0_41 = arith.constant 0 : index
    %c0_42 = arith.constant 0 : index
    %81 = vector.load %arg17[%c0_40, %c0_41, %c0_42] : memref<8x8x128xf32, #tpu.memory_space<vmem>>, vector<1x8x128xf32>
    %82 = vector.shape_cast %81 : vector<1x8x128xf32> to vector<8x128xf32>
    %83 = vector.shape_cast %80 : vector<8x128xf32> to vector<1x8x128xf32>
    tpu.vector_store %arg17[%c0_40, %c0_41, %c0_42], %83 {strides = array<i32>} : memref<8x8x128xf32, #tpu.memory_space<vmem>>, vector<1x8x128xf32>,
    %84 = vector.extract_strided_slice %45 {offsets = [1, 0, 0], sizes = [1, 8, 384], strides = [1, 1, 1]} : vector<8x8x384xf32> to vector<1x8x384xf32>
    %85 = vector.shape_cast %84 : vector<1x8x384xf32> to vector<8x384xf32>
    %cst_43 = arith.constant dense<0.000000e+00> : vector<8x384xf32>
    %86 = tpu.matmul %80, %46, %cst_43 {dimension_numbers = #tpu.dot_dimension_numbers<[1], [0], [0], [1], [0, 0, 1, 1], [], []>} : vector<8x128xf32>, vector<128x384xf32>, vector<8x384xf32> -> vector<8x384xf32>
    %87 = vector.extract_strided_slice %85 {offsets = [0, 0], sizes = [8, 128], strides = [1, 1]} : vector<8x384xf32> to vector<8x128xf32>
    %88 = vector.extract_strided_slice %86 {offsets = [0, 0], sizes = [8, 128], strides = [1, 1]} : vector<8x384xf32> to vector<8x128xf32>
    %89 = arith.addf %87, %88 : vector<8x128xf32>
    %90 = arith.negf %89 : vector<8x128xf32>
    %91 = math.exp %90 : vector<8x128xf32>
    %cst_44 = arith.constant 1.000000e+00 : f32
    %92 = vector.broadcast %cst_44 : f32 to vector<8x128xf32>
    %93 = arith.addf %92, %91 : vector<8x128xf32>
    %94 = arith.divf %92, %93 : vector<8x128xf32>
    %95 = vector.extract_strided_slice %85 {offsets = [0, 128], sizes = [8, 128], strides = [1, 1]} : vector<8x384xf32> to vector<8x128xf32>
    %96 = vector.extract_strided_slice %86 {offsets = [0, 128], sizes = [8, 128], strides = [1, 1]} : vector<8x384xf32> to vector<8x128xf32>
    %97 = arith.addf %95, %96 : vector<8x128xf32>
    %98 = arith.negf %97 : vector<8x128xf32>
    %99 = math.exp %98 : vector<8x128xf32>
    %cst_45 = arith.constant 1.000000e+00 : f32
    %100 = vector.broadcast %cst_45 : f32 to vector<8x128xf32>
    %101 = arith.addf %100, %99 : vector<8x128xf32>
    %102 = arith.divf %100, %101 : vector<8x128xf32>
    %103 = vector.extract_strided_slice %85 {offsets = [0, 256], sizes = [8, 128], strides = [1, 1]} : vector<8x384xf32> to vector<8x128xf32>
    %104 = vector.extract_strided_slice %86 {offsets = [0, 256], sizes = [8, 128], strides = [1, 1]} : vector<8x384xf32> to vector<8x128xf32>
    %105 = arith.addf %104, %49 : vector<8x128xf32>
    %106 = arith.mulf %94, %105 : vector<8x128xf32>
    %107 = arith.addf %103, %106 : vector<8x128xf32>
    %108 = math.tanh %107 : vector<8x128xf32>
    %cst_46 = arith.constant 1.000000e+00 : f32
    %109 = vector.broadcast %cst_46 : f32 to vector<8x128xf32>
    %110 = arith.subf %109, %102 : vector<8x128xf32>
    %111 = arith.mulf %110, %108 : vector<8x128xf32>
    %112 = arith.mulf %102, %80 : vector<8x128xf32>
    %113 = arith.addf %111, %112 : vector<8x128xf32>
    %c1 = arith.constant 1 : index
    %c0_47 = arith.constant 0 : index
    %c0_48 = arith.constant 0 : index
    %114 = vector.load %arg17[%c1, %c0_47, %c0_48] : memref<8x8x128xf32, #tpu.memory_space<vmem>>, vector<1x8x128xf32>
    %115 = vector.shape_cast %114 : vector<1x8x128xf32> to vector<8x128xf32>
    %116 = vector.shape_cast %113 : vector<8x128xf32> to vector<1x8x128xf32>
    tpu.vector_store %arg17[%c1, %c0_47, %c0_48], %116 {strides = array<i32>} : memref<8x8x128xf32, #tpu.memory_space<vmem>>, vector<1x8x128xf32>,
    %117 = vector.extract_strided_slice %45 {offsets = [2, 0, 0], sizes = [1, 8, 384], strides = [1, 1, 1]} : vector<8x8x384xf32> to vector<1x8x384xf32>
    %118 = vector.shape_cast %117 : vector<1x8x384xf32> to vector<8x384xf32>
    %cst_49 = arith.constant dense<0.000000e+00> : vector<8x384xf32>
    %119 = tpu.matmul %113, %46, %cst_49 {dimension_numbers = #tpu.dot_dimension_numbers<[1], [0], [0], [1], [0, 0, 1, 1], [], []>} : vector<8x128xf32>, vector<128x384xf32>, vector<8x384xf32> -> vector<8x384xf32>
    %120 = vector.extract_strided_slice %118 {offsets = [0, 0], sizes = [8, 128], strides = [1, 1]} : vector<8x384xf32> to vector<8x128xf32>
    %121 = vector.extract_strided_slice %119 {offsets = [0, 0], sizes = [8, 128], strides = [1, 1]} : vector<8x384xf32> to vector<8x128xf32>
    %122 = arith.addf %120, %121 : vector<8x128xf32>
    %123 = arith.negf %122 : vector<8x128xf32>
    %124 = math.exp %123 : vector<8x128xf32>
    %cst_50 = arith.constant 1.000000e+00 : f32
    %125 = vector.broadcast %cst_50 : f32 to vector<8x128xf32>
    %126 = arith.addf %125, %124 : vector<8x128xf32>
    %127 = arith.divf %125, %126 : vector<8x128xf32>
    %128 = vector.extract_strided_slice %118 {offsets = [0, 128], sizes = [8, 128], strides = [1, 1]} : vector<8x384xf32> to vector<8x128xf32>
    %129 = vector.extract_strided_slice %119 {offsets = [0, 128], sizes = [8, 128], strides = [1, 1]} : vector<8x384xf32> to vector<8x128xf32>
    %130 = arith.addf %128, %129 : vector<8x128xf32>
    %131 = arith.negf %130 : vector<8x128xf32>
    %132 = math.exp %131 : vector<8x128xf32>
    %cst_51 = arith.constant 1.000000e+00 : f32
    %133 = vector.broadcast %cst_51 : f32 to vector<8x128xf32>
    %134 = arith.addf %133, %132 : vector<8x128xf32>
    %135 = arith.divf %133, %134 : vector<8x128xf32>
    %136 = vector.extract_strided_slice %118 {offsets = [0, 256], sizes = [8, 128], strides = [1, 1]} : vector<8x384xf32> to vector<8x128xf32>
    %137 = vector.extract_strided_slice %119 {offsets = [0, 256], sizes = [8, 128], strides = [1, 1]} : vector<8x384xf32> to vector<8x128xf32>
    %138 = arith.addf %137, %49 : vector<8x128xf32>
    %139 = arith.mulf %127, %138 : vector<8x128xf32>
    %140 = arith.addf %136, %139 : vector<8x128xf32>
    %141 = math.tanh %140 : vector<8x128xf32>
    %cst_52 = arith.constant 1.000000e+00 : f32
    %142 = vector.broadcast %cst_52 : f32 to vector<8x128xf32>
    %143 = arith.subf %142, %135 : vector<8x128xf32>
    %144 = arith.mulf %143, %141 : vector<8x128xf32>
    %145 = arith.mulf %135, %113 : vector<8x128xf32>
    %146 = arith.addf %144, %145 : vector<8x128xf32>
    %c2 = arith.constant 2 : index
    %c0_53 = arith.constant 0 : index
    %c0_54 = arith.constant 0 : index
    %147 = vector.load %arg17[%c2, %c0_53, %c0_54] : memref<8x8x128xf32, #tpu.memory_space<vmem>>, vector<1x8x128xf32>
    %148 = vector.shape_cast %147 : vector<1x8x128xf32> to vector<8x128xf32>
    %149 = vector.shape_cast %146 : vector<8x128xf32> to vector<1x8x128xf32>
    tpu.vector_store %arg17[%c2, %c0_53, %c0_54], %149 {strides = array<i32>} : memref<8x8x128xf32, #tpu.memory_space<vmem>>, vector<1x8x128xf32>,
    %150 = vector.extract_strided_slice %45 {offsets = [3, 0, 0], sizes = [1, 8, 384], strides = [1, 1, 1]} : vector<8x8x384xf32> to vector<1x8x384xf32>
    %151 = vector.shape_cast %150 : vector<1x8x384xf32> to vector<8x384xf32>
    %cst_55 = arith.constant dense<0.000000e+00> : vector<8x384xf32>
    %152 = tpu.matmul %146, %46, %cst_55 {dimension_numbers = #tpu.dot_dimension_numbers<[1], [0], [0], [1], [0, 0, 1, 1], [], []>} : vector<8x128xf32>, vector<128x384xf32>, vector<8x384xf32> -> vector<8x384xf32>
    %153 = vector.extract_strided_slice %151 {offsets = [0, 0], sizes = [8, 128], strides = [1, 1]} : vector<8x384xf32> to vector<8x128xf32>
    %154 = vector.extract_strided_slice %152 {offsets = [0, 0], sizes = [8, 128], strides = [1, 1]} : vector<8x384xf32> to vector<8x128xf32>
    %155 = arith.addf %153, %154 : vector<8x128xf32>
    %156 = arith.negf %155 : vector<8x128xf32>
    %157 = math.exp %156 : vector<8x128xf32>
    %cst_56 = arith.constant 1.000000e+00 : f32
    %158 = vector.broadcast %cst_56 : f32 to vector<8x128xf32>
    %159 = arith.addf %158, %157 : vector<8x128xf32>
    %160 = arith.divf %158, %159 : vector<8x128xf32>
    %161 = vector.extract_strided_slice %151 {offsets = [0, 128], sizes = [8, 128], strides = [1, 1]} : vector<8x384xf32> to vector<8x128xf32>
    %162 = vector.extract_strided_slice %152 {offsets = [0, 128], sizes = [8, 128], strides = [1, 1]} : vector<8x384xf32> to vector<8x128xf32>
    %163 = arith.addf %161, %162 : vector<8x128xf32>
    %164 = arith.negf %163 : vector<8x128xf32>
    %165 = math.exp %164 : vector<8x128xf32>
    %cst_57 = arith.constant 1.000000e+00 : f32
    %166 = vector.broadcast %cst_57 : f32 to vector<8x128xf32>
    %167 = arith.addf %166, %165 : vector<8x128xf32>
    %168 = arith.divf %166, %167 : vector<8x128xf32>
    %169 = vector.extract_strided_slice %151 {offsets = [0, 256], sizes = [8, 128], strides = [1, 1]} : vector<8x384xf32> to vector<8x128xf32>
    %170 = vector.extract_strided_slice %152 {offsets = [0, 256], sizes = [8, 128], strides = [1, 1]} : vector<8x384xf32> to vector<8x128xf32>
    %171 = arith.addf %170, %49 : vector<8x128xf32>
    %172 = arith.mulf %160, %171 : vector<8x128xf32>
    %173 = arith.addf %169, %172 : vector<8x128xf32>
    %174 = math.tanh %173 : vector<8x128xf32>
    %cst_58 = arith.constant 1.000000e+00 : f32
    %175 = vector.broadcast %cst_58 : f32 to vector<8x128xf32>
    %176 = arith.subf %175, %168 : vector<8x128xf32>
    %177 = arith.mulf %176, %174 : vector<8x128xf32>
    %178 = arith.mulf %168, %146 : vector<8x128xf32>
    %179 = arith.addf %177, %178 : vector<8x128xf32>
    %c3 = arith.constant 3 : index
    %c0_59 = arith.constant 0 : index
    %c0_60 = arith.constant 0 : index
    %180 = vector.load %arg17[%c3, %c0_59, %c0_60] : memref<8x8x128xf32, #tpu.memory_space<vmem>>, vector<1x8x128xf32>
    %181 = vector.shape_cast %180 : vector<1x8x128xf32> to vector<8x128xf32>
    %182 = vector.shape_cast %179 : vector<8x128xf32> to vector<1x8x128xf32>
    tpu.vector_store %arg17[%c3, %c0_59, %c0_60], %182 {strides = array<i32>} : memref<8x8x128xf32, #tpu.memory_space<vmem>>, vector<1x8x128xf32>,
    %183 = vector.extract_strided_slice %45 {offsets = [4, 0, 0], sizes = [1, 8, 384], strides = [1, 1, 1]} : vector<8x8x384xf32> to vector<1x8x384xf32>
    %184 = vector.shape_cast %183 : vector<1x8x384xf32> to vector<8x384xf32>
    %cst_61 = arith.constant dense<0.000000e+00> : vector<8x384xf32>
    %185 = tpu.matmul %179, %46, %cst_61 {dimension_numbers = #tpu.dot_dimension_numbers<[1], [0], [0], [1], [0, 0, 1, 1], [], []>} : vector<8x128xf32>, vector<128x384xf32>, vector<8x384xf32> -> vector<8x384xf32>
    %186 = vector.extract_strided_slice %184 {offsets = [0, 0], sizes = [8, 128], strides = [1, 1]} : vector<8x384xf32> to vector<8x128xf32>
    %187 = vector.extract_strided_slice %185 {offsets = [0, 0], sizes = [8, 128], strides = [1, 1]} : vector<8x384xf32> to vector<8x128xf32>
    %188 = arith.addf %186, %187 : vector<8x128xf32>
    %189 = arith.negf %188 : vector<8x128xf32>
    %190 = math.exp %189 : vector<8x128xf32>
    %cst_62 = arith.constant 1.000000e+00 : f32
    %191 = vector.broadcast %cst_62 : f32 to vector<8x128xf32>
    %192 = arith.addf %191, %190 : vector<8x128xf32>
    %193 = arith.divf %191, %192 : vector<8x128xf32>
    %194 = vector.extract_strided_slice %184 {offsets = [0, 128], sizes = [8, 128], strides = [1, 1]} : vector<8x384xf32> to vector<8x128xf32>
    %195 = vector.extract_strided_slice %185 {offsets = [0, 128], sizes = [8, 128], strides = [1, 1]} : vector<8x384xf32> to vector<8x128xf32>
    %196 = arith.addf %194, %195 : vector<8x128xf32>
    %197 = arith.negf %196 : vector<8x128xf32>
    %198 = math.exp %197 : vector<8x128xf32>
    %cst_63 = arith.constant 1.000000e+00 : f32
    %199 = vector.broadcast %cst_63 : f32 to vector<8x128xf32>
    %200 = arith.addf %199, %198 : vector<8x128xf32>
    %201 = arith.divf %199, %200 : vector<8x128xf32>
    %202 = vector.extract_strided_slice %184 {offsets = [0, 256], sizes = [8, 128], strides = [1, 1]} : vector<8x384xf32> to vector<8x128xf32>
    %203 = vector.extract_strided_slice %185 {offsets = [0, 256], sizes = [8, 128], strides = [1, 1]} : vector<8x384xf32> to vector<8x128xf32>
    %204 = arith.addf %203, %49 : vector<8x128xf32>
    %205 = arith.mulf %193, %204 : vector<8x128xf32>
    %206 = arith.addf %202, %205 : vector<8x128xf32>
    %207 = math.tanh %206 : vector<8x128xf32>
    %cst_64 = arith.constant 1.000000e+00 : f32
    %208 = vector.broadcast %cst_64 : f32 to vector<8x128xf32>
    %209 = arith.subf %208, %201 : vector<8x128xf32>
    %210 = arith.mulf %209, %207 : vector<8x128xf32>
    %211 = arith.mulf %201, %179 : vector<8x128xf32>
    %212 = arith.addf %210, %211 : vector<8x128xf32>
    %c4 = arith.constant 4 : index
    %c0_65 = arith.constant 0 : index
    %c0_66 = arith.constant 0 : index
    %213 = vector.load %arg17[%c4, %c0_65, %c0_66] : memref<8x8x128xf32, #tpu.memory_space<vmem>>, vector<1x8x128xf32>
    %214 = vector.shape_cast %213 : vector<1x8x128xf32> to vector<8x128xf32>
    %215 = vector.shape_cast %212 : vector<8x128xf32> to vector<1x8x128xf32>
    tpu.vector_store %arg17[%c4, %c0_65, %c0_66], %215 {strides = array<i32>} : memref<8x8x128xf32, #tpu.memory_space<vmem>>, vector<1x8x128xf32>,
    %216 = vector.extract_strided_slice %45 {offsets = [5, 0, 0], sizes = [1, 8, 384], strides = [1, 1, 1]} : vector<8x8x384xf32> to vector<1x8x384xf32>
    %217 = vector.shape_cast %216 : vector<1x8x384xf32> to vector<8x384xf32>
    %cst_67 = arith.constant dense<0.000000e+00> : vector<8x384xf32>
    %218 = tpu.matmul %212, %46, %cst_67 {dimension_numbers = #tpu.dot_dimension_numbers<[1], [0], [0], [1], [0, 0, 1, 1], [], []>} : vector<8x128xf32>, vector<128x384xf32>, vector<8x384xf32> -> vector<8x384xf32>
    %219 = vector.extract_strided_slice %217 {offsets = [0, 0], sizes = [8, 128], strides = [1, 1]} : vector<8x384xf32> to vector<8x128xf32>
    %220 = vector.extract_strided_slice %218 {offsets = [0, 0], sizes = [8, 128], strides = [1, 1]} : vector<8x384xf32> to vector<8x128xf32>
    %221 = arith.addf %219, %220 : vector<8x128xf32>
    %222 = arith.negf %221 : vector<8x128xf32>
    %223 = math.exp %222 : vector<8x128xf32>
    %cst_68 = arith.constant 1.000000e+00 : f32
    %224 = vector.broadcast %cst_68 : f32 to vector<8x128xf32>
    %225 = arith.addf %224, %223 : vector<8x128xf32>
    %226 = arith.divf %224, %225 : vector<8x128xf32>
    %227 = vector.extract_strided_slice %217 {offsets = [0, 128], sizes = [8, 128], strides = [1, 1]} : vector<8x384xf32> to vector<8x128xf32>
    %228 = vector.extract_strided_slice %218 {offsets = [0, 128], sizes = [8, 128], strides = [1, 1]} : vector<8x384xf32> to vector<8x128xf32>
    %229 = arith.addf %227, %228 : vector<8x128xf32>
    %230 = arith.negf %229 : vector<8x128xf32>
    %231 = math.exp %230 : vector<8x128xf32>
    %cst_69 = arith.constant 1.000000e+00 : f32
    %232 = vector.broadcast %cst_69 : f32 to vector<8x128xf32>
    %233 = arith.addf %232, %231 : vector<8x128xf32>
    %234 = arith.divf %232, %233 : vector<8x128xf32>
    %235 = vector.extract_strided_slice %217 {offsets = [0, 256], sizes = [8, 128], strides = [1, 1]} : vector<8x384xf32> to vector<8x128xf32>
    %236 = vector.extract_strided_slice %218 {offsets = [0, 256], sizes = [8, 128], strides = [1, 1]} : vector<8x384xf32> to vector<8x128xf32>
    %237 = arith.addf %236, %49 : vector<8x128xf32>
    %238 = arith.mulf %226, %237 : vector<8x128xf32>
    %239 = arith.addf %235, %238 : vector<8x128xf32>
    %240 = math.tanh %239 : vector<8x128xf32>
    %cst_70 = arith.constant 1.000000e+00 : f32
    %241 = vector.broadcast %cst_70 : f32 to vector<8x128xf32>
    %242 = arith.subf %241, %234 : vector<8x128xf32>
    %243 = arith.mulf %242, %240 : vector<8x128xf32>
    %244 = arith.mulf %234, %212 : vector<8x128xf32>
    %245 = arith.addf %243, %244 : vector<8x128xf32>
    %c5 = arith.constant 5 : index
    %c0_71 = arith.constant 0 : index
    %c0_72 = arith.constant 0 : index
    %246 = vector.load %arg17[%c5, %c0_71, %c0_72] : memref<8x8x128xf32, #tpu.memory_space<vmem>>, vector<1x8x128xf32>
    %247 = vector.shape_cast %246 : vector<1x8x128xf32> to vector<8x128xf32>
    %248 = vector.shape_cast %245 : vector<8x128xf32> to vector<1x8x128xf32>
    tpu.vector_store %arg17[%c5, %c0_71, %c0_72], %248 {strides = array<i32>} : memref<8x8x128xf32, #tpu.memory_space<vmem>>, vector<1x8x128xf32>,
    %249 = vector.extract_strided_slice %45 {offsets = [6, 0, 0], sizes = [1, 8, 384], strides = [1, 1, 1]} : vector<8x8x384xf32> to vector<1x8x384xf32>
    %250 = vector.shape_cast %249 : vector<1x8x384xf32> to vector<8x384xf32>
    %cst_73 = arith.constant dense<0.000000e+00> : vector<8x384xf32>
    %251 = tpu.matmul %245, %46, %cst_73 {dimension_numbers = #tpu.dot_dimension_numbers<[1], [0], [0], [1], [0, 0, 1, 1], [], []>} : vector<8x128xf32>, vector<128x384xf32>, vector<8x384xf32> -> vector<8x384xf32>
    %252 = vector.extract_strided_slice %250 {offsets = [0, 0], sizes = [8, 128], strides = [1, 1]} : vector<8x384xf32> to vector<8x128xf32>
    %253 = vector.extract_strided_slice %251 {offsets = [0, 0], sizes = [8, 128], strides = [1, 1]} : vector<8x384xf32> to vector<8x128xf32>
    %254 = arith.addf %252, %253 : vector<8x128xf32>
    %255 = arith.negf %254 : vector<8x128xf32>
    %256 = math.exp %255 : vector<8x128xf32>
    %cst_74 = arith.constant 1.000000e+00 : f32
    %257 = vector.broadcast %cst_74 : f32 to vector<8x128xf32>
    %258 = arith.addf %257, %256 : vector<8x128xf32>
    %259 = arith.divf %257, %258 : vector<8x128xf32>
    %260 = vector.extract_strided_slice %250 {offsets = [0, 128], sizes = [8, 128], strides = [1, 1]} : vector<8x384xf32> to vector<8x128xf32>
    %261 = vector.extract_strided_slice %251 {offsets = [0, 128], sizes = [8, 128], strides = [1, 1]} : vector<8x384xf32> to vector<8x128xf32>
    %262 = arith.addf %260, %261 : vector<8x128xf32>
    %263 = arith.negf %262 : vector<8x128xf32>
    %264 = math.exp %263 : vector<8x128xf32>
    %cst_75 = arith.constant 1.000000e+00 : f32
    %265 = vector.broadcast %cst_75 : f32 to vector<8x128xf32>
    %266 = arith.addf %265, %264 : vector<8x128xf32>
    %267 = arith.divf %265, %266 : vector<8x128xf32>
    %268 = vector.extract_strided_slice %250 {offsets = [0, 256], sizes = [8, 128], strides = [1, 1]} : vector<8x384xf32> to vector<8x128xf32>
    %269 = vector.extract_strided_slice %251 {offsets = [0, 256], sizes = [8, 128], strides = [1, 1]} : vector<8x384xf32> to vector<8x128xf32>
    %270 = arith.addf %269, %49 : vector<8x128xf32>
    %271 = arith.mulf %259, %270 : vector<8x128xf32>
    %272 = arith.addf %268, %271 : vector<8x128xf32>
    %273 = math.tanh %272 : vector<8x128xf32>
    %cst_76 = arith.constant 1.000000e+00 : f32
    %274 = vector.broadcast %cst_76 : f32 to vector<8x128xf32>
    %275 = arith.subf %274, %267 : vector<8x128xf32>
    %276 = arith.mulf %275, %273 : vector<8x128xf32>
    %277 = arith.mulf %267, %245 : vector<8x128xf32>
    %278 = arith.addf %276, %277 : vector<8x128xf32>
    %c6 = arith.constant 6 : index
    %c0_77 = arith.constant 0 : index
    %c0_78 = arith.constant 0 : index
    %279 = vector.load %arg17[%c6, %c0_77, %c0_78] : memref<8x8x128xf32, #tpu.memory_space<vmem>>, vector<1x8x128xf32>
    %280 = vector.shape_cast %279 : vector<1x8x128xf32> to vector<8x128xf32>
    %281 = vector.shape_cast %278 : vector<8x128xf32> to vector<1x8x128xf32>
    tpu.vector_store %arg17[%c6, %c0_77, %c0_78], %281 {strides = array<i32>} : memref<8x8x128xf32, #tpu.memory_space<vmem>>, vector<1x8x128xf32>,
    %282 = vector.extract_strided_slice %45 {offsets = [7, 0, 0], sizes = [1, 8, 384], strides = [1, 1, 1]} : vector<8x8x384xf32> to vector<1x8x384xf32>
    %283 = vector.shape_cast %282 : vector<1x8x384xf32> to vector<8x384xf32>
    %cst_79 = arith.constant dense<0.000000e+00> : vector<8x384xf32>
    %284 = tpu.matmul %278, %46, %cst_79 {dimension_numbers = #tpu.dot_dimension_numbers<[1], [0], [0], [1], [0, 0, 1, 1], [], []>} : vector<8x128xf32>, vector<128x384xf32>, vector<8x384xf32> -> vector<8x384xf32>
    %285 = vector.extract_strided_slice %283 {offsets = [0, 0], sizes = [8, 128], strides = [1, 1]} : vector<8x384xf32> to vector<8x128xf32>
    %286 = vector.extract_strided_slice %284 {offsets = [0, 0], sizes = [8, 128], strides = [1, 1]} : vector<8x384xf32> to vector<8x128xf32>
    %287 = arith.addf %285, %286 : vector<8x128xf32>
    %288 = arith.negf %287 : vector<8x128xf32>
    %289 = math.exp %288 : vector<8x128xf32>
    %cst_80 = arith.constant 1.000000e+00 : f32
    %290 = vector.broadcast %cst_80 : f32 to vector<8x128xf32>
    %291 = arith.addf %290, %289 : vector<8x128xf32>
    %292 = arith.divf %290, %291 : vector<8x128xf32>
    %293 = vector.extract_strided_slice %283 {offsets = [0, 128], sizes = [8, 128], strides = [1, 1]} : vector<8x384xf32> to vector<8x128xf32>
    %294 = vector.extract_strided_slice %284 {offsets = [0, 128], sizes = [8, 128], strides = [1, 1]} : vector<8x384xf32> to vector<8x128xf32>
    %295 = arith.addf %293, %294 : vector<8x128xf32>
    %296 = arith.negf %295 : vector<8x128xf32>
    %297 = math.exp %296 : vector<8x128xf32>
    %cst_81 = arith.constant 1.000000e+00 : f32
    %298 = vector.broadcast %cst_81 : f32 to vector<8x128xf32>
    %299 = arith.addf %298, %297 : vector<8x128xf32>
    %300 = arith.divf %298, %299 : vector<8x128xf32>
    %301 = vector.extract_strided_slice %283 {offsets = [0, 256], sizes = [8, 128], strides = [1, 1]} : vector<8x384xf32> to vector<8x128xf32>
    %302 = vector.extract_strided_slice %284 {offsets = [0, 256], sizes = [8, 128], strides = [1, 1]} : vector<8x384xf32> to vector<8x128xf32>
    %303 = arith.addf %302, %49 : vector<8x128xf32>
    %304 = arith.mulf %292, %303 : vector<8x128xf32>
    %305 = arith.addf %301, %304 : vector<8x128xf32>
    %306 = math.tanh %305 : vector<8x128xf32>
    %cst_82 = arith.constant 1.000000e+00 : f32
    %307 = vector.broadcast %cst_82 : f32 to vector<8x128xf32>
    %308 = arith.subf %307, %300 : vector<8x128xf32>
    %309 = arith.mulf %308, %306 : vector<8x128xf32>
    %310 = arith.mulf %300, %278 : vector<8x128xf32>
    %311 = arith.addf %309, %310 : vector<8x128xf32>
    %c7 = arith.constant 7 : index
    %c0_83 = arith.constant 0 : index
    %c0_84 = arith.constant 0 : index
    %312 = vector.load %arg17[%c7, %c0_83, %c0_84] : memref<8x8x128xf32, #tpu.memory_space<vmem>>, vector<1x8x128xf32>
    %313 = vector.shape_cast %312 : vector<1x8x128xf32> to vector<8x128xf32>
    %314 = vector.shape_cast %311 : vector<8x128xf32> to vector<1x8x128xf32>
    tpu.vector_store %arg17[%c7, %c0_83, %c0_84], %314 {strides = array<i32>} : memref<8x8x128xf32, #tpu.memory_space<vmem>>, vector<1x8x128xf32>,
    %c0_85 = arith.constant 0 : index
    %c0_86 = arith.constant 0 : index
    %c0_87 = arith.constant 0 : index
    %315 = vector.load %arg17[%c0_85, %c0_86, %c0_87] : memref<8x8x128xf32, #tpu.memory_space<vmem>>, vector<8x8x128xf32>
    %316 = vector.shape_cast %315 : vector<8x8x128xf32> to vector<64x128xf32>
    %c0_88 = arith.constant 0 : index
    %c0_89 = arith.constant 0 : index
    %317 = vector.load %arg14[%c0_88, %c0_89] : memref<128x128xf32, #tpu.memory_space<vmem>>, vector<128x128xf32>
    %cst_90 = arith.constant dense<0.000000e+00> : vector<64x128xf32>
    %318 = tpu.matmul %316, %317, %cst_90 {dimension_numbers = #tpu.dot_dimension_numbers<[1], [0], [0], [1], [0, 0, 1, 1], [], []>} : vector<64x128xf32>, vector<128x128xf32>, vector<64x128xf32> -> vector<64x128xf32>
    %c0_91 = arith.constant 0 : index
    %c0_92 = arith.constant 0 : index
    %319 = vector.load %arg15[%c0_91, %c0_92] : memref<1x128xf32, #tpu.memory_space<vmem>>, vector<1x128xf32>
    %320 = vector.broadcast %319 : vector<1x128xf32> to vector<64x128xf32>
    %321 = arith.addf %318, %320 : vector<64x128xf32>
    %322 = vector.shape_cast %321 : vector<64x128xf32> to vector<8x8x128xf32>
    %c0_93 = arith.constant 0 : index
    %c0_94 = arith.constant 0 : index
    %c0_95 = arith.constant 0 : index
    %c0_96 = arith.constant 0 : index
    %323 = vector.load %arg16[%c0_93, %c0_94, %c0_95, %c0_96] : memref<1x8x8x128xf32, #tpu.memory_space<vmem>>, vector<1x8x8x128xf32>
    %324 = vector.shape_cast %323 : vector<1x8x8x128xf32> to vector<8x8x128xf32>
    %325 = vector.shape_cast %322 : vector<8x8x128xf32> to vector<1x8x8x128xf32>
    tpu.vector_store %arg16[%c0_93, %c0_94, %c0_95, %c0_96], %325 {strides = array<i32>} : memref<1x8x8x128xf32, #tpu.memory_space<vmem>>, vector<1x8x8x128xf32>,
    return
  }
  func.func @transform_0(%arg0: i32) -> (i32, i32, i32, i32) {
    %c0_i32 = arith.constant 0 : i32
    %c0_i32_0 = arith.constant 0 : i32
    %c0_i32_1 = arith.constant 0 : i32
    %c0_i32_2 = arith.constant 0 : i32
    return %arg0, %c0_i32, %c0_i32_0, %c0_i32_1 : i32, i32, i32, i32
  }
  func.func @transform_1(%arg0: i32) -> (i32, i32, i32, i32) {
    %c0_i32 = arith.constant 0 : i32
    %c0_i32_0 = arith.constant 0 : i32
    %c0_i32_1 = arith.constant 0 : i32
    %c0_i32_2 = arith.constant 0 : i32
    return %arg0, %c0_i32, %c0_i32_0, %c0_i32_1 : i32, i32, i32, i32
  }
  func.func @transform_2(%arg0: i32) -> (i32, i32) {
    %c0_i32 = arith.constant 0 : i32
    %c0_i32_0 = arith.constant 0 : i32
    %c0_i32_1 = arith.constant 0 : i32
    return %c0_i32, %c0_i32_0 : i32, i32
  }
  func.func @transform_3(%arg0: i32) -> (i32, i32) {
    %c0_i32 = arith.constant 0 : i32
    %c0_i32_0 = arith.constant 0 : i32
    %c0_i32_1 = arith.constant 0 : i32
    return %c0_i32, %c0_i32_0 : i32, i32
  }
  func.func @transform_4(%arg0: i32) -> (i32, i32) {
    %c0_i32 = arith.constant 0 : i32
    %c0_i32_0 = arith.constant 0 : i32
    %c0_i32_1 = arith.constant 0 : i32
    return %c0_i32, %c0_i32_0 : i32, i32
  }
  func.func @transform_5(%arg0: i32) -> (i32, i32) {
    %c0_i32 = arith.constant 0 : i32
    %c0_i32_0 = arith.constant 0 : i32
    %c0_i32_1 = arith.constant 0 : i32
    return %c0_i32, %c0_i32_0 : i32, i32
  }
  func.func @transform_6(%arg0: i32) -> (i32, i32) {
    %c0_i32 = arith.constant 0 : i32
    %c0_i32_0 = arith.constant 0 : i32
    %c0_i32_1 = arith.constant 0 : i32
    return %c0_i32, %c0_i32_0 : i32, i32
  }
  func.func @transform_7(%arg0: i32) -> (i32, i32) {
    %c0_i32 = arith.constant 0 : i32
    %c0_i32_0 = arith.constant 0 : i32
    %c0_i32_1 = arith.constant 0 : i32
    return %c0_i32, %c0_i32_0 : i32, i32
  }
  func.func @transform_8(%arg0: i32) -> (i32, i32) {
    %c0_i32 = arith.constant 0 : i32
    %c0_i32_0 = arith.constant 0 : i32
    %c0_i32_1 = arith.constant 0 : i32
    return %c0_i32, %c0_i32_0 : i32, i32
  }
  func.func @transform_9(%arg0: i32) -> (i32, i32) {
    %c0_i32 = arith.constant 0 : i32
    %c0_i32_0 = arith.constant 0 : i32
    %c0_i32_1 = arith.constant 0 : i32
    return %c0_i32, %c0_i32_0 : i32, i32
  }
  func.func @transform_10(%arg0: i32) -> (i32, i32) {
    %c0_i32 = arith.constant 0 : i32
    %c0_i32_0 = arith.constant 0 : i32
    %c0_i32_1 = arith.constant 0 : i32
    return %c0_i32, %c0_i32_0 : i32, i32
  }
  func.func @transform_11(%arg0: i32) -> (i32, i32) {
    %c0_i32 = arith.constant 0 : i32
    %c0_i32_0 = arith.constant 0 : i32
    %c0_i32_1 = arith.constant 0 : i32
    return %c0_i32, %c0_i32_0 : i32, i32
  }
  func.func @transform_12(%arg0: i32) -> (i32, i32) {
    %c0_i32 = arith.constant 0 : i32
    %c0_i32_0 = arith.constant 0 : i32
    %c0_i32_1 = arith.constant 0 : i32
    return %c0_i32, %c0_i32_0 : i32, i32
  }
  func.func @transform_13(%arg0: i32) -> (i32, i32) {
    %c0_i32 = arith.constant 0 : i32
    %c0_i32_0 = arith.constant 0 : i32
    %c0_i32_1 = arith.constant 0 : i32
    return %c0_i32, %c0_i32_0 : i32, i32
  }
  func.func @transform_14(%arg0: i32) -> (i32, i32) {
    %c0_i32 = arith.constant 0 : i32
    %c0_i32_0 = arith.constant 0 : i32
    %c0_i32_1 = arith.constant 0 : i32
    return %c0_i32, %c0_i32_0 : i32, i32
  }
  func.func @transform_15(%arg0: i32) -> (i32, i32, i32, i32) {
    %c0_i32 = arith.constant 0 : i32
    %c0_i32_0 = arith.constant 0 : i32
    %c0_i32_1 = arith.constant 0 : i32
    %c0_i32_2 = arith.constant 0 : i32
    return %arg0, %c0_i32, %c0_i32_0, %c0_i32_1 : i32, i32, i32, i32
  }
}

</mosaic_0001>

<llo_original>
// kernel: tpu_custom_call.1
$region0: #{tpu_custom_call.1}
  #allocation0 [shape = 'u32[]', space=smem, size = 0x4, offset = 0x4, fixed_abs, tag = 'smem constant byte address 0x4 - core index']
  #allocation1 [shape = 'u32[72,128]{1,0:T(1,128)}', space=vmem, size = 0x9000, scoped, tag = 'internal scratch']
  #allocation2 [shape = 'f32[8,8,128]{2,1,0:T(8,128)}', space=vmem, size = 0x8000, scoped, tag = 'scratch operand']
  %s0 = inlined_call_operand.hbm [shape: f32[1,8,8,51], index: 0, kind: input, shape index: {}]
  %s1 = inlined_call_operand.vmem [shape: f32[1,8,8,2], index: 1, kind: input, shape index: {}]
  %s2 = inlined_call_operand.hbm [shape: f32[51,544], index: 2, kind: input, shape index: {}]
  %s3 = inlined_call_operand.hbm [shape: f32[1,544], index: 3, kind: input, shape index: {}]
  %s4 = inlined_call_operand.hbm [shape: f32[544,544], index: 4, kind: input, shape index: {}]
  %s5 = inlined_call_operand.hbm [shape: f32[1,544], index: 5, kind: input, shape index: {}]
  %s6 = inlined_call_operand.hbm [shape: f32[544,384], index: 6, kind: input, shape index: {}]
  %s7 = inlined_call_operand.hbm [shape: f32[32,384], index: 7, kind: input, shape index: {}]
  %s8 = inlined_call_operand.hbm [shape: f32[1,384], index: 8, kind: input, shape index: {}]
  %s9 = inlined_call_operand.hbm [shape: f32[2,32], index: 9, kind: input, shape index: {}]
  %s10 = inlined_call_operand.hbm [shape: f32[1,32], index: 10, kind: input, shape index: {}]
  %s11 = inlined_call_operand.hbm [shape: f32[128,384], index: 11, kind: input, shape index: {}]
  %s12 = inlined_call_operand.hbm [shape: f32[1,128], index: 12, kind: input, shape index: {}]
  %s13 = inlined_call_operand.hbm [shape: f32[128,128], index: 13, kind: input, shape index: {}]
  %s14 = inlined_call_operand.hbm [shape: f32[1,128], index: 14, kind: input, shape index: {}]
  %s15 = inlined_call_operand.hbm [shape: f32[1,8,8,128], index: 15, kind: output, shape index: {}]
  %s16 = sld [smem:[#allocation0]]
  $region126: #{tpu_custom_call.1} parent=0
    _
  %s18 = ssub.s32 1, %s16
  %s19 = scalar_select 0, %s18, %s16
  $region1: #{tpu_custom_call.1} parent=0
    #allocation3 [shape = 'u8[32768]{0}', space=vmem, size = 0x8000, scoped, tag = 'input window, operand 0, single buffered']
    #allocation4 [shape = 's32[1]{0}', space=sflag, size = 0x4, scoped, tag = 'scoped memory for tpu_custom_call.1']
    #allocation5 [shape = 's32[1]{0}', space=sflag, size = 0x4, scoped, tag = 'scoped memory for tpu_custom_call.1']
    #allocation6 [shape = 'u8[143360]{0}', space=vmem, size = 0x23000, scoped, tag = 'input window, operand 2, single buffered']
    #allocation7 [shape = 's32[1]{0}', space=sflag, size = 0x4, scoped, tag = 'scoped memory for tpu_custom_call.1']
    #allocation8 [shape = 'u8[2560]{0}', space=vmem, size = 0xc00, scoped, tag = 'input window, operand 3, single buffered']
    #allocation9 [shape = 'u8[1392640]{0}', space=vmem, size = 0x154000, scoped, tag = 'input window, operand 4, single buffered']
    #allocation10 [shape = 's32[1]{0}', space=sflag, size = 0x4, scoped, tag = 'scoped memory for tpu_custom_call.1']
    #allocation11 [shape = 'u8[2560]{0}', space=vmem, size = 0xc00, scoped, tag = 'input window, operand 5, single buffered']
    #allocation12 [shape = 'u8[835584]{0}', space=vmem, size = 0xcc000, scoped, tag = 'input window, operand 6, single buffered']
    #allocation13 [shape = 's32[1]{0}', space=sflag, size = 0x4, scoped, tag = 'scoped memory for tpu_custom_call.1']
    #allocation14 [shape = 'u8[49152]{0}', space=vmem, size = 0xc000, scoped, tag = 'input window, operand 7, single buffered']
    #allocation15 [shape = 'u8[1536]{0}', space=vmem, size = 0x800, scoped, tag = 'input window, operand 8, single buffered']
    #allocation16 [shape = 's32[1]{0}', space=sflag, size = 0x4, scoped, tag = 'scoped memory for tpu_custom_call.1']
    #allocation17 [shape = 'u8[1024]{0}', space=vmem, size = 0x400, scoped, tag = 'input window, operand 9, single buffered']
    #allocation18 [shape = 'u8[512]{0}', space=vmem, size = 0x400, scoped, tag = 'input window, operand 10, single buffered']
    #allocation19 [shape = 's32[1]{0}', space=sflag, size = 0x4, scoped, tag = 'scoped memory for tpu_custom_call.1']
    #allocation20 [shape = 'u8[196608]{0}', space=vmem, size = 0x30000, scoped, tag = 'input window, operand 11, single buffered']
    #allocation21 [shape = 'u8[512]{0}', space=vmem, size = 0x400, scoped, tag = 'input window, operand 12, single buffered']
    #allocation22 [shape = 's32[1]{0}', space=sflag, size = 0x4, scoped, tag = 'scoped memory for tpu_custom_call.1']
    #allocation23 [shape = 'u8[65536]{0}', space=vmem, size = 0x10000, scoped, tag = 'input window, operand 13, single buffered']
    #allocation24 [shape = 'u8[512]{0}', space=vmem, size = 0x400, scoped, tag = 'input window, operand 14, single buffered']
    #allocation25 [shape = 's32[1]{0}', space=sflag, size = 0x4, scoped, tag = 'scoped memory for tpu_custom_call.1']
    #allocation26 [shape = 'u8[32768]{0}', space=vmem, size = 0x8000, scoped, tag = 'output window, operand 0, single buffered']
    %20 = vsyncpa [#allocation4], 0
    %21 = vsyncpa [#allocation7], 0
    %22 = vsyncpa [#allocation10], 0
    %23 = vsyncpa [#allocation13], 0
    %24 = vsyncpa [#allocation16], 0
    %25 = vsyncpa [#allocation19], 0
    %26 = vsyncpa [#allocation22], 0
    %27 = vsyncpa [#allocation25], 0
    %28 = vsyncpa [#allocation5], 0
    // Predicated region
    $region2: #{tpu_custom_call.1} parent=1 // pred_check
      _
    $region3: #{tpu_custom_call.1} parent=1 // pred_check_branch
      %30 = sbr.rel (0) target = $region5
    $region4: #{tpu_custom_call.1} parent=1 // pred_region
      %32 = vsyncadd [#allocation4], 0
      %s33 = sshll.u32 %s0, 4
      %s34 = int_to_ptr.hbm [resolvable:$true] %s33
      %s35 = sshll.u32 [#allocation3], 4
      %s36 = int_to_ptr.vmem [resolvable:$true] %s35
      %41 = dma.hbm_to_vmem [thread:$0]  %s34, 1024, %s36, [#allocation4], 128, 128, 8
    $region5: #{tpu_custom_call.1} parent=1 // pred_fallthru
      _
    // Predicated region
    $region6: #{tpu_custom_call.1} parent=1 // pred_check
      _
    $region7: #{tpu_custom_call.1} parent=1 // pred_check_branch
      %43 = sbr.rel (0) target = $region9
    $region8: #{tpu_custom_call.1} parent=1 // pred_region
      _
    $region9: #{tpu_custom_call.1} parent=1 // pred_fallthru
      _
    // Predicated region
    $region10: #{tpu_custom_call.1} parent=1 // pred_check
      _
    $region11: #{tpu_custom_call.1} parent=1 // pred_check_branch
      %45 = sbr.rel (0) target = $region13
    $region12: #{tpu_custom_call.1} parent=1 // pred_region
      %47 = vsyncadd [#allocation7], 0
      %s48 = sshll.u32 %s2, 4
      %s49 = int_to_ptr.hbm [resolvable:$true] %s48
      %s50 = sshll.u32 [#allocation6], 4
      %s51 = int_to_ptr.vmem [resolvable:$true] %s50
      %56 = dma.hbm_to_vmem [thread:$0]  %s49, 4480, %s51, [#allocation7], 640, 640, 40
    $region13: #{tpu_custom_call.1} parent=1 // pred_fallthru
      _
    // Predicated region
    $region14: #{tpu_custom_call.1} parent=1 // pred_check
      _
    $region15: #{tpu_custom_call.1} parent=1 // pred_check_branch
      %58 = sbr.rel (0) target = $region17
    $region16: #{tpu_custom_call.1} parent=1 // pred_region
      %60 = vsyncadd [#allocation7], 0
      %s62 = sshll.u32 %s3, 4
      %s63 = int_to_ptr.hbm [resolvable:$true] %s62
      %s64 = sshll.u32 [#allocation8], 4
      %s65 = int_to_ptr.vmem [resolvable:$true] %s64
      %67 = dma.hbm_to_vmem [thread:$0]  %s63, 80, %s65, [#allocation7]
    $region17: #{tpu_custom_call.1} parent=1 // pred_fallthru
      _
    // Predicated region
    $region18: #{tpu_custom_call.1} parent=1 // pred_check
      _
    $region19: #{tpu_custom_call.1} parent=1 // pred_check_branch
      %69 = sbr.rel (0) target = $region21
    $region20: #{tpu_custom_call.1} parent=1 // pred_region
      %71 = vsyncadd [#allocation10], 0
      %s72 = sshll.u32 %s4, 4
      %s73 = int_to_ptr.hbm [resolvable:$true] %s72
      %s74 = sshll.u32 [#allocation9], 4
      %s75 = int_to_ptr.vmem [resolvable:$true] %s74
      %80 = dma.hbm_to_vmem [thread:$0]  %s73, 43520, %s75, [#allocation10], 640, 640, 40
    $region21: #{tpu_custom_call.1} parent=1 // pred_fallthru
      _
    // Predicated region
    $region22: #{tpu_custom_call.1} parent=1 // pred_check
      _
    $region23: #{tpu_custom_call.1} parent=1 // pred_check_branch
      %82 = sbr.rel (0) target = $region25
    $region24: #{tpu_custom_call.1} parent=1 // pred_region
      %84 = vsyncadd [#allocation10], 0
      %s86 = sshll.u32 %s5, 4
      %s87 = int_to_ptr.hbm [resolvable:$true] %s86
      %s88 = sshll.u32 [#allocation11], 4
      %s89 = int_to_ptr.vmem [resolvable:$true] %s88
      %91 = dma.hbm_to_vmem [thread:$0]  %s87, 80, %s89, [#allocation10]
    $region25: #{tpu_custom_call.1} parent=1 // pred_fallthru
      _
    // Predicated region
    $region26: #{tpu_custom_call.1} parent=1 // pred_check
      _
    $region27: #{tpu_custom_call.1} parent=1 // pred_check_branch
      %93 = sbr.rel (0) target = $region29
    $region28: #{tpu_custom_call.1} parent=1 // pred_region
      %95 = vsyncadd [#allocation13], 0
      %s96 = sshll.u32 %s6, 4
      %s97 = int_to_ptr.hbm [resolvable:$true] %s96
      %s98 = sshll.u32 [#allocation12], 4
      %s99 = int_to_ptr.vmem [resolvable:$true] %s98
      %104 = dma.hbm_to_vmem [thread:$0]  %s97, 26112, %s99, [#allocation13], 384, 384, 24
    $region29: #{tpu_custom_call.1} parent=1 // pred_fallthru
      _
    // Predicated region
    $region30: #{tpu_custom_call.1} parent=1 // pred_check
      _
    $region31: #{tpu_custom_call.1} parent=1 // pred_check_branch
      %106 = sbr.rel (0) target = $region33
    $region32: #{tpu_custom_call.1} parent=1 // pred_region
      %108 = vsyncadd [#allocation13], 0
      %s109 = sshll.u32 %s7, 4
      %s110 = int_to_ptr.hbm [resolvable:$true] %s109
      %s111 = sshll.u32 [#allocation14], 4
      %s112 = int_to_ptr.vmem [resolvable:$true] %s111
      %117 = dma.hbm_to_vmem [thread:$0]  %s110, 1536, %s112, [#allocation13], 384, 384, 24
    $region33: #{tpu_custom_call.1} parent=1 // pred_fallthru
      _
    // Predicated region
    $region34: #{tpu_custom_call.1} parent=1 // pred_check
      _
    $region35: #{tpu_custom_call.1} parent=1 // pred_check_branch
      %119 = sbr.rel (0) target = $region37
    $region36: #{tpu_custom_call.1} parent=1 // pred_region
      %121 = vsyncadd [#allocation16], 0
      %s123 = sshll.u32 %s8, 4
      %s124 = int_to_ptr.hbm [resolvable:$true] %s123
      %s125 = sshll.u32 [#allocation15], 4
      %s126 = int_to_ptr.vmem [resolvable:$true] %s125
      %128 = dma.hbm_to_vmem [thread:$0]  %s124, 48, %s126, [#allocation16]
    $region37: #{tpu_custom_call.1} parent=1 // pred_fallthru
      _
    // Predicated region
    $region38: #{tpu_custom_call.1} parent=1 // pred_check
      _
    $region39: #{tpu_custom_call.1} parent=1 // pred_check_branch
      %130 = sbr.rel (0) target = $region41
    $region40: #{tpu_custom_call.1} parent=1 // pred_region
      %132 = vsyncadd [#allocation16], 0
      %s134 = sshll.u32 %s9, 4
      %s135 = int_to_ptr.hbm [resolvable:$true] %s134
      %s136 = sshll.u32 [#allocation17], 4
      %s137 = int_to_ptr.vmem [resolvable:$true] %s136
      %139 = dma.hbm_to_vmem [thread:$0]  %s135, 32, %s137, [#allocation16]
    $region41: #{tpu_custom_call.1} parent=1 // pred_fallthru
      _
    // Predicated region
    $region42: #{tpu_custom_call.1} parent=1 // pred_check
      _
    $region43: #{tpu_custom_call.1} parent=1 // pred_check_branch
      %141 = sbr.rel (0) target = $region45
    $region44: #{tpu_custom_call.1} parent=1 // pred_region
      %143 = vsyncadd [#allocation19], 0
      %s145 = sshll.u32 %s10, 4
      %s146 = int_to_ptr.hbm [resolvable:$true] %s145
      %s147 = sshll.u32 [#allocation18], 4
      %s148 = int_to_ptr.vmem [resolvable:$true] %s147
      %150 = dma.hbm_to_vmem [thread:$0]  %s146, 16, %s148, [#allocation19]
    $region45: #{tpu_custom_call.1} parent=1 // pred_fallthru
      _
    // Predicated region
    $region46: #{tpu_custom_call.1} parent=1 // pred_check
      _
    $region47: #{tpu_custom_call.1} parent=1 // pred_check_branch
      %152 = sbr.rel (0) target = $region49
    $region48: #{tpu_custom_call.1} parent=1 // pred_region
      %154 = vsyncadd [#allocation19], 0
      %s155 = sshll.u32 %s11, 4
      %s156 = int_to_ptr.hbm [resolvable:$true] %s155
      %s157 = sshll.u32 [#allocation20], 4
      %s158 = int_to_ptr.vmem [resolvable:$true] %s157
      %163 = dma.hbm_to_vmem [thread:$0]  %s156, 6144, %s158, [#allocation19], 384, 384, 24
    $region49: #{tpu_custom_call.1} parent=1 // pred_fallthru
      _
    // Predicated region
    $region50: #{tpu_custom_call.1} parent=1 // pred_check
      _
    $region51: #{tpu_custom_call.1} parent=1 // pred_check_branch
      %165 = sbr.rel (0) target = $region53
    $region52: #{tpu_custom_call.1} parent=1 // pred_region
      %167 = vsyncadd [#allocation22], 0
      %s169 = sshll.u32 %s12, 4
      %s170 = int_to_ptr.hbm [resolvable:$true] %s169
      %s171 = sshll.u32 [#allocation21], 4
      %s172 = int_to_ptr.vmem [resolvable:$true] %s171
      %174 = dma.hbm_to_vmem [thread:$0]  %s170, 16, %s172, [#allocation22]
    $region53: #{tpu_custom_call.1} parent=1 // pred_fallthru
      _
    // Predicated region
    $region54: #{tpu_custom_call.1} parent=1 // pred_check
      _
    $region55: #{tpu_custom_call.1} parent=1 // pred_check_branch
      %176 = sbr.rel (0) target = $region57
    $region56: #{tpu_custom_call.1} parent=1 // pred_region
      %178 = vsyncadd [#allocation22], 0
      %s179 = sshll.u32 %s13, 4
      %s180 = int_to_ptr.hbm [resolvable:$true] %s179
      %s181 = sshll.u32 [#allocation23], 4
      %s182 = int_to_ptr.vmem [resolvable:$true] %s181
      %187 = dma.hbm_to_vmem [thread:$0]  %s180, 2048, %s182, [#allocation22], 128, 128, 8
    $region57: #{tpu_custom_call.1} parent=1 // pred_fallthru
      _
    // Predicated region
    $region58: #{tpu_custom_call.1} parent=1 // pred_check
      _
    $region59: #{tpu_custom_call.1} parent=1 // pred_check_branch
      %189 = sbr.rel (0) target = $region61
    $region60: #{tpu_custom_call.1} parent=1 // pred_region
      %191 = vsyncadd [#allocation25], 0
      %s193 = sshll.u32 %s14, 4
      %s194 = int_to_ptr.hbm [resolvable:$true] %s193
      %s195 = sshll.u32 [#allocation24], 4
      %s196 = int_to_ptr.vmem [resolvable:$true] %s195
      %198 = dma.hbm_to_vmem [thread:$0]  %s194, 16, %s196, [#allocation25]
    $region61: #{tpu_custom_call.1} parent=1 // pred_fallthru
      _
    // Predicated region
    $region62: #{tpu_custom_call.1} parent=1 // pred_check
      _
    $region63: #{tpu_custom_call.1} parent=1 // pred_check_branch
      %200 = sbr.rel (0) target = $region65
    $region64: #{tpu_custom_call.1} parent=1 // pred_region
      %202 = dma.done [#allocation4], 1024
    $region65: #{tpu_custom_call.1} parent=1 // pred_fallthru
      _
    // Predicated region
    $region66: #{tpu_custom_call.1} parent=1 // pred_check
      _
    $region67: #{tpu_custom_call.1} parent=1 // pred_check_branch
      %204 = sbr.rel (0) target = $region69
    $region68: #{tpu_custom_call.1} parent=1 // pred_region
      %206 = dma.done [#allocation7], 4480
    $region69: #{tpu_custom_call.1} parent=1 // pred_fallthru
      _
    // Predicated region
    $region70: #{tpu_custom_call.1} parent=1 // pred_check
      _
    $region71: #{tpu_custom_call.1} parent=1 // pred_check_branch
      %208 = sbr.rel (0) target = $region73
    $region72: #{tpu_custom_call.1} parent=1 // pred_region
      %210 = dma.done [#allocation7], 80
    $region73: #{tpu_custom_call.1} parent=1 // pred_fallthru
      _
    // Predicated region
    $region74: #{tpu_custom_call.1} parent=1 // pred_check
      _
    $region75: #{tpu_custom_call.1} parent=1 // pred_check_branch
      %212 = sbr.rel (0) target = $region77
    $region76: #{tpu_custom_call.1} parent=1 // pred_region
      %214 = dma.done [#allocation10], 43520
    $region77: #{tpu_custom_call.1} parent=1 // pred_fallthru
      _
    // Predicated region
    $region78: #{tpu_custom_call.1} parent=1 // pred_check
      _
    $region79: #{tpu_custom_call.1} parent=1 // pred_check_branch
      %216 = sbr.rel (0) target = $region81
    $region80: #{tpu_custom_call.1} parent=1 // pred_region
      %218 = dma.done [#allocation10], 80
    $region81: #{tpu_custom_call.1} parent=1 // pred_fallthru
      _
    // Predicated region
    $region82: #{tpu_custom_call.1} parent=1 // pred_check
      _
    $region83: #{tpu_custom_call.1} parent=1 // pred_check_branch
      %220 = sbr.rel (0) target = $region85
    $region84: #{tpu_custom_call.1} parent=1 // pred_region
      %222 = dma.done [#allocation13], 26112
    $region85: #{tpu_custom_call.1} parent=1 // pred_fallthru
      _
    // Predicated region
    $region86: #{tpu_custom_call.1} parent=1 // pred_check
      _
    $region87: #{tpu_custom_call.1} parent=1 // pred_check_branch
      %224 = sbr.rel (0) target = $region89
    $region88: #{tpu_custom_call.1} parent=1 // pred_region
      %226 = dma.done [#allocation13], 1536
    $region89: #{tpu_custom_call.1} parent=1 // pred_fallthru
      _
    // Predicated region
    $region90: #{tpu_custom_call.1} parent=1 // pred_check
      _
    $region91: #{tpu_custom_call.1} parent=1 // pred_check_branch
      %228 = sbr.rel (0) target = $region93
    $region92: #{tpu_custom_call.1} parent=1 // pred_region
      %230 = dma.done [#allocation16], 48
    $region93: #{tpu_custom_call.1} parent=1 // pred_fallthru
      _
    // Predicated region
    $region94: #{tpu_custom_call.1} parent=1 // pred_check
      _
    $region95: #{tpu_custom_call.1} parent=1 // pred_check_branch
      %232 = sbr.rel (0) target = $region97
    $region96: #{tpu_custom_call.1} parent=1 // pred_region
      %234 = dma.done [#allocation16], 32
    $region97: #{tpu_custom_call.1} parent=1 // pred_fallthru
      _
    // Predicated region
    $region98: #{tpu_custom_call.1} parent=1 // pred_check
      _
    $region99: #{tpu_custom_call.1} parent=1 // pred_check_branch
      %236 = sbr.rel (0) target = $region101
    $region100: #{tpu_custom_call.1} parent=1 // pred_region
      %238 = dma.done [#allocation19], 16
    $region101: #{tpu_custom_call.1} parent=1 // pred_fallthru
      _
    // Predicated region
    $region102: #{tpu_custom_call.1} parent=1 // pred_check
      _
    $region103: #{tpu_custom_call.1} parent=1 // pred_check_branch
      %240 = sbr.rel (0) target = $region105
    $region104: #{tpu_custom_call.1} parent=1 // pred_region
      %242 = dma.done [#allocation19], 6144
    $region105: #{tpu_custom_call.1} parent=1 // pred_fallthru
      _
    // Predicated region
    $region106: #{tpu_custom_call.1} parent=1 // pred_check
      _
    $region107: #{tpu_custom_call.1} parent=1 // pred_check_branch
      %244 = sbr.rel (0) target = $region109
    $region108: #{tpu_custom_call.1} parent=1 // pred_region
      %246 = dma.done [#allocation22], 16
    $region109: #{tpu_custom_call.1} parent=1 // pred_fallthru
      _
    // Predicated region
    $region110: #{tpu_custom_call.1} parent=1 // pred_check
      _
    $region111: #{tpu_custom_call.1} parent=1 // pred_check_branch
      %248 = sbr.rel (0) target = $region113
    $region112: #{tpu_custom_call.1} parent=1 // pred_region
      %250 = dma.done [#allocation22], 2048
    $region113: #{tpu_custom_call.1} parent=1 // pred_fallthru
      _
    // Predicated region
    $region114: #{tpu_custom_call.1} parent=1 // pred_check
      _
    $region115: #{tpu_custom_call.1} parent=1 // pred_check_branch
      %252 = sbr.rel (0) target = $region117
    $region116: #{tpu_custom_call.1} parent=1 // pred_region
      %254 = dma.done [#allocation25], 16
    $region117: #{tpu_custom_call.1} parent=1 // pred_fallthru
      _
    %v255 = vld [vmem:[#allocation3] sm:$0xff]
    %v256 = vld [vmem:[#allocation3 + $0x8] sm:$0xff]
    %v257 = vld [vmem:[#allocation3 + $0x10] sm:$0xff]
    %v258 = vld [vmem:[#allocation3 + $0x18] sm:$0xff]
    %v259 = vld [vmem:[#allocation3 + $0x20] sm:$0xff]
    %v260 = vld [vmem:[#allocation3 + $0x28] sm:$0xff]
    %v261 = vld [vmem:[#allocation3 + $0x30] sm:$0xff]
    %v262 = vld [vmem:[#allocation3 + $0x38] sm:$0xff]
    %v263 = vld [vmem:[#allocation6] sm:$0xff]
    %v264 = vld [vmem:[#allocation6 + $0x8] sm:$0xff]
    %v265 = vld [vmem:[#allocation6 + $0x10] sm:$0xff]
    %v266 = vld [vmem:[#allocation6 + $0x18] sm:$0xff]
    %v267 = vld [vmem:[#allocation6 + $0x20] sm:$0xff]
    %v268 = vld [vmem:[#allocation6 + $0x28] sm:$0xff]
    %v269 = vld [vmem:[#allocation6 + $0x30] sm:$0xff]
    %v270 = vld [vmem:[#allocation6 + $0x38] sm:$0xff]
    %v271 = vld [vmem:[#allocation6 + $0x40] sm:$0xff]
    %v272 = vld [vmem:[#allocation6 + $0x48] sm:$0xff]
    %v273 = vld [vmem:[#allocation6 + $0x50] sm:$0xff]
    %v274 = vld [vmem:[#allocation6 + $0x58] sm:$0xff]
    %v275 = vld [vmem:[#allocation6 + $0x60] sm:$0xff]
    %v276 = vld [vmem:[#allocation6 + $0x68] sm:$0xff]
    %v277 = vld [vmem:[#allocation6 + $0x70] sm:$0xff]
    %v278 = vld [vmem:[#allocation6 + $0x78] sm:$0xff]
    %v279 = vld [vmem:[#allocation6 + $0x80] sm:$0xff]
    %v280 = vld [vmem:[#allocation6 + $0x88] sm:$0xff]
    %v281 = vld [vmem:[#allocation6 + $0x90] sm:$0xff]
    %v282 = vld [vmem:[#allocation6 + $0x98] sm:$0xff]
    %v283 = vld [vmem:[#allocation6 + $0xa0] sm:$0xff]
    %v284 = vld [vmem:[#allocation6 + $0xa8] sm:$0xff]
    %v285 = vld [vmem:[#allocation6 + $0xb0] sm:$0xff]
    %v286 = vld [vmem:[#allocation6 + $0xb8] sm:$0xff]
    %v287 = vld [vmem:[#allocation6 + $0xc0] sm:$0xff]
    %v288 = vld [vmem:[#allocation6 + $0xc8] sm:$0xff]
    %v289 = vld [vmem:[#allocation6 + $0xd0] sm:$0xff]
    %v290 = vld [vmem:[#allocation6 + $0xd8] sm:$0xff]
    %v291 = vld [vmem:[#allocation6 + $0xe0] sm:$0xff]
    %v292 = vld [vmem:[#allocation6 + $0xe8] sm:$0xff]
    %v293 = vld [vmem:[#allocation6 + $0xf0] sm:$0x7]
    %v294 = vld [vmem:[#allocation6 + $0xf8] sm:$0x7]
    %v295 = vld [vmem:[#allocation6 + $0x100] sm:$0x7]
    %v296 = vld [vmem:[#allocation6 + $0x108] sm:$0x7]
    %v297 = vld [vmem:[#allocation6 + $0x110] sm:$0x7]
    %v298 = vld [vmem:[#allocation8] sm:$0x1f]
    %v300 = vperm.slane %v298, 0
    %v301 = vperm.slane %v298, 1
    %v302 = vperm.slane %v298, 2
    %v303 = vperm.slane %v298, 3
    %v304 = vperm.slane %v298, 4
    %vm310 = vcmask 416768
    %v312 = vsel %vm310, %v255, 0
    %v315 = vsel %vm310, %v256, 0
    %v318 = vsel %vm310, %v257, 0
    %v321 = vsel %vm310, %v258, 0
    %v324 = vsel %vm310, %v259, 0
    %v327 = vsel %vm310, %v260, 0
    %v330 = vsel %vm310, %v261, 0
    %v333 = vsel %vm310, %v262, 0
    %vm335 = vcmask 1042432
    %v337 = vsel %vm335, %v293, 0
    %v340 = vsel %vm335, %v294, 0
    %v343 = vsel %vm335, %v295, 0
    %v346 = vsel %vm335, %v296, 0
    %v349 = vsel %vm335, %v297, 0
    %351 = vmatpush.msra.mxu0 0.0
    %352 = vmatpush.msra.mxu0 0.0
    %353 = vmatpush.msra.mxu0 0.0
    %354 = vmatpush.msra.mxu0 0.0
    %355 = vmatpush.msra.mxu0 0.0
    %356 = vmatpush.msra.mxu0 0.0
    %357 = vmatpush.msra.mxu0 0.0
    %358 = vmatpush.msra.mxu0 0.0
    %359 = vmatpush.msra.mxu0 0.0
    %360 = vmatpush.msra.mxu0 %v337
    %361 = vmatpush.msra.mxu0 %v288
    %362 = vmatpush.msra.mxu0 %v283
    %363 = vmatpush.msra.mxu0 %v278
    %364 = vmatpush.msra.mxu0 %v273
    %365 = vmatpush.msra.mxu0 %v268
    %366 = vmatpush.msra.mxu0 %v263
    %367 = vmatmul.f32.gmra.mxu0 %v312
    %v368 = vpop.f32.mrf.mxu0
    %v369 = vadd.f32 %v300, %v368
    %370 = vmatmul.f32.gmra.mxu0 %v315
    %v371 = vpop.f32.mrf.mxu0
    %v372 = vadd.f32 %v300, %v371
    %373 = vmatmul.f32.gmra.mxu0 %v318
    %v374 = vpop.f32.mrf.mxu0
    %v375 = vadd.f32 %v300, %v374
    %376 = vmatmul.f32.gmra.mxu0 %v321
    %v377 = vpop.f32.mrf.mxu0
    %v378 = vadd.f32 %v300, %v377
    %379 = vmatmul.f32.gmra.mxu0 %v324
    %v380 = vpop.f32.mrf.mxu0
    %v381 = vadd.f32 %v300, %v380
    %382 = vmatmul.f32.gmra.mxu0 %v327
    %v383 = vpop.f32.mrf.mxu0
    %v384 = vadd.f32 %v300, %v383
    %385 = vmatmul.f32.gmra.mxu0 %v330
    %v386 = vpop.f32.mrf.mxu0
    %v387 = vadd.f32 %v300, %v386
    %388 = vmatmul.f32.gmra.mxu0 %v333
    %v389 = vpop.f32.mrf.mxu0
    %v390 = vadd.f32 %v300, %v389
    %391 = vdwg.mxu0
    %392 = vmatpush.msra.mxu0 0.0
    %393 = vmatpush.msra.mxu0 0.0
    %394 = vmatpush.msra.mxu0 0.0
    %395 = vmatpush.msra.mxu0 0.0
    %396 = vmatpush.msra.mxu0 0.0
    %397 = vmatpush.msra.mxu0 0.0
    %398 = vmatpush.msra.mxu0 0.0
    %399 = vmatpush.msra.mxu0 0.0
    %400 = vmatpush.msra.mxu0 0.0
    %401 = vmatpush.msra.mxu0 %v340
    %402 = vmatpush.msra.mxu0 %v289
    %403 = vmatpush.msra.mxu0 %v284
    %404 = vmatpush.msra.mxu0 %v279
    %405 = vmatpush.msra.mxu0 %v274
    %406 = vmatpush.msra.mxu0 %v269
    %407 = vmatpush.msra.mxu0 %v264
    %408 = vmatmul.f32.gmra.mxu0 %v312
    %v409 = vpop.f32.mrf.mxu0
    %v410 = vadd.f32 %v301, %v409
    %411 = vmatmul.f32.gmra.mxu0 %v315
    %v412 = vpop.f32.mrf.mxu0
    %v413 = vadd.f32 %v301, %v412
    %414 = vmatmul.f32.gmra.mxu0 %v318
    %v415 = vpop.f32.mrf.mxu0
    %v416 = vadd.f32 %v301, %v415
    %417 = vmatmul.f32.gmra.mxu0 %v321
    %v418 = vpop.f32.mrf.mxu0
    %v419 = vadd.f32 %v301, %v418
    %420 = vmatmul.f32.gmra.mxu0 %v324
    %v421 = vpop.f32.mrf.mxu0
    %v422 = vadd.f32 %v301, %v421
    %423 = vmatmul.f32.gmra.mxu0 %v327
    %v424 = vpop.f32.mrf.mxu0
    %v425 = vadd.f32 %v301, %v424
    %426 = vmatmul.f32.gmra.mxu0 %v330
    %v427 = vpop.f32.mrf.mxu0
    %v428 = vadd.f32 %v301, %v427
    %429 = vmatmul.f32.gmra.mxu0 %v333
    %v430 = vpop.f32.mrf.mxu0
    %v431 = vadd.f32 %v301, %v430
    %432 = vdwg.mxu0
    %433 = vmatpush.msra.mxu0 0.0
    %434 = vmatpush.msra.mxu0 0.0
    %435 = vmatpush.msra.mxu0 0.0
    %436 = vmatpush.msra.mxu0 0.0
    %437 = vmatpush.msra.mxu0 0.0
    %438 = vmatpush.msra.mxu0 0.0
    %439 = vmatpush.msra.mxu0 0.0
    %440 = vmatpush.msra.mxu0 0.0
    %441 = vmatpush.msra.mxu0 0.0
    %442 = vmatpush.msra.mxu0 %v343
    %443 = vmatpush.msra.mxu0 %v290
    %444 = vmatpush.msra.mxu0 %v285
    %445 = vmatpush.msra.mxu0 %v280
    %446 = vmatpush.msra.mxu0 %v275
    %447 = vmatpush.msra.mxu0 %v270
    %448 = vmatpush.msra.mxu0 %v265
    %449 = vmatmul.f32.gmra.mxu0 %v312
    %v450 = vpop.f32.mrf.mxu0
    %v451 = vadd.f32 %v302, %v450
    %452 = vmatmul.f32.gmra.mxu0 %v315
    %v453 = vpop.f32.mrf.mxu0
    %v454 = vadd.f32 %v302, %v453
    %455 = vmatmul.f32.gmra.mxu0 %v318
    %v456 = vpop.f32.mrf.mxu0
    %v457 = vadd.f32 %v302, %v456
    %458 = vmatmul.f32.gmra.mxu0 %v321
    %v459 = vpop.f32.mrf.mxu0
    %v460 = vadd.f32 %v302, %v459
    %461 = vmatmul.f32.gmra.mxu0 %v324
    %v462 = vpop.f32.mrf.mxu0
    %v463 = vadd.f32 %v302, %v462
    %464 = vmatmul.f32.gmra.mxu0 %v327
    %v465 = vpop.f32.mrf.mxu0
    %v466 = vadd.f32 %v302, %v465
    %467 = vmatmul.f32.gmra.mxu0 %v330
    %v468 = vpop.f32.mrf.mxu0
    %v469 = vadd.f32 %v302, %v468
    %470 = vmatmul.f32.gmra.mxu0 %v333
    %v471 = vpop.f32.mrf.mxu0
    %v472 = vadd.f32 %v302, %v471
    %473 = vdwg.mxu0
    %474 = vmatpush.msra.mxu0 0.0
    %475 = vmatpush.msra.mxu0 0.0
    %476 = vmatpush.msra.mxu0 0.0
    %477 = vmatpush.msra.mxu0 0.0
    %478 = vmatpush.msra.mxu0 0.0
    %479 = vmatpush.msra.mxu0 0.0
    %480 = vmatpush.msra.mxu0 0.0
    %481 = vmatpush.msra.mxu0 0.0
    %482 = vmatpush.msra.mxu0 0.0
    %483 = vmatpush.msra.mxu0 %v346
    %484 = vmatpush.msra.mxu0 %v291
    %485 = vmatpush.msra.mxu0 %v286
    %486 = vmatpush.msra.mxu0 %v281
    %487 = vmatpush.msra.mxu0 %v276
    %488 = vmatpush.msra.mxu0 %v271
    %489 = vmatpush.msra.mxu0 %v266
    %490 = vmatmul.f32.gmra.mxu0 %v312
    %v491 = vpop.f32.mrf.mxu0
    %v492 = vadd.f32 %v303, %v491
    %493 = vmatmul.f32.gmra.mxu0 %v315
    %v494 = vpop.f32.mrf.mxu0
    %v495 = vadd.f32 %v303, %v494
    %496 = vmatmul.f32.gmra.mxu0 %v318
    %v497 = vpop.f32.mrf.mxu0
    %v498 = vadd.f32 %v303, %v497
    %499 = vmatmul.f32.gmra.mxu0 %v321
    %v500 = vpop.f32.mrf.mxu0
    %v501 = vadd.f32 %v303, %v500
    %502 = vmatmul.f32.gmra.mxu0 %v324
    %v503 = vpop.f32.mrf.mxu0
    %v504 = vadd.f32 %v303, %v503
    %505 = vmatmul.f32.gmra.mxu0 %v327
    %v506 = vpop.f32.mrf.mxu0
    %v507 = vadd.f32 %v303, %v506
    %508 = vmatmul.f32.gmra.mxu0 %v330
    %v509 = vpop.f32.mrf.mxu0
    %v510 = vadd.f32 %v303, %v509
    %511 = vmatmul.f32.gmra.mxu0 %v333
    %v512 = vpop.f32.mrf.mxu0
    %v513 = vadd.f32 %v303, %v512
    %514 = vdwg.mxu0
    %515 = vmatpush.msra.mxu0 0.0
    %516 = vmatpush.msra.mxu0 0.0
    %517 = vmatpush.msra.mxu0 0.0
    %518 = vmatpush.msra.mxu0 0.0
    %519 = vmatpush.msra.mxu0 0.0
    %520 = vmatpush.msra.mxu0 0.0
    %521 = vmatpush.msra.mxu0 0.0
    %522 = vmatpush.msra.mxu0 0.0
    %523 = vmatpush.msra.mxu0 0.0
    %524 = vmatpush.msra.mxu0 %v349
    %525 = vmatpush.msra.mxu0 %v292
    %526 = vmatpush.msra.mxu0 %v287
    %527 = vmatpush.msra.mxu0 %v282
    %528 = vmatpush.msra.mxu0 %v277
    %529 = vmatpush.msra.mxu0 %v272
    %530 = vmatpush.msra.mxu0 %v267
    %531 = vmatmul.f32.gmra.mxu0 %v312
    %v532 = vpop.f32.mrf.mxu0
    %v533 = vadd.f32 %v304, %v532
    %534 = vmatmul.f32.gmra.mxu0 %v315
    %v535 = vpop.f32.mrf.mxu0
    %v536 = vadd.f32 %v304, %v535
    %537 = vmatmul.f32.gmra.mxu0 %v318
    %v538 = vpop.f32.mrf.mxu0
    %v539 = vadd.f32 %v304, %v538
    %540 = vmatmul.f32.gmra.mxu0 %v321
    %v541 = vpop.f32.mrf.mxu0
    %v542 = vadd.f32 %v304, %v541
    %543 = vmatmul.f32.gmra.mxu0 %v324
    %v544 = vpop.f32.mrf.mxu0
    %v545 = vadd.f32 %v304, %v544
    %546 = vmatmul.f32.gmra.mxu0 %v327
    %v547 = vpop.f32.mrf.mxu0
    %v548 = vadd.f32 %v304, %v547
    %549 = vmatmul.f32.gmra.mxu0 %v330
    %v550 = vpop.f32.mrf.mxu0
    %v551 = vadd.f32 %v304, %v550
    %552 = vmatmul.f32.gmra.mxu0 %v333
    %v553 = vpop.f32.mrf.mxu0
    %v554 = vadd.f32 %v304, %v553
    %555 = vdwg.mxu0
    %v556 = vmax.f32 %v369, 0.0
    %v557 = vmax.f32 %v410, 0.0
    %v558 = vmax.f32 %v451, 0.0
    %v559 = vmax.f32 %v492, 0.0
    %v560 = vmax.f32 %v533, 0.0
    %v561 = vmax.f32 %v372, 0.0
    %v562 = vmax.f32 %v413, 0.0
    %v563 = vmax.f32 %v454, 0.0
    %v564 = vmax.f32 %v495, 0.0
    %v565 = vmax.f32 %v536, 0.0
    %v566 = vmax.f32 %v375, 0.0
    %v567 = vmax.f32 %v416, 0.0
    %v568 = vmax.f32 %v457, 0.0
    %v569 = vmax.f32 %v498, 0.0
    %v570 = vmax.f32 %v539, 0.0
    %v571 = vmax.f32 %v378, 0.0
    %v572 = vmax.f32 %v419, 0.0
    %v573 = vmax.f32 %v460, 0.0
    %v574 = vmax.f32 %v501, 0.0
    %v575 = vmax.f32 %v542, 0.0
    %v576 = vmax.f32 %v381, 0.0
    %v577 = vmax.f32 %v422, 0.0
    %v578 = vmax.f32 %v463, 0.0
    %v579 = vmax.f32 %v504, 0.0
    %v580 = vmax.f32 %v545, 0.0
    %v581 = vmax.f32 %v384, 0.0
    %v582 = vmax.f32 %v425, 0.0
    %v583 = vmax.f32 %v466, 0.0
    %v584 = vmax.f32 %v507, 0.0
    %v585 = vmax.f32 %v548, 0.0
    %v586 = vmax.f32 %v387, 0.0
    %v587 = vmax.f32 %v428, 0.0
    %v588 = vmax.f32 %v469, 0.0
    %v589 = vmax.f32 %v510, 0.0
    %v590 = vmax.f32 %v551, 0.0
    %v591 = vmax.f32 %v390, 0.0
    %v592 = vmax.f32 %v431, 0.0
    %v593 = vmax.f32 %v472, 0.0
    %v594 = vmax.f32 %v513, 0.0
    %v595 = vmax.f32 %v554, 0.0
    %v596 = vld [vmem:[#allocation9] sm:$0xff]
    %v597 = vld [vmem:[#allocation9 + $0x8] sm:$0xff]
    %v598 = vld [vmem:[#allocation9 + $0x10] sm:$0xff]
    %v599 = vld [vmem:[#allocation9 + $0x18] sm:$0xff]
    %v600 = vld [vmem:[#allocation9 + $0x20] sm:$0xff]
    %v601 = vld [vmem:[#allocation9 + $0x28] sm:$0xff]
    %v602 = vld [vmem:[#allocation9 + $0x30] sm:$0xff]
    %v603 = vld [vmem:[#allocation9 + $0x38] sm:$0xff]
    %v604 = vld [vmem:[#allocation9 + $0x40] sm:$0xff]
    %v605 = vld [vmem:[#allocation9 + $0x48] sm:$0xff]
    %v606 = vld [vmem:[#allocation9 + $0x50] sm:$0xff]
    %v607 = vld [vmem:[#allocation9 + $0x58] sm:$0xff]
    %v608 = vld [vmem:[#allocation9 + $0x60] sm:$0xff]
    %v609 = vld [vmem:[#allocation9 + $0x68] sm:$0xff]
    %v610 = vld [vmem:[#allocation9 + $0x70] sm:$0xff]
    %v611 = vld [vmem:[#allocation9 + $0x78] sm:$0xff]
    %v612 = vld [vmem:[#allocation9 + $0x80] sm:$0xff]
    %v613 = vld [vmem:[#allocation9 + $0x88] sm:$0xff]
    %v614 = vld [vmem:[#allocation9 + $0x90] sm:$0xff]
    %v615 = vld [vmem:[#allocation9 + $0x98] sm:$0xff]
    %v616 = vld [vmem:[#allocation9 + $0xa0] sm:$0xff]
    %v617 = vld [vmem:[#allocation9 + $0xa8] sm:$0xff]
    %v618 = vld [vmem:[#allocation9 + $0xb0] sm:$0xff]
    %v619 = vld [vmem:[#allocation9 + $0xb8] sm:$0xff]
    %v620 = vld [vmem:[#allocation9 + $0xc0] sm:$0xff]
    %v621 = vld [vmem:[#allocation9 + $0xc8] sm:$0xff]
    %v622 = vld [vmem:[#allocation9 + $0xd0] sm:$0xff]
    %v623 = vld [vmem:[#allocation9 + $0xd8] sm:$0xff]
    %v624 = vld [vmem:[#allocation9 + $0xe0] sm:$0xff]
    %v625 = vld [vmem:[#allocation9 + $0xe8] sm:$0xff]
    %v626 = vld [vmem:[#allocation9 + $0xf0] sm:$0xff]
    %v627 = vld [vmem:[#allocation9 + $0xf8] sm:$0xff]
    %v628 = vld [vmem:[#allocation9 + $0x100] sm:$0xff]
    %v629 = vld [vmem:[#allocation9 + $0x108] sm:$0xff]
    %v630 = vld [vmem:[#allocation9 + $0x110] sm:$0xff]
    %v631 = vld [vmem:[#allocation9 + $0x118] sm:$0xff]
    %v632 = vld [vmem:[#allocation9 + $0x120] sm:$0xff]
    %v633 = vld [vmem:[#allocation9 + $0x128] sm:$0xff]
    %v634 = vld [vmem:[#allocation9 + $0x130] sm:$0xff]
    %v635 = vld [vmem:[#allocation9 + $0x138] sm:$0xff]
    %v636 = vld [vmem:[#allocation9 + $0x140] sm:$0xff]
    %v637 = vld [vmem:[#allocation9 + $0x148] sm:$0xff]
    %v638 = vld [vmem:[#allocation9 + $0x150] sm:$0xff]
    %v639 = vld [vmem:[#allocation9 + $0x158] sm:$0xff]
    %v640 = vld [vmem:[#allocation9 + $0x160] sm:$0xff]
    %v641 = vld [vmem:[#allocation9 + $0x168] sm:$0xff]
    %v642 = vld [vmem:[#allocation9 + $0x170] sm:$0xff]
    %v643 = vld [vmem:[#allocation9 + $0x178] sm:$0xff]
    %v644 = vld [vmem:[#allocation9 + $0x180] sm:$0xff]
    %v645 = vld [vmem:[#allocation9 + $0x188] sm:$0xff]
    %v646 = vld [vmem:[#allocation9 + $0x190] sm:$0xff]
    %v647 = vld [vmem:[#allocation9 + $0x198] sm:$0xff]
    %v648 = vld [vmem:[#allocation9 + $0x1a0] sm:$0xff]
    %v649 = vld [vmem:[#allocation9 + $0x1a8] sm:$0xff]
    %v650 = vld [vmem:[#allocation9 + $0x1b0] sm:$0xff]
    %v651 = vld [vmem:[#allocation9 + $0x1b8] sm:$0xff]
    %v652 = vld [vmem:[#allocation9 + $0x1c0] sm:$0xff]
    %v653 = vld [vmem:[#allocation9 + $0x1c8] sm:$0xff]
    %v654 = vld [vmem:[#allocation9 + $0x1d0] sm:$0xff]
    %v655 = vld [vmem:[#allocation9 + $0x1d8] sm:$0xff]
    %v656 = vld [vmem:[#allocation9 + $0x1e0] sm:$0xff]
    %v657 = vld [vmem:[#allocation9 + $0x1e8] sm:$0xff]
    %v658 = vld [vmem:[#allocation9 + $0x1f0] sm:$0xff]
    %v659 = vld [vmem:[#allocation9 + $0x1f8] sm:$0xff]
    %v660 = vld [vmem:[#allocation9 + $0x200] sm:$0xff]
    %v661 = vld [vmem:[#allocation9 + $0x208] sm:$0xff]
    %v662 = vld [vmem:[#allocation9 + $0x210] sm:$0xff]
    %v663 = vld [vmem:[#allocation9 + $0x218] sm:$0xff]
    %v664 = vld [vmem:[#allocation9 + $0x220] sm:$0xff]
    %v665 = vld [vmem:[#allocation9 + $0x228] sm:$0xff]
    %v666 = vld [vmem:[#allocation9 + $0x230] sm:$0xff]
    %v667 = vld [vmem:[#allocation9 + $0x238] sm:$0xff]
    %v668 = vld [vmem:[#allocation9 + $0x240] sm:$0xff]
    %v669 = vld [vmem:[#allocation9 + $0x248] sm:$0xff]
    %v670 = vld [vmem:[#allocation9 + $0x250] sm:$0xff]
    %v671 = vld [vmem:[#allocation9 + $0x258] sm:$0xff]
    %v672 = vld [vmem:[#allocation9 + $0x260] sm:$0xff]
    %v673 = vld [vmem:[#allocation9 + $0x268] sm:$0xff]
    %v674 = vld [vmem:[#allocation9 + $0x270] sm:$0xff]
    %v675 = vld [vmem:[#allocation9 + $0x278] sm:$0xff]
    %v676 = vld [vmem:[#allocation9 + $0x280] sm:$0xff]
    %v677 = vld [vmem:[#allocation9 + $0x288] sm:$0xff]
    %v678 = vld [vmem:[#allocation9 + $0x290] sm:$0xff]
    %v679 = vld [vmem:[#allocation9 + $0x298] sm:$0xff]
    %v680 = vld [vmem:[#allocation9 + $0x2a0] sm:$0xff]
    %v681 = vld [vmem:[#allocation9 + $0x2a8] sm:$0xff]
    %v682 = vld [vmem:[#allocation9 + $0x2b0] sm:$0xff]
    %v683 = vld [vmem:[#allocation9 + $0x2b8] sm:$0xff]
    %v684 = vld [vmem:[#allocation9 + $0x2c0] sm:$0xff]
    %v685 = vld [vmem:[#allocation9 + $0x2c8] sm:$0xff]
    %v686 = vld [vmem:[#allocation9 + $0x2d0] sm:$0xff]
    %v687 = vld [vmem:[#allocation9 + $0x2d8] sm:$0xff]
    %v688 = vld [vmem:[#allocation9 + $0x2e0] sm:$0xff]
    %v689 = vld [vmem:[#allocation9 + $0x2e8] sm:$0xff]
    %v690 = vld [vmem:[#allocation9 + $0x2f0] sm:$0xff]
    %v691 = vld [vmem:[#allocation9 + $0x2f8] sm:$0xff]
    %v692 = vld [vmem:[#allocation9 + $0x300] sm:$0xff]
    %v693 = vld [vmem:[#allocation9 + $0x308] sm:$0xff]
    %v694 = vld [vmem:[#allocation9 + $0x310] sm:$0xff]
    %v695 = vld [vmem:[#allocation9 + $0x318] sm:$0xff]
    %v696 = vld [vmem:[#allocation9 + $0x320] sm:$0xff]
    %v697 = vld [vmem:[#allocation9 + $0x328] sm:$0xff]
    %v698 = vld [vmem:[#allocation9 + $0x330] sm:$0xff]
    %v699 = vld [vmem:[#allocation9 + $0x338] sm:$0xff]
    %v700 = vld [vmem:[#allocation9 + $0x340] sm:$0xff]
    %v701 = vld [vmem:[#allocation9 + $0x348] sm:$0xff]
    %v702 = vld [vmem:[#allocation9 + $0x350] sm:$0xff]
    %v703 = vld [vmem:[#allocation9 + $0x358] sm:$0xff]
    %v704 = vld [vmem:[#allocation9 + $0x360] sm:$0xff]
    %v705 = vld [vmem:[#allocation9 + $0x368] sm:$0xff]
    %v706 = vld [vmem:[#allocation9 + $0x370] sm:$0xff]
    %v707 = vld [vmem:[#allocation9 + $0x378] sm:$0xff]
    %v708 = vld [vmem:[#allocation9 + $0x380] sm:$0xff]
    %v709 = vld [vmem:[#allocation9 + $0x388] sm:$0xff]
    %v710 = vld [vmem:[#allocation9 + $0x390] sm:$0xff]
    %v711 = vld [vmem:[#allocation9 + $0x398] sm:$0xff]
    %v712 = vld [vmem:[#allocation9 + $0x3a0] sm:$0xff]
    %v713 = vld [vmem:[#allocation9 + $0x3a8] sm:$0xff]
    %v714 = vld [vmem:[#allocation9 + $0x3b0] sm:$0xff]
    %v715 = vld [vmem:[#allocation9 + $0x3b8] sm:$0xff]
    %v716 = vld [vmem:[#allocation9 + $0x3c0] sm:$0xff]
    %v717 = vld [vmem:[#allocation9 + $0x3c8] sm:$0xff]
    %v718 = vld [vmem:[#allocation9 + $0x3d0] sm:$0xff]
    %v719 = vld [vmem:[#allocation9 + $0x3d8] sm:$0xff]
    %v720 = vld [vmem:[#allocation9 + $0x3e0] sm:$0xff]
    %v721 = vld [vmem:[#allocation9 + $0x3e8] sm:$0xff]
    %v722 = vld [vmem:[#allocation9 + $0x3f0] sm:$0xff]
    %v723 = vld [vmem:[#allocation9 + $0x3f8] sm:$0xff]
    %v724 = vld [vmem:[#allocation9 + $0x400] sm:$0xff]
    %v725 = vld [vmem:[#allocation9 + $0x408] sm:$0xff]
    %v726 = vld [vmem:[#allocation9 + $0x410] sm:$0xff]
    %v727 = vld [vmem:[#allocation9 + $0x418] sm:$0xff]
    %v728 = vld [vmem:[#allocation9 + $0x420] sm:$0xff]
    %v729 = vld [vmem:[#allocation9 + $0x428] sm:$0xff]
    %v730 = vld [vmem:[#allocation9 + $0x430] sm:$0xff]
    %v731 = vld [vmem:[#allocation9 + $0x438] sm:$0xff]
    %v732 = vld [vmem:[#allocation9 + $0x440] sm:$0xff]
    %v733 = vld [vmem:[#allocation9 + $0x448] sm:$0xff]
    %v734 = vld [vmem:[#allocation9 + $0x450] sm:$0xff]
    %v735 = vld [vmem:[#allocation9 + $0x458] sm:$0xff]
    %v736 = vld [vmem:[#allocation9 + $0x460] sm:$0xff]
    %v737 = vld [vmem:[#allocation9 + $0x468] sm:$0xff]
    %v738 = vld [vmem:[#allocation9 + $0x470] sm:$0xff]
    %v739 = vld [vmem:[#allocation9 + $0x478] sm:$0xff]
    %v740 = vld [vmem:[#allocation9 + $0x480] sm:$0xff]
    %v741 = vld [vmem:[#allocation9 + $0x488] sm:$0xff]
    %v742 = vld [vmem:[#allocation9 + $0x490] sm:$0xff]
    %v743 = vld [vmem:[#allocation9 + $0x498] sm:$0xff]
    %v744 = vld [vmem:[#allocation9 + $0x4a0] sm:$0xff]
    %v745 = vld [vmem:[#allocation9 + $0x4a8] sm:$0xff]
    %v746 = vld [vmem:[#allocation9 + $0x4b0] sm:$0xff]
    %v747 = vld [vmem:[#allocation9 + $0x4b8] sm:$0xff]
    %v748 = vld [vmem:[#allocation9 + $0x4c0] sm:$0xff]
    %v749 = vld [vmem:[#allocation9 + $0x4c8] sm:$0xff]
    %v750 = vld [vmem:[#allocation9 + $0x4d0] sm:$0xff]
    %v751 = vld [vmem:[#allocation9 + $0x4d8] sm:$0xff]
    %v752 = vld [vmem:[#allocation9 + $0x4e0] sm:$0xff]
    %v753 = vld [vmem:[#allocation9 + $0x4e8] sm:$0xff]
    %v754 = vld [vmem:[#allocation9 + $0x4f0] sm:$0xff]
    %v755 = vld [vmem:[#allocation9 + $0x4f8] sm:$0xff]
    %v756 = vld [vmem:[#allocation9 + $0x500] sm:$0xff]
    %v757 = vld [vmem:[#allocation9 + $0x508] sm:$0xff]
    %v758 = vld [vmem:[#allocation9 + $0x510] sm:$0xff]
    %v759 = vld [vmem:[#allocation9 + $0x518] sm:$0xff]
    %v760 = vld [vmem:[#allocation9 + $0x520] sm:$0xff]
    %v761 = vld [vmem:[#allocation9 + $0x528] sm:$0xff]
    %v762 = vld [vmem:[#allocation9 + $0x530] sm:$0xff]
    %v763 = vld [vmem:[#allocation9 + $0x538] sm:$0xff]
    %v764 = vld [vmem:[#allocation9 + $0x540] sm:$0xff]
    %v765 = vld [vmem:[#allocation9 + $0x548] sm:$0xff]
    %v766 = vld [vmem:[#allocation9 + $0x550] sm:$0xff]
    %v767 = vld [vmem:[#allocation9 + $0x558] sm:$0xff]
    %v768 = vld [vmem:[#allocation9 + $0x560] sm:$0xff]
    %v769 = vld [vmem:[#allocation9 + $0x568] sm:$0xff]
    %v770 = vld [vmem:[#allocation9 + $0x570] sm:$0xff]
    %v771 = vld [vmem:[#allocation9 + $0x578] sm:$0xff]
    %v772 = vld [vmem:[#allocation9 + $0x580] sm:$0xff]
    %v773 = vld [vmem:[#allocation9 + $0x588] sm:$0xff]
    %v774 = vld [vmem:[#allocation9 + $0x590] sm:$0xff]
    %v775 = vld [vmem:[#allocation9 + $0x598] sm:$0xff]
    %v776 = vld [vmem:[#allocation9 + $0x5a0] sm:$0xff]
    %v777 = vld [vmem:[#allocation9 + $0x5a8] sm:$0xff]
    %v778 = vld [vmem:[#allocation9 + $0x5b0] sm:$0xff]
    %v779 = vld [vmem:[#allocation9 + $0x5b8] sm:$0xff]
    %v780 = vld [vmem:[#allocation9 + $0x5c0] sm:$0xff]
    %v781 = vld [vmem:[#allocation9 + $0x5c8] sm:$0xff]
    %v782 = vld [vmem:[#allocation9 + $0x5d0] sm:$0xff]
    %v783 = vld [vmem:[#allocation9 + $0x5d8] sm:$0xff]
    %v784 = vld [vmem:[#allocation9 + $0x5e0] sm:$0xff]
    %v785 = vld [vmem:[#allocation9 + $0x5e8] sm:$0xff]
    %v786 = vld [vmem:[#allocation9 + $0x5f0] sm:$0xff]
    %v787 = vld [vmem:[#allocation9 + $0x5f8] sm:$0xff]
    %v788 = vld [vmem:[#allocation9 + $0x600] sm:$0xff]
    %v789 = vld [vmem:[#allocation9 + $0x608] sm:$0xff]
    %v790 = vld [vmem:[#allocation9 + $0x610] sm:$0xff]
    %v791 = vld [vmem:[#allocation9 + $0x618] sm:$0xff]
    %v792 = vld [vmem:[#allocation9 + $0x620] sm:$0xff]
    %v793 = vld [vmem:[#allocation9 + $0x628] sm:$0xff]
    %v794 = vld [vmem:[#allocation9 + $0x630] sm:$0xff]
    %v795 = vld [vmem:[#allocation9 + $0x638] sm:$0xff]
    %v796 = vld [vmem:[#allocation9 + $0x640] sm:$0xff]
    %v797 = vld [vmem:[#allocation9 + $0x648] sm:$0xff]
    %v798 = vld [vmem:[#allocation9 + $0x650] sm:$0xff]
    %v799 = vld [vmem:[#allocation9 + $0x658] sm:$0xff]
    %v800 = vld [vmem:[#allocation9 + $0x660] sm:$0xff]
    %v801 = vld [vmem:[#allocation9 + $0x668] sm:$0xff]
    %v802 = vld [vmem:[#allocation9 + $0x670] sm:$0xff]
    %v803 = vld [vmem:[#allocation9 + $0x678] sm:$0xff]
    %v804 = vld [vmem:[#allocation9 + $0x680] sm:$0xff]
    %v805 = vld [vmem:[#allocation9 + $0x688] sm:$0xff]
    %v806 = vld [vmem:[#allocation9 + $0x690] sm:$0xff]
    %v807 = vld [vmem:[#allocation9 + $0x698] sm:$0xff]
    %v808 = vld [vmem:[#allocation9 + $0x6a0] sm:$0xff]
    %v809 = vld [vmem:[#allocation9 + $0x6a8] sm:$0xff]
    %v810 = vld [vmem:[#allocation9 + $0x6b0] sm:$0xff]
    %v811 = vld [vmem:[#allocation9 + $0x6b8] sm:$0xff]
    %v812 = vld [vmem:[#allocation9 + $0x6c0] sm:$0xff]
    %v813 = vld [vmem:[#allocation9 + $0x6c8] sm:$0xff]
    %v814 = vld [vmem:[#allocation9 + $0x6d0] sm:$0xff]
    %v815 = vld [vmem:[#allocation9 + $0x6d8] sm:$0xff]
    %v816 = vld [vmem:[#allocation9 + $0x6e0] sm:$0xff]
    %v817 = vld [vmem:[#allocation9 + $0x6e8] sm:$0xff]
    %v818 = vld [vmem:[#allocation9 + $0x6f0] sm:$0xff]
    %v819 = vld [vmem:[#allocation9 + $0x6f8] sm:$0xff]
    %v820 = vld [vmem:[#allocation9 + $0x700] sm:$0xff]
    %v821 = vld [vmem:[#allocation9 + $0x708] sm:$0xff]
    %v822 = vld [vmem:[#allocation9 + $0x710] sm:$0xff]
    %v823 = vld [vmem:[#allocation9 + $0x718] sm:$0xff]
    %v824 = vld [vmem:[#allocation9 + $0x720] sm:$0xff]
    %v825 = vld [vmem:[#allocation9 + $0x728] sm:$0xff]
    %v826 = vld [vmem:[#allocation9 + $0x730] sm:$0xff]
    %v827 = vld [vmem:[#allocation9 + $0x738] sm:$0xff]
    %v828 = vld [vmem:[#allocation9 + $0x740] sm:$0xff]
    %v829 = vld [vmem:[#allocation9 + $0x748] sm:$0xff]
    %v830 = vld [vmem:[#allocation9 + $0x750] sm:$0xff]
    %v831 = vld [vmem:[#allocation9 + $0x758] sm:$0xff]
    %v832 = vld [vmem:[#allocation9 + $0x760] sm:$0xff]
    %v833 = vld [vmem:[#allocation9 + $0x768] sm:$0xff]
    %v834 = vld [vmem:[#allocation9 + $0x770] sm:$0xff]
    %v835 = vld [vmem:[#allocation9 + $0x778] sm:$0xff]
    %v836 = vld [vmem:[#allocation9 + $0x780] sm:$0xff]
    %v837 = vld [vmem:[#allocation9 + $0x788] sm:$0xff]
    %v838 = vld [vmem:[#allocation9 + $0x790] sm:$0xff]
    %v839 = vld [vmem:[#allocation9 + $0x798] sm:$0xff]
    %v840 = vld [vmem:[#allocation9 + $0x7a0] sm:$0xff]
    %v841 = vld [vmem:[#allocation9 + $0x7a8] sm:$0xff]
    %v842 = vld [vmem:[#allocation9 + $0x7b0] sm:$0xff]
    %v843 = vld [vmem:[#allocation9 + $0x7b8] sm:$0xff]
    %v844 = vld [vmem:[#allocation9 + $0x7c0] sm:$0xff]
    %v845 = vld [vmem:[#allocation9 + $0x7c8] sm:$0xff]
    %v846 = vld [vmem:[#allocation9 + $0x7d0] sm:$0xff]
    %v847 = vld [vmem:[#allocation9 + $0x7d8] sm:$0xff]
    %v848 = vld [vmem:[#allocation9 + $0x7e0] sm:$0xff]
    %v849 = vld [vmem:[#allocation9 + $0x7e8] sm:$0xff]
    %v850 = vld [vmem:[#allocation9 + $0x7f0] sm:$0xff]
    %v851 = vld [vmem:[#allocation9 + $0x7f8] sm:$0xff]
    %v852 = vld [vmem:[#allocation9 + $0x800] sm:$0xff]
    %v853 = vld [vmem:[#allocation9 + $0x808] sm:$0xff]
    %v854 = vld [vmem:[#allocation9 + $0x810] sm:$0xff]
    %v855 = vld [vmem:[#allocation9 + $0x818] sm:$0xff]
    %v856 = vld [vmem:[#allocation9 + $0x820] sm:$0xff]
    %v857 = vld [vmem:[#allocation9 + $0x828] sm:$0xff]
    %v858 = vld [vmem:[#allocation9 + $0x830] sm:$0xff]
    %v859 = vld [vmem:[#allocation9 + $0x838] sm:$0xff]
    %v860 = vld [vmem:[#allocation9 + $0x840] sm:$0xff]
    %v861 = vld [vmem:[#allocation9 + $0x848] sm:$0xff]
    %v862 = vld [vmem:[#allocation9 + $0x850] sm:$0xff]
    %v863 = vld [vmem:[#allocation9 + $0x858] sm:$0xff]
    %v864 = vld [vmem:[#allocation9 + $0x860] sm:$0xff]
    %v865 = vld [vmem:[#allocation9 + $0x868] sm:$0xff]
    %v866 = vld [vmem:[#allocation9 + $0x870] sm:$0xff]
    %v867 = vld [vmem:[#allocation9 + $0x878] sm:$0xff]
    %v868 = vld [vmem:[#allocation9 + $0x880] sm:$0xff]
    %v869 = vld [vmem:[#allocation9 + $0x888] sm:$0xff]
    %v870 = vld [vmem:[#allocation9 + $0x890] sm:$0xff]
    %v871 = vld [vmem:[#allocation9 + $0x898] sm:$0xff]
    %v872 = vld [vmem:[#allocation9 + $0x8a0] sm:$0xff]
    %v873 = vld [vmem:[#allocation9 + $0x8a8] sm:$0xff]
    %v874 = vld [vmem:[#allocation9 + $0x8b0] sm:$0xff]
    %v875 = vld [vmem:[#allocation9 + $0x8b8] sm:$0xff]
    %v876 = vld [vmem:[#allocation9 + $0x8c0] sm:$0xff]
    %v877 = vld [vmem:[#allocation9 + $0x8c8] sm:$0xff]
    %v878 = vld [vmem:[#allocation9 + $0x8d0] sm:$0xff]
    %v879 = vld [vmem:[#allocation9 + $0x8d8] sm:$0xff]
    %v880 = vld [vmem:[#allocation9 + $0x8e0] sm:$0xff]
    %v881 = vld [vmem:[#allocation9 + $0x8e8] sm:$0xff]
    %v882 = vld [vmem:[#allocation9 + $0x8f0] sm:$0xff]
    %v883 = vld [vmem:[#allocation9 + $0x8f8] sm:$0xff]
    %v884 = vld [vmem:[#allocation9 + $0x900] sm:$0xff]
    %v885 = vld [vmem:[#allocation9 + $0x908] sm:$0xff]
    %v886 = vld [vmem:[#allocation9 + $0x910] sm:$0xff]
    %v887 = vld [vmem:[#allocation9 + $0x918] sm:$0xff]
    %v888 = vld [vmem:[#allocation9 + $0x920] sm:$0xff]
    %v889 = vld [vmem:[#allocation9 + $0x928] sm:$0xff]
    %v890 = vld [vmem:[#allocation9 + $0x930] sm:$0xff]
    %v891 = vld [vmem:[#allocation9 + $0x938] sm:$0xff]
    %v892 = vld [vmem:[#allocation9 + $0x940] sm:$0xff]
    %v893 = vld [vmem:[#allocation9 + $0x948] sm:$0xff]
    %v894 = vld [vmem:[#allocation9 + $0x950] sm:$0xff]
    %v895 = vld [vmem:[#allocation9 + $0x958] sm:$0xff]
    %v896 = vld [vmem:[#allocation9 + $0x960] sm:$0xff]
    %v897 = vld [vmem:[#allocation9 + $0x968] sm:$0xff]
    %v898 = vld [vmem:[#allocation9 + $0x970] sm:$0xff]
    %v899 = vld [vmem:[#allocation9 + $0x978] sm:$0xff]
    %v900 = vld [vmem:[#allocation9 + $0x980] sm:$0xff]
    %v901 = vld [vmem:[#allocation9 + $0x988] sm:$0xff]
    %v902 = vld [vmem:[#allocation9 + $0x990] sm:$0xff]
    %v903 = vld [vmem:[#allocation9 + $0x998] sm:$0xff]
    %v904 = vld [vmem:[#allocation9 + $0x9a0] sm:$0xff]
    %v905 = vld [vmem:[#allocation9 + $0x9a8] sm:$0xff]
    %v906 = vld [vmem:[#allocation9 + $0x9b0] sm:$0xff]
    %v907 = vld [vmem:[#allocation9 + $0x9b8] sm:$0xff]
    %v908 = vld [vmem:[#allocation9 + $0x9c0] sm:$0xff]
    %v909 = vld [vmem:[#allocation9 + $0x9c8] sm:$0xff]
    %v910 = vld [vmem:[#allocation9 + $0x9d0] sm:$0xff]
    %v911 = vld [vmem:[#allocation9 + $0x9d8] sm:$0xff]
    %v912 = vld [vmem:[#allocation9 + $0x9e0] sm:$0xff]
    %v913 = vld [vmem:[#allocation9 + $0x9e8] sm:$0xff]
    %v914 = vld [vmem:[#allocation9 + $0x9f0] sm:$0xff]
    %v915 = vld [vmem:[#allocation9 + $0x9f8] sm:$0xff]
    %v916 = vld [vmem:[#allocation9 + $0xa00] sm:$0xff]
    %v917 = vld [vmem:[#allocation9 + $0xa08] sm:$0xff]
    %v918 = vld [vmem:[#allocation9 + $0xa10] sm:$0xff]
    %v919 = vld [vmem:[#allocation9 + $0xa18] sm:$0xff]
    %v920 = vld [vmem:[#allocation9 + $0xa20] sm:$0xff]
    %v921 = vld [vmem:[#allocation9 + $0xa28] sm:$0xff]
    %v922 = vld [vmem:[#allocation9 + $0xa30] sm:$0xff]
    %v923 = vld [vmem:[#allocation9 + $0xa38] sm:$0xff]
    %v924 = vld [vmem:[#allocation9 + $0xa40] sm:$0xff]
    %v925 = vld [vmem:[#allocation9 + $0xa48] sm:$0xff]
    %v926 = vld [vmem:[#allocation9 + $0xa50] sm:$0xff]
    %v927 = vld [vmem:[#allocation9 + $0xa58] sm:$0xff]
    %v928 = vld [vmem:[#allocation9 + $0xa60] sm:$0xff]
    %v929 = vld [vmem:[#allocation9 + $0xa68] sm:$0xff]
    %v930 = vld [vmem:[#allocation9 + $0xa70] sm:$0xff]
    %v931 = vld [vmem:[#allocation9 + $0xa78] sm:$0xff]
    %v932 = vld [vmem:[#allocation9 + $0xa80] sm:$0xff]
    %v933 = vld [vmem:[#allocation9 + $0xa88] sm:$0xff]
    %v934 = vld [vmem:[#allocation9 + $0xa90] sm:$0xff]
    %v935 = vld [vmem:[#allocation9 + $0xa98] sm:$0xff]
    %v936 = vld [vmem:[#allocation11] sm:$0x1f]
    %v938 = vperm.slane %v936, 0
    %v939 = vperm.slane %v936, 1
    %v940 = vperm.slane %v936, 2
    %v941 = vperm.slane %v936, 3
    %v942 = vperm.slane %v936, 4
    %vm948 = vcmask 261120
    %v950 = vsel %vm948, %v560, 0
    %v953 = vsel %vm948, %v565, 0
    %v956 = vsel %vm948, %v570, 0
    %v959 = vsel %vm948, %v575, 0
    %v962 = vsel %vm948, %v580, 0
    %v965 = vsel %vm948, %v585, 0
    %v968 = vsel %vm948, %v590, 0
    %v971 = vsel %vm948, %v595, 0
    %973 = vmatpush.msra.mxu0 %v671
    %974 = vmatpush.msra.mxu0 %v666
    %975 = vmatpush.msra.mxu0 %v661
    %976 = vmatpush.msra.mxu0 %v656
    %977 = vmatpush.msra.mxu0 %v651
    %978 = vmatpush.msra.mxu0 %v646
    %979 = vmatpush.msra.mxu0 %v641
    %980 = vmatpush.msra.mxu0 %v636
    %981 = vmatpush.msra.mxu0 %v631
    %982 = vmatpush.msra.mxu0 %v626
    %983 = vmatpush.msra.mxu0 %v621
    %984 = vmatpush.msra.mxu0 %v616
    %985 = vmatpush.msra.mxu0 %v611
    %986 = vmatpush.msra.mxu0 %v606
    %987 = vmatpush.msra.mxu0 %v601
    %988 = vmatpush.msra.mxu0 %v596
    %989 = vmatmul.f32.gmra.mxu0 %v556
    %v990 = vpop.f32.mrf.mxu0
    %v991 = vadd.f32 %v938, %v990
    %992 = vmatmul.f32.gmra.mxu0 %v561
    %v993 = vpop.f32.mrf.mxu0
    %v994 = vadd.f32 %v938, %v993
    %995 = vmatmul.f32.gmra.mxu0 %v566
    %v996 = vpop.f32.mrf.mxu0
    %v997 = vadd.f32 %v938, %v996
    %998 = vmatmul.f32.gmra.mxu0 %v571
    %v999 = vpop.f32.mrf.mxu0
    %v1000 = vadd.f32 %v938, %v999
    %1001 = vmatmul.f32.gmra.mxu0 %v576
    %v1002 = vpop.f32.mrf.mxu0
    %v1003 = vadd.f32 %v938, %v1002
    %1004 = vmatmul.f32.gmra.mxu0 %v581
    %v1005 = vpop.f32.mrf.mxu0
    %v1006 = vadd.f32 %v938, %v1005
    %1007 = vmatmul.f32.gmra.mxu0 %v586
    %v1008 = vpop.f32.mrf.mxu0
    %v1009 = vadd.f32 %v938, %v1008
    %1010 = vmatmul.f32.gmra.mxu0 %v591
    %v1011 = vpop.f32.mrf.mxu0
    %v1012 = vadd.f32 %v938, %v1011
    %1013 = vdwg.mxu0
    %1014 = vmatpush.msra.mxu0 %v751
    %1015 = vmatpush.msra.mxu0 %v746
    %1016 = vmatpush.msra.mxu0 %v741
    %1017 = vmatpush.msra.mxu0 %v736
    %1018 = vmatpush.msra.mxu0 %v731
    %1019 = vmatpush.msra.mxu0 %v726
    %1020 = vmatpush.msra.mxu0 %v721
    %1021 = vmatpush.msra.mxu0 %v716
    %1022 = vmatpush.msra.mxu0 %v711
    %1023 = vmatpush.msra.mxu0 %v706
    %1024 = vmatpush.msra.mxu0 %v701
    %1025 = vmatpush.msra.mxu0 %v696
    %1026 = vmatpush.msra.mxu0 %v691
    %1027 = vmatpush.msra.mxu0 %v686
    %1028 = vmatpush.msra.mxu0 %v681
    %1029 = vmatpush.msra.mxu0 %v676
    %1030 = vmatmul.f32.gmra.mxu0 %v557
    %v1031 = vpop.f32.mrf.mxu0
    %v1032 = vadd.f32 %v991, %v1031
    %1033 = vmatmul.f32.gmra.mxu0 %v562
    %v1034 = vpop.f32.mrf.mxu0
    %v1035 = vadd.f32 %v994, %v1034
    %1036 = vmatmul.f32.gmra.mxu0 %v567
    %v1037 = vpop.f32.mrf.mxu0
    %v1038 = vadd.f32 %v997, %v1037
    %1039 = vmatmul.f32.gmra.mxu0 %v572
    %v1040 = vpop.f32.mrf.mxu0
    %v1041 = vadd.f32 %v1000, %v1040
    %1042 = vmatmul.f32.gmra.mxu0 %v577
    %v1043 = vpop.f32.mrf.mxu0
    %v1044 = vadd.f32 %v1003, %v1043
    %1045 = vmatmul.f32.gmra.mxu0 %v582
    %v1046 = vpop.f32.mrf.mxu0
    %v1047 = vadd.f32 %v1006, %v1046
    %1048 = vmatmul.f32.gmra.mxu0 %v587
    %v1049 = vpop.f32.mrf.mxu0
    %v1050 = vadd.f32 %v1009, %v1049
    %1051 = vmatmul.f32.gmra.mxu0 %v592
    %v1052 = vpop.f32.mrf.mxu0
    %v1053 = vadd.f32 %v1012, %v1052
    %1054 = vdwg.mxu0
    %1055 = vmatpush.msra.mxu0 %v831
    %1056 = vmatpush.msra.mxu0 %v826
    %1057 = vmatpush.msra.mxu0 %v821
    %1058 = vmatpush.msra.mxu0 %v816
    %1059 = vmatpush.msra.mxu0 %v811
    %1060 = vmatpush.msra.mxu0 %v806
    %1061 = vmatpush.msra.mxu0 %v801
    %1062 = vmatpush.msra.mxu0 %v796
    %1063 = vmatpush.msra.mxu0 %v791
    %1064 = vmatpush.msra.mxu0 %v786
    %1065 = vmatpush.msra.mxu0 %v781
    %1066 = vmatpush.msra.mxu0 %v776
    %1067 = vmatpush.msra.mxu0 %v771
    %1068 = vmatpush.msra.mxu0 %v766
    %1069 = vmatpush.msra.mxu0 %v761
    %1070 = vmatpush.msra.mxu0 %v756
    %1071 = vmatmul.f32.gmra.mxu0 %v558
    %v1072 = vpop.f32.mrf.mxu0
    %v1073 = vadd.f32 %v1032, %v1072
    %1074 = vmatmul.f32.gmra.mxu0 %v563
    %v1075 = vpop.f32.mrf.mxu0
    %v1076 = vadd.f32 %v1035, %v1075
    %1077 = vmatmul.f32.gmra.mxu0 %v568
    %v1078 = vpop.f32.mrf.mxu0
    %v1079 = vadd.f32 %v1038, %v1078
    %1080 = vmatmul.f32.gmra.mxu0 %v573
    %v1081 = vpop.f32.mrf.mxu0
    %v1082 = vadd.f32 %v1041, %v1081
    %1083 = vmatmul.f32.gmra.mxu0 %v578
    %v1084 = vpop.f32.mrf.mxu0
    %v1085 = vadd.f32 %v1044, %v1084
    %1086 = vmatmul.f32.gmra.mxu0 %v583
    %v1087 = vpop.f32.mrf.mxu0
    %v1088 = vadd.f32 %v1047, %v1087
    %1089 = vmatmul.f32.gmra.mxu0 %v588
    %v1090 = vpop.f32.mrf.mxu0
    %v1091 = vadd.f32 %v1050, %v1090
    %1092 = vmatmul.f32.gmra.mxu0 %v593
    %v1093 = vpop.f32.mrf.mxu0
    %v1094 = vadd.f32 %v1053, %v1093
    %1095 = vdwg.mxu0
    %1096 = vmatpush.msra.mxu0 %v911
    %1097 = vmatpush.msra.mxu0 %v906
    %1098 = vmatpush.msra.mxu0 %v901
    %1099 = vmatpush.msra.mxu0 %v896
    %1100 = vmatpush.msra.mxu0 %v891
    %1101 = vmatpush.msra.mxu0 %v886
    %1102 = vmatpush.msra.mxu0 %v881
    %1103 = vmatpush.msra.mxu0 %v876
    %1104 = vmatpush.msra.mxu0 %v871
    %1105 = vmatpush.msra.mxu0 %v866
    %1106 = vmatpush.msra.mxu0 %v861
    %1107 = vmatpush.msra.mxu0 %v856
    %1108 = vmatpush.msra.mxu0 %v851
    %1109 = vmatpush.msra.mxu0 %v846
    %1110 = vmatpush.msra.mxu0 %v841
    %1111 = vmatpush.msra.mxu0 %v836
    %1112 = vmatmul.f32.gmra.mxu0 %v559
    %v1113 = vpop.f32.mrf.mxu0
    %v1114 = vadd.f32 %v1073, %v1113
    %1115 = vmatmul.f32.gmra.mxu0 %v564
    %v1116 = vpop.f32.mrf.mxu0
    %v1117 = vadd.f32 %v1076, %v1116
    %1118 = vmatmul.f32.gmra.mxu0 %v569
    %v1119 = vpop.f32.mrf.mxu0
    %v1120 = vadd.f32 %v1079, %v1119
    %1121 = vmatmul.f32.gmra.mxu0 %v574
    %v1122 = vpop.f32.mrf.mxu0
    %v1123 = vadd.f32 %v1082, %v1122
    %1124 = vmatmul.f32.gmra.mxu0 %v579
    %v1125 = vpop.f32.mrf.mxu0
    %v1126 = vadd.f32 %v1085, %v1125
    %1127 = vmatmul.f32.gmra.mxu0 %v584
    %v1128 = vpop.f32.mrf.mxu0
    %v1129 = vadd.f32 %v1088, %v1128
    %1130 = vmatmul.f32.gmra.mxu0 %v589
    %v1131 = vpop.f32.mrf.mxu0
    %v1132 = vadd.f32 %v1091, %v1131
    %1133 = vmatmul.f32.gmra.mxu0 %v594
    %v1134 = vpop.f32.mrf.mxu0
    %v1135 = vadd.f32 %v1094, %v1134
    %1136 = vdwg.mxu0
    %1137 = vmatpush.msra.mxu0 0.0
    %1138 = vmatpush.msra.mxu0 0.0
    %1139 = vmatpush.msra.mxu0 0.0
    %1140 = vmatpush.msra.mxu0 0.0
    %1141 = vmatpush.msra.mxu0 0.0
    %1142 = vmatpush.msra.mxu0 0.0
    %1143 = vmatpush.msra.mxu0 0.0
    %1144 = vmatpush.msra.mxu0 0.0
    %1145 = vmatpush.msra.mxu0 0.0
    %1146 = vmatpush.msra.mxu0 0.0
    %1147 = vmatpush.msra.mxu0 0.0
    %1148 = vmatpush.msra.mxu0 0.0
    %1149 = vmatpush.msra.mxu0 %v931
    %1150 = vmatpush.msra.mxu0 %v926
    %1151 = vmatpush.msra.mxu0 %v921
    %1152 = vmatpush.msra.mxu0 %v916
    %1153 = vmatmul.f32.gmra.mxu0 %v950
    %v1154 = vpop.f32.mrf.mxu0
    %v1155 = vadd.f32 %v1114, %v1154
    %1156 = vmatmul.f32.gmra.mxu0 %v953
    %v1157 = vpop.f32.mrf.mxu0
    %v1158 = vadd.f32 %v1117, %v1157
    %1159 = vmatmul.f32.gmra.mxu0 %v956
    %v1160 = vpop.f32.mrf.mxu0
    %v1161 = vadd.f32 %v1120, %v1160
    %1162 = vmatmul.f32.gmra.mxu0 %v959
    %v1163 = vpop.f32.mrf.mxu0
    %v1164 = vadd.f32 %v1123, %v1163
    %1165 = vmatmul.f32.gmra.mxu0 %v962
    %v1166 = vpop.f32.mrf.mxu0
    %v1167 = vadd.f32 %v1126, %v1166
    %1168 = vmatmul.f32.gmra.mxu0 %v965
    %v1169 = vpop.f32.mrf.mxu0
    %v1170 = vadd.f32 %v1129, %v1169
    %1171 = vmatmul.f32.gmra.mxu0 %v968
    %v1172 = vpop.f32.mrf.mxu0
    %v1173 = vadd.f32 %v1132, %v1172
    %1174 = vmatmul.f32.gmra.mxu0 %v971
    %v1175 = vpop.f32.mrf.mxu0
    %v1176 = vadd.f32 %v1135, %v1175
    %1177 = vdwg.mxu0
    %1178 = vmatpush.msra.mxu0 %v672
    %1179 = vmatpush.msra.mxu0 %v667
    %1180 = vmatpush.msra.mxu0 %v662
    %1181 = vmatpush.msra.mxu0 %v657
    %1182 = vmatpush.msra.mxu0 %v652
    %1183 = vmatpush.msra.mxu0 %v647
    %1184 = vmatpush.msra.mxu0 %v642
    %1185 = vmatpush.msra.mxu0 %v637
    %1186 = vmatpush.msra.mxu0 %v632
    %1187 = vmatpush.msra.mxu0 %v627
    %1188 = vmatpush.msra.mxu0 %v622
    %1189 = vmatpush.msra.mxu0 %v617
    %1190 = vmatpush.msra.mxu0 %v612
    %1191 = vmatpush.msra.mxu0 %v607
    %1192 = vmatpush.msra.mxu0 %v602
    %1193 = vmatpush.msra.mxu0 %v597
    %1194 = vmatmul.f32.gmra.mxu0 %v556
    %v1195 = vpop.f32.mrf.mxu0
    %v1196 = vadd.f32 %v939, %v1195
    %1197 = vmatmul.f32.gmra.mxu0 %v561
    %v1198 = vpop.f32.mrf.mxu0
    %v1199 = vadd.f32 %v939, %v1198
    %1200 = vmatmul.f32.gmra.mxu0 %v566
    %v1201 = vpop.f32.mrf.mxu0
    %v1202 = vadd.f32 %v939, %v1201
    %1203 = vmatmul.f32.gmra.mxu0 %v571
    %v1204 = vpop.f32.mrf.mxu0
    %v1205 = vadd.f32 %v939, %v1204
    %1206 = vmatmul.f32.gmra.mxu0 %v576
    %v1207 = vpop.f32.mrf.mxu0
    %v1208 = vadd.f32 %v939, %v1207
    %1209 = vmatmul.f32.gmra.mxu0 %v581
    %v1210 = vpop.f32.mrf.mxu0
    %v1211 = vadd.f32 %v939, %v1210
    %1212 = vmatmul.f32.gmra.mxu0 %v586
    %v1213 = vpop.f32.mrf.mxu0
    %v1214 = vadd.f32 %v939, %v1213
    %1215 = vmatmul.f32.gmra.mxu0 %v591
    %v1216 = vpop.f32.mrf.mxu0
    %v1217 = vadd.f32 %v939, %v1216
    %1218 = vdwg.mxu0
    %1219 = vmatpush.msra.mxu0 %v752
    %1220 = vmatpush.msra.mxu0 %v747
    %1221 = vmatpush.msra.mxu0 %v742
    %1222 = vmatpush.msra.mxu0 %v737
    %1223 = vmatpush.msra.mxu0 %v732
    %1224 = vmatpush.msra.mxu0 %v727
    %1225 = vmatpush.msra.mxu0 %v722
    %1226 = vmatpush.msra.mxu0 %v717
    %1227 = vmatpush.msra.mxu0 %v712
    %1228 = vmatpush.msra.mxu0 %v707
    %1229 = vmatpush.msra.mxu0 %v702
    %1230 = vmatpush.msra.mxu0 %v697
    %1231 = vmatpush.msra.mxu0 %v692
    %1232 = vmatpush.msra.mxu0 %v687
    %1233 = vmatpush.msra.mxu0 %v682
    %1234 = vmatpush.msra.mxu0 %v677
    %1235 = vmatmul.f32.gmra.mxu0 %v557
    %v1236 = vpop.f32.mrf.mxu0
    %v1237 = vadd.f32 %v1196, %v1236
    %1238 = vmatmul.f32.gmra.mxu0 %v562
    %v1239 = vpop.f32.mrf.mxu0
    %v1240 = vadd.f32 %v1199, %v1239
    %1241 = vmatmul.f32.gmra.mxu0 %v567
    %v1242 = vpop.f32.mrf.mxu0
    %v1243 = vadd.f32 %v1202, %v1242
    %1244 = vmatmul.f32.gmra.mxu0 %v572
    %v1245 = vpop.f32.mrf.mxu0
    %v1246 = vadd.f32 %v1205, %v1245
    %1247 = vmatmul.f32.gmra.mxu0 %v577
    %v1248 = vpop.f32.mrf.mxu0
    %v1249 = vadd.f32 %v1208, %v1248
    %1250 = vmatmul.f32.gmra.mxu0 %v582
    %v1251 = vpop.f32.mrf.mxu0
    %v1252 = vadd.f32 %v1211, %v1251
    %1253 = vmatmul.f32.gmra.mxu0 %v587
    %v1254 = vpop.f32.mrf.mxu0
    %v1255 = vadd.f32 %v1214, %v1254
    %1256 = vmatmul.f32.gmra.mxu0 %v592
    %v1257 = vpop.f32.mrf.mxu0
    %v1258 = vadd.f32 %v1217, %v1257
    %1259 = vdwg.mxu0
    %1260 = vmatpush.msra.mxu0 %v832
    %1261 = vmatpush.msra.mxu0 %v827
    %1262 = vmatpush.msra.mxu0 %v822
    %1263 = vmatpush.msra.mxu0 %v817
    %1264 = vmatpush.msra.mxu0 %v812
    %1265 = vmatpush.msra.mxu0 %v807
    %1266 = vmatpush.msra.mxu0 %v802
    %1267 = vmatpush.msra.mxu0 %v797
    %1268 = vmatpush.msra.mxu0 %v792
    %1269 = vmatpush.msra.mxu0 %v787
    %1270 = vmatpush.msra.mxu0 %v782
    %1271 = vmatpush.msra.mxu0 %v777
    %1272 = vmatpush.msra.mxu0 %v772
    %1273 = vmatpush.msra.mxu0 %v767
    %1274 = vmatpush.msra.mxu0 %v762
    %1275 = vmatpush.msra.mxu0 %v757
    %1276 = vmatmul.f32.gmra.mxu0 %v558
    %v1277 = vpop.f32.mrf.mxu0
    %v1278 = vadd.f32 %v1237, %v1277
    %1279 = vmatmul.f32.gmra.mxu0 %v563
    %v1280 = vpop.f32.mrf.mxu0
    %v1281 = vadd.f32 %v1240, %v1280
    %1282 = vmatmul.f32.gmra.mxu0 %v568
    %v1283 = vpop.f32.mrf.mxu0
    %v1284 = vadd.f32 %v1243, %v1283
    %1285 = vmatmul.f32.gmra.mxu0 %v573
    %v1286 = vpop.f32.mrf.mxu0
    %v1287 = vadd.f32 %v1246, %v1286
    %1288 = vmatmul.f32.gmra.mxu0 %v578
    %v1289 = vpop.f32.mrf.mxu0
    %v1290 = vadd.f32 %v1249, %v1289
    %1291 = vmatmul.f32.gmra.mxu0 %v583
    %v1292 = vpop.f32.mrf.mxu0
    %v1293 = vadd.f32 %v1252, %v1292
    %1294 = vmatmul.f32.gmra.mxu0 %v588
    %v1295 = vpop.f32.mrf.mxu0
    %v1296 = vadd.f32 %v1255, %v1295
    %1297 = vmatmul.f32.gmra.mxu0 %v593
    %v1298 = vpop.f32.mrf.mxu0
    %v1299 = vadd.f32 %v1258, %v1298
    %1300 = vdwg.mxu0
    %1301 = vmatpush.msra.mxu0 %v912
    %1302 = vmatpush.msra.mxu0 %v907
    %1303 = vmatpush.msra.mxu0 %v902
    %1304 = vmatpush.msra.mxu0 %v897
    %1305 = vmatpush.msra.mxu0 %v892
    %1306 = vmatpush.msra.mxu0 %v887
    %1307 = vmatpush.msra.mxu0 %v882
    %1308 = vmatpush.msra.mxu0 %v877
    %1309 = vmatpush.msra.mxu0 %v872
    %1310 = vmatpush.msra.mxu0 %v867
    %1311 = vmatpush.msra.mxu0 %v862
    %1312 = vmatpush.msra.mxu0 %v857
    %1313 = vmatpush.msra.mxu0 %v852
    %1314 = vmatpush.msra.mxu0 %v847
    %1315 = vmatpush.msra.mxu0 %v842
    %1316 = vmatpush.msra.mxu0 %v837
    %1317 = vmatmul.f32.gmra.mxu0 %v559
    %v1318 = vpop.f32.mrf.mxu0
    %v1319 = vadd.f32 %v1278, %v1318
    %1320 = vmatmul.f32.gmra.mxu0 %v564
    %v1321 = vpop.f32.mrf.mxu0
    %v1322 = vadd.f32 %v1281, %v1321
    %1323 = vmatmul.f32.gmra.mxu0 %v569
    %v1324 = vpop.f32.mrf.mxu0
    %v1325 = vadd.f32 %v1284, %v1324
    %1326 = vmatmul.f32.gmra.mxu0 %v574
    %v1327 = vpop.f32.mrf.mxu0
    %v1328 = vadd.f32 %v1287, %v1327
    %1329 = vmatmul.f32.gmra.mxu0 %v579
    %v1330 = vpop.f32.mrf.mxu0
    %v1331 = vadd.f32 %v1290, %v1330
    %1332 = vmatmul.f32.gmra.mxu0 %v584
    %v1333 = vpop.f32.mrf.mxu0
    %v1334 = vadd.f32 %v1293, %v1333
    %1335 = vmatmul.f32.gmra.mxu0 %v589
    %v1336 = vpop.f32.mrf.mxu0
    %v1337 = vadd.f32 %v1296, %v1336
    %1338 = vmatmul.f32.gmra.mxu0 %v594
    %v1339 = vpop.f32.mrf.mxu0
    %v1340 = vadd.f32 %v1299, %v1339
    %1341 = vdwg.mxu0
    %1342 = vmatpush.msra.mxu0 0.0
    %1343 = vmatpush.msra.mxu0 0.0
    %1344 = vmatpush.msra.mxu0 0.0
    %1345 = vmatpush.msra.mxu0 0.0
    %1346 = vmatpush.msra.mxu0 0.0
    %1347 = vmatpush.msra.mxu0 0.0
    %1348 = vmatpush.msra.mxu0 0.0
    %1349 = vmatpush.msra.mxu0 0.0
    %1350 = vmatpush.msra.mxu0 0.0
    %1351 = vmatpush.msra.mxu0 0.0
    %1352 = vmatpush.msra.mxu0 0.0
    %1353 = vmatpush.msra.mxu0 0.0
    %1354 = vmatpush.msra.mxu0 %v932
    %1355 = vmatpush.msra.mxu0 %v927
    %1356 = vmatpush.msra.mxu0 %v922
    %1357 = vmatpush.msra.mxu0 %v917
    %1358 = vmatmul.f32.gmra.mxu0 %v950
    %v1359 = vpop.f32.mrf.mxu0
    %v1360 = vadd.f32 %v1319, %v1359
    %1361 = vmatmul.f32.gmra.mxu0 %v953
    %v1362 = vpop.f32.mrf.mxu0
    %v1363 = vadd.f32 %v1322, %v1362
    %1364 = vmatmul.f32.gmra.mxu0 %v956
    %v1365 = vpop.f32.mrf.mxu0
    %v1366 = vadd.f32 %v1325, %v1365
    %1367 = vmatmul.f32.gmra.mxu0 %v959
    %v1368 = vpop.f32.mrf.mxu0
    %v1369 = vadd.f32 %v1328, %v1368
    %1370 = vmatmul.f32.gmra.mxu0 %v962
    %v1371 = vpop.f32.mrf.mxu0
    %v1372 = vadd.f32 %v1331, %v1371
    %1373 = vmatmul.f32.gmra.mxu0 %v965
    %v1374 = vpop.f32.mrf.mxu0
    %v1375 = vadd.f32 %v1334, %v1374
    %1376 = vmatmul.f32.gmra.mxu0 %v968
    %v1377 = vpop.f32.mrf.mxu0
    %v1378 = vadd.f32 %v1337, %v1377
    %1379 = vmatmul.f32.gmra.mxu0 %v971
    %v1380 = vpop.f32.mrf.mxu0
    %v1381 = vadd.f32 %v1340, %v1380
    %1382 = vdwg.mxu0
    %1383 = vmatpush.msra.mxu0 %v673
    %1384 = vmatpush.msra.mxu0 %v668
    %1385 = vmatpush.msra.mxu0 %v663
    %1386 = vmatpush.msra.mxu0 %v658
    %1387 = vmatpush.msra.mxu0 %v653
    %1388 = vmatpush.msra.mxu0 %v648
    %1389 = vmatpush.msra.mxu0 %v643
    %1390 = vmatpush.msra.mxu0 %v638
    %1391 = vmatpush.msra.mxu0 %v633
    %1392 = vmatpush.msra.mxu0 %v628
    %1393 = vmatpush.msra.mxu0 %v623
    %1394 = vmatpush.msra.mxu0 %v618
    %1395 = vmatpush.msra.mxu0 %v613
    %1396 = vmatpush.msra.mxu0 %v608
    %1397 = vmatpush.msra.mxu0 %v603
    %1398 = vmatpush.msra.mxu0 %v598
    %1399 = vmatmul.f32.gmra.mxu0 %v556
    %v1400 = vpop.f32.mrf.mxu0
    %v1401 = vadd.f32 %v940, %v1400
    %1402 = vmatmul.f32.gmra.mxu0 %v561
    %v1403 = vpop.f32.mrf.mxu0
    %v1404 = vadd.f32 %v940, %v1403
    %1405 = vmatmul.f32.gmra.mxu0 %v566
    %v1406 = vpop.f32.mrf.mxu0
    %v1407 = vadd.f32 %v940, %v1406
    %1408 = vmatmul.f32.gmra.mxu0 %v571
    %v1409 = vpop.f32.mrf.mxu0
    %v1410 = vadd.f32 %v940, %v1409
    %1411 = vmatmul.f32.gmra.mxu0 %v576
    %v1412 = vpop.f32.mrf.mxu0
    %v1413 = vadd.f32 %v940, %v1412
    %1414 = vmatmul.f32.gmra.mxu0 %v581
    %v1415 = vpop.f32.mrf.mxu0
    %v1416 = vadd.f32 %v940, %v1415
    %1417 = vmatmul.f32.gmra.mxu0 %v586
    %v1418 = vpop.f32.mrf.mxu0
    %v1419 = vadd.f32 %v940, %v1418
    %1420 = vmatmul.f32.gmra.mxu0 %v591
    %v1421 = vpop.f32.mrf.mxu0
    %v1422 = vadd.f32 %v940, %v1421
    %1423 = vdwg.mxu0
    %1424 = vmatpush.msra.mxu0 %v753
    %1425 = vmatpush.msra.mxu0 %v748
    %1426 = vmatpush.msra.mxu0 %v743
    %1427 = vmatpush.msra.mxu0 %v738
    %1428 = vmatpush.msra.mxu0 %v733
    %1429 = vmatpush.msra.mxu0 %v728
    %1430 = vmatpush.msra.mxu0 %v723
    %1431 = vmatpush.msra.mxu0 %v718
    %1432 = vmatpush.msra.mxu0 %v713
    %1433 = vmatpush.msra.mxu0 %v708
    %1434 = vmatpush.msra.mxu0 %v703
    %1435 = vmatpush.msra.mxu0 %v698
    %1436 = vmatpush.msra.mxu0 %v693
    %1437 = vmatpush.msra.mxu0 %v688
    %1438 = vmatpush.msra.mxu0 %v683
    %1439 = vmatpush.msra.mxu0 %v678
    %1440 = vmatmul.f32.gmra.mxu0 %v557
    %v1441 = vpop.f32.mrf.mxu0
    %v1442 = vadd.f32 %v1401, %v1441
    %1443 = vmatmul.f32.gmra.mxu0 %v562
    %v1444 = vpop.f32.mrf.mxu0
    %v1445 = vadd.f32 %v1404, %v1444
    %1446 = vmatmul.f32.gmra.mxu0 %v567
    %v1447 = vpop.f32.mrf.mxu0
    %v1448 = vadd.f32 %v1407, %v1447
    %1449 = vmatmul.f32.gmra.mxu0 %v572
    %v1450 = vpop.f32.mrf.mxu0
    %v1451 = vadd.f32 %v1410, %v1450
    %1452 = vmatmul.f32.gmra.mxu0 %v577
    %v1453 = vpop.f32.mrf.mxu0
    %v1454 = vadd.f32 %v1413, %v1453
    %1455 = vmatmul.f32.gmra.mxu0 %v582
    %v1456 = vpop.f32.mrf.mxu0
    %v1457 = vadd.f32 %v1416, %v1456
    %1458 = vmatmul.f32.gmra.mxu0 %v587
    %v1459 = vpop.f32.mrf.mxu0
    %v1460 = vadd.f32 %v1419, %v1459
    %1461 = vmatmul.f32.gmra.mxu0 %v592
    %v1462 = vpop.f32.mrf.mxu0
    %v1463 = vadd.f32 %v1422, %v1462
    %1464 = vdwg.mxu0
    %1465 = vmatpush.msra.mxu0 %v833
    %1466 = vmatpush.msra.mxu0 %v828
    %1467 = vmatpush.msra.mxu0 %v823
    %1468 = vmatpush.msra.mxu0 %v818
    %1469 = vmatpush.msra.mxu0 %v813
    %1470 = vmatpush.msra.mxu0 %v808
    %1471 = vmatpush.msra.mxu0 %v803
    %1472 = vmatpush.msra.mxu0 %v798
    %1473 = vmatpush.msra.mxu0 %v793
    %1474 = vmatpush.msra.mxu0 %v788
    %1475 = vmatpush.msra.mxu0 %v783
    %1476 = vmatpush.msra.mxu0 %v778
    %1477 = vmatpush.msra.mxu0 %v773
    %1478 = vmatpush.msra.mxu0 %v768
    %1479 = vmatpush.msra.mxu0 %v763
    %1480 = vmatpush.msra.mxu0 %v758
    %1481 = vmatmul.f32.gmra.mxu0 %v558
    %v1482 = vpop.f32.mrf.mxu0
    %v1483 = vadd.f32 %v1442, %v1482
    %1484 = vmatmul.f32.gmra.mxu0 %v563
    %v1485 = vpop.f32.mrf.mxu0
    %v1486 = vadd.f32 %v1445, %v1485
    %1487 = vmatmul.f32.gmra.mxu0 %v568
    %v1488 = vpop.f32.mrf.mxu0
    %v1489 = vadd.f32 %v1448, %v1488
    %1490 = vmatmul.f32.gmra.mxu0 %v573
    %v1491 = vpop.f32.mrf.mxu0
    %v1492 = vadd.f32 %v1451, %v1491
    %1493 = vmatmul.f32.gmra.mxu0 %v578
    %v1494 = vpop.f32.mrf.mxu0
    %v1495 = vadd.f32 %v1454, %v1494
    %1496 = vmatmul.f32.gmra.mxu0 %v583
    %v1497 = vpop.f32.mrf.mxu0
    %v1498 = vadd.f32 %v1457, %v1497
    %1499 = vmatmul.f32.gmra.mxu0 %v588
    %v1500 = vpop.f32.mrf.mxu0
    %v1501 = vadd.f32 %v1460, %v1500
    %1502 = vmatmul.f32.gmra.mxu0 %v593
    %v1503 = vpop.f32.mrf.mxu0
    %v1504 = vadd.f32 %v1463, %v1503
    %1505 = vdwg.mxu0
    %1506 = vmatpush.msra.mxu0 %v913
    %1507 = vmatpush.msra.mxu0 %v908
    %1508 = vmatpush.msra.mxu0 %v903
    %1509 = vmatpush.msra.mxu0 %v898
    %1510 = vmatpush.msra.mxu0 %v893
    %1511 = vmatpush.msra.mxu0 %v888
    %1512 = vmatpush.msra.mxu0 %v883
    %1513 = vmatpush.msra.mxu0 %v878
    %1514 = vmatpush.msra.mxu0 %v873
    %1515 = vmatpush.msra.mxu0 %v868
    %1516 = vmatpush.msra.mxu0 %v863
    %1517 = vmatpush.msra.mxu0 %v858
    %1518 = vmatpush.msra.mxu0 %v853
    %1519 = vmatpush.msra.mxu0 %v848
    %1520 = vmatpush.msra.mxu0 %v843
    %1521 = vmatpush.msra.mxu0 %v838
    %1522 = vmatmul.f32.gmra.mxu0 %v559
    %v1523 = vpop.f32.mrf.mxu0
    %v1524 = vadd.f32 %v1483, %v1523
    %1525 = vmatmul.f32.gmra.mxu0 %v564
    %v1526 = vpop.f32.mrf.mxu0
    %v1527 = vadd.f32 %v1486, %v1526
    %1528 = vmatmul.f32.gmra.mxu0 %v569
    %v1529 = vpop.f32.mrf.mxu0
    %v1530 = vadd.f32 %v1489, %v1529
    %1531 = vmatmul.f32.gmra.mxu0 %v574
    %v1532 = vpop.f32.mrf.mxu0
    %v1533 = vadd.f32 %v1492, %v1532
    %1534 = vmatmul.f32.gmra.mxu0 %v579
    %v1535 = vpop.f32.mrf.mxu0
    %v1536 = vadd.f32 %v1495, %v1535
    %1537 = vmatmul.f32.gmra.mxu0 %v584
    %v1538 = vpop.f32.mrf.mxu0
    %v1539 = vadd.f32 %v1498, %v1538
    %1540 = vmatmul.f32.gmra.mxu0 %v589
    %v1541 = vpop.f32.mrf.mxu0
    %v1542 = vadd.f32 %v1501, %v1541
    %1543 = vmatmul.f32.gmra.mxu0 %v594
    %v1544 = vpop.f32.mrf.mxu0
    %v1545 = vadd.f32 %v1504, %v1544
    %1546 = vdwg.mxu0
    %1547 = vmatpush.msra.mxu0 0.0
    %1548 = vmatpush.msra.mxu0 0.0
    %1549 = vmatpush.msra.mxu0 0.0
    %1550 = vmatpush.msra.mxu0 0.0
    %1551 = vmatpush.msra.mxu0 0.0
    %1552 = vmatpush.msra.mxu0 0.0
    %1553 = vmatpush.msra.mxu0 0.0
    %1554 = vmatpush.msra.mxu0 0.0
    %1555 = vmatpush.msra.mxu0 0.0
    %1556 = vmatpush.msra.mxu0 0.0
    %1557 = vmatpush.msra.mxu0 0.0
    %1558 = vmatpush.msra.mxu0 0.0
    %1559 = vmatpush.msra.mxu0 %v933
    %1560 = vmatpush.msra.mxu0 %v928
    %1561 = vmatpush.msra.mxu0 %v923
    %1562 = vmatpush.msra.mxu0 %v918
    %1563 = vmatmul.f32.gmra.mxu0 %v950
    %v1564 = vpop.f32.mrf.mxu0
    %v1565 = vadd.f32 %v1524, %v1564
    %1566 = vmatmul.f32.gmra.mxu0 %v953
    %v1567 = vpop.f32.mrf.mxu0
    %v1568 = vadd.f32 %v1527, %v1567
    %1569 = vmatmul.f32.gmra.mxu0 %v956
    %v1570 = vpop.f32.mrf.mxu0
    %v1571 = vadd.f32 %v1530, %v1570
    %1572 = vmatmul.f32.gmra.mxu0 %v959
    %v1573 = vpop.f32.mrf.mxu0
    %v1574 = vadd.f32 %v1533, %v1573
    %1575 = vmatmul.f32.gmra.mxu0 %v962
    %v1576 = vpop.f32.mrf.mxu0
    %v1577 = vadd.f32 %v1536, %v1576
    %1578 = vmatmul.f32.gmra.mxu0 %v965
    %v1579 = vpop.f32.mrf.mxu0
    %v1580 = vadd.f32 %v1539, %v1579
    %1581 = vmatmul.f32.gmra.mxu0 %v968
    %v1582 = vpop.f32.mrf.mxu0
    %v1583 = vadd.f32 %v1542, %v1582
    %1584 = vmatmul.f32.gmra.mxu0 %v971
    %v1585 = vpop.f32.mrf.mxu0
    %v1586 = vadd.f32 %v1545, %v1585
    %1587 = vdwg.mxu0
    %1588 = vmatpush.msra.mxu0 %v674
    %1589 = vmatpush.msra.mxu0 %v669
    %1590 = vmatpush.msra.mxu0 %v664
    %1591 = vmatpush.msra.mxu0 %v659
    %1592 = vmatpush.msra.mxu0 %v654
    %1593 = vmatpush.msra.mxu0 %v649
    %1594 = vmatpush.msra.mxu0 %v644
    %1595 = vmatpush.msra.mxu0 %v639
    %1596 = vmatpush.msra.mxu0 %v634
    %1597 = vmatpush.msra.mxu0 %v629
    %1598 = vmatpush.msra.mxu0 %v624
    %1599 = vmatpush.msra.mxu0 %v619
    %1600 = vmatpush.msra.mxu0 %v614
    %1601 = vmatpush.msra.mxu0 %v609
    %1602 = vmatpush.msra.mxu0 %v604
    %1603 = vmatpush.msra.mxu0 %v599
    %1604 = vmatmul.f32.gmra.mxu0 %v556
    %v1605 = vpop.f32.mrf.mxu0
    %v1606 = vadd.f32 %v941, %v1605
    %1607 = vmatmul.f32.gmra.mxu0 %v561
    %v1608 = vpop.f32.mrf.mxu0
    %v1609 = vadd.f32 %v941, %v1608
    %1610 = vmatmul.f32.gmra.mxu0 %v566
    %v1611 = vpop.f32.mrf.mxu0
    %v1612 = vadd.f32 %v941, %v1611
    %1613 = vmatmul.f32.gmra.mxu0 %v571
    %v1614 = vpop.f32.mrf.mxu0
    %v1615 = vadd.f32 %v941, %v1614
    %1616 = vmatmul.f32.gmra.mxu0 %v576
    %v1617 = vpop.f32.mrf.mxu0
    %v1618 = vadd.f32 %v941, %v1617
    %1619 = vmatmul.f32.gmra.mxu0 %v581
    %v1620 = vpop.f32.mrf.mxu0
    %v1621 = vadd.f32 %v941, %v1620
    %1622 = vmatmul.f32.gmra.mxu0 %v586
    %v1623 = vpop.f32.mrf.mxu0
    %v1624 = vadd.f32 %v941, %v1623
    %1625 = vmatmul.f32.gmra.mxu0 %v591
    %v1626 = vpop.f32.mrf.mxu0
    %v1627 = vadd.f32 %v941, %v1626
    %1628 = vdwg.mxu0
    %1629 = vmatpush.msra.mxu0 %v754
    %1630 = vmatpush.msra.mxu0 %v749
    %1631 = vmatpush.msra.mxu0 %v744
    %1632 = vmatpush.msra.mxu0 %v739
    %1633 = vmatpush.msra.mxu0 %v734
    %1634 = vmatpush.msra.mxu0 %v729
    %1635 = vmatpush.msra.mxu0 %v724
    %1636 = vmatpush.msra.mxu0 %v719
    %1637 = vmatpush.msra.mxu0 %v714
    %1638 = vmatpush.msra.mxu0 %v709
    %1639 = vmatpush.msra.mxu0 %v704
    %1640 = vmatpush.msra.mxu0 %v699
    %1641 = vmatpush.msra.mxu0 %v694
    %1642 = vmatpush.msra.mxu0 %v689
    %1643 = vmatpush.msra.mxu0 %v684
    %1644 = vmatpush.msra.mxu0 %v679
    %1645 = vmatmul.f32.gmra.mxu0 %v557
    %v1646 = vpop.f32.mrf.mxu0
    %v1647 = vadd.f32 %v1606, %v1646
    %1648 = vmatmul.f32.gmra.mxu0 %v562
    %v1649 = vpop.f32.mrf.mxu0
    %v1650 = vadd.f32 %v1609, %v1649
    %1651 = vmatmul.f32.gmra.mxu0 %v567
    %v1652 = vpop.f32.mrf.mxu0
    %v1653 = vadd.f32 %v1612, %v1652
    %1654 = vmatmul.f32.gmra.mxu0 %v572
    %v1655 = vpop.f32.mrf.mxu0
    %v1656 = vadd.f32 %v1615, %v1655
    %1657 = vmatmul.f32.gmra.mxu0 %v577
    %v1658 = vpop.f32.mrf.mxu0
    %v1659 = vadd.f32 %v1618, %v1658
    %1660 = vmatmul.f32.gmra.mxu0 %v582
    %v1661 = vpop.f32.mrf.mxu0
    %v1662 = vadd.f32 %v1621, %v1661
    %1663 = vmatmul.f32.gmra.mxu0 %v587
    %v1664 = vpop.f32.mrf.mxu0
    %v1665 = vadd.f32 %v1624, %v1664
    %1666 = vmatmul.f32.gmra.mxu0 %v592
    %v1667 = vpop.f32.mrf.mxu0
    %v1668 = vadd.f32 %v1627, %v1667
    %1669 = vdwg.mxu0
    %1670 = vmatpush.msra.mxu0 %v834
    %1671 = vmatpush.msra.mxu0 %v829
    %1672 = vmatpush.msra.mxu0 %v824
    %1673 = vmatpush.msra.mxu0 %v819
    %1674 = vmatpush.msra.mxu0 %v814
    %1675 = vmatpush.msra.mxu0 %v809
    %1676 = vmatpush.msra.mxu0 %v804
    %1677 = vmatpush.msra.mxu0 %v799
    %1678 = vmatpush.msra.mxu0 %v794
    %1679 = vmatpush.msra.mxu0 %v789
    %1680 = vmatpush.msra.mxu0 %v784
    %1681 = vmatpush.msra.mxu0 %v779
    %1682 = vmatpush.msra.mxu0 %v774
    %1683 = vmatpush.msra.mxu0 %v769
    %1684 = vmatpush.msra.mxu0 %v764
    %1685 = vmatpush.msra.mxu0 %v759
    %1686 = vmatmul.f32.gmra.mxu0 %v558
    %v1687 = vpop.f32.mrf.mxu0
    %v1688 = vadd.f32 %v1647, %v1687
    %1689 = vmatmul.f32.gmra.mxu0 %v563
    %v1690 = vpop.f32.mrf.mxu0
    %v1691 = vadd.f32 %v1650, %v1690
    %1692 = vmatmul.f32.gmra.mxu0 %v568
    %v1693 = vpop.f32.mrf.mxu0
    %v1694 = vadd.f32 %v1653, %v1693
    %1695 = vmatmul.f32.gmra.mxu0 %v573
    %v1696 = vpop.f32.mrf.mxu0
    %v1697 = vadd.f32 %v1656, %v1696
    %1698 = vmatmul.f32.gmra.mxu0 %v578
    %v1699 = vpop.f32.mrf.mxu0
    %v1700 = vadd.f32 %v1659, %v1699
    %1701 = vmatmul.f32.gmra.mxu0 %v583
    %v1702 = vpop.f32.mrf.mxu0
    %v1703 = vadd.f32 %v1662, %v1702
    %1704 = vmatmul.f32.gmra.mxu0 %v588
    %v1705 = vpop.f32.mrf.mxu0
    %v1706 = vadd.f32 %v1665, %v1705
    %1707 = vmatmul.f32.gmra.mxu0 %v593
    %v1708 = vpop.f32.mrf.mxu0
    %v1709 = vadd.f32 %v1668, %v1708
    %1710 = vdwg.mxu0
    %1711 = vmatpush.msra.mxu0 %v914
    %1712 = vmatpush.msra.mxu0 %v909
    %1713 = vmatpush.msra.mxu0 %v904
    %1714 = vmatpush.msra.mxu0 %v899
    %1715 = vmatpush.msra.mxu0 %v894
    %1716 = vmatpush.msra.mxu0 %v889
    %1717 = vmatpush.msra.mxu0 %v884
    %1718 = vmatpush.msra.mxu0 %v879
    %1719 = vmatpush.msra.mxu0 %v874
    %1720 = vmatpush.msra.mxu0 %v869
    %1721 = vmatpush.msra.mxu0 %v864
    %1722 = vmatpush.msra.mxu0 %v859
    %1723 = vmatpush.msra.mxu0 %v854
    %1724 = vmatpush.msra.mxu0 %v849
    %1725 = vmatpush.msra.mxu0 %v844
    %1726 = vmatpush.msra.mxu0 %v839
    %1727 = vmatmul.f32.gmra.mxu0 %v559
    %v1728 = vpop.f32.mrf.mxu0
    %v1729 = vadd.f32 %v1688, %v1728
    %1730 = vmatmul.f32.gmra.mxu0 %v564
    %v1731 = vpop.f32.mrf.mxu0
    %v1732 = vadd.f32 %v1691, %v1731
    %1733 = vmatmul.f32.gmra.mxu0 %v569
    %v1734 = vpop.f32.mrf.mxu0
    %v1735 = vadd.f32 %v1694, %v1734
    %1736 = vmatmul.f32.gmra.mxu0 %v574
    %v1737 = vpop.f32.mrf.mxu0
    %v1738 = vadd.f32 %v1697, %v1737
    %1739 = vmatmul.f32.gmra.mxu0 %v579
    %v1740 = vpop.f32.mrf.mxu0
    %v1741 = vadd.f32 %v1700, %v1740
    %1742 = vmatmul.f32.gmra.mxu0 %v584
    %v1743 = vpop.f32.mrf.mxu0
    %v1744 = vadd.f32 %v1703, %v1743
    %1745 = vmatmul.f32.gmra.mxu0 %v589
    %v1746 = vpop.f32.mrf.mxu0
    %v1747 = vadd.f32 %v1706, %v1746
    %1748 = vmatmul.f32.gmra.mxu0 %v594
    %v1749 = vpop.f32.mrf.mxu0
    %v1750 = vadd.f32 %v1709, %v1749
    %1751 = vdwg.mxu0
    %1752 = vmatpush.msra.mxu0 0.0
    %1753 = vmatpush.msra.mxu0 0.0
    %1754 = vmatpush.msra.mxu0 0.0
    %1755 = vmatpush.msra.mxu0 0.0
    %1756 = vmatpush.msra.mxu0 0.0
    %1757 = vmatpush.msra.mxu0 0.0
    %1758 = vmatpush.msra.mxu0 0.0
    %1759 = vmatpush.msra.mxu0 0.0
    %1760 = vmatpush.msra.mxu0 0.0
    %1761 = vmatpush.msra.mxu0 0.0
    %1762 = vmatpush.msra.mxu0 0.0
    %1763 = vmatpush.msra.mxu0 0.0
    %1764 = vmatpush.msra.mxu0 %v934
    %1765 = vmatpush.msra.mxu0 %v929
    %1766 = vmatpush.msra.mxu0 %v924
    %1767 = vmatpush.msra.mxu0 %v919
    %1768 = vmatmul.f32.gmra.mxu0 %v950
    %v1769 = vpop.f32.mrf.mxu0
    %v1770 = vadd.f32 %v1729, %v1769
    %1771 = vmatmul.f32.gmra.mxu0 %v953
    %v1772 = vpop.f32.mrf.mxu0
    %v1773 = vadd.f32 %v1732, %v1772
    %1774 = vmatmul.f32.gmra.mxu0 %v956
    %v1775 = vpop.f32.mrf.mxu0
    %v1776 = vadd.f32 %v1735, %v1775
    %1777 = vmatmul.f32.gmra.mxu0 %v959
    %v1778 = vpop.f32.mrf.mxu0
    %v1779 = vadd.f32 %v1738, %v1778
    %1780 = vmatmul.f32.gmra.mxu0 %v962
    %v1781 = vpop.f32.mrf.mxu0
    %v1782 = vadd.f32 %v1741, %v1781
    %1783 = vmatmul.f32.gmra.mxu0 %v965
    %v1784 = vpop.f32.mrf.mxu0
    %v1785 = vadd.f32 %v1744, %v1784
    %1786 = vmatmul.f32.gmra.mxu0 %v968
    %v1787 = vpop.f32.mrf.mxu0
    %v1788 = vadd.f32 %v1747, %v1787
    %1789 = vmatmul.f32.gmra.mxu0 %v971
    %v1790 = vpop.f32.mrf.mxu0
    %v1791 = vadd.f32 %v1750, %v1790
    %1792 = vdwg.mxu0
    %1793 = vmatpush.msra.mxu0 %v675
    %1794 = vmatpush.msra.mxu0 %v670
    %1795 = vmatpush.msra.mxu0 %v665
    %1796 = vmatpush.msra.mxu0 %v660
    %1797 = vmatpush.msra.mxu0 %v655
    %1798 = vmatpush.msra.mxu0 %v650
    %1799 = vmatpush.msra.mxu0 %v645
    %1800 = vmatpush.msra.mxu0 %v640
    %1801 = vmatpush.msra.mxu0 %v635
    %1802 = vmatpush.msra.mxu0 %v630
    %1803 = vmatpush.msra.mxu0 %v625
    %1804 = vmatpush.msra.mxu0 %v620
    %1805 = vmatpush.msra.mxu0 %v615
    %1806 = vmatpush.msra.mxu0 %v610
    %1807 = vmatpush.msra.mxu0 %v605
    %1808 = vmatpush.msra.mxu0 %v600
    %1809 = vmatmul.f32.gmra.mxu0 %v556
    %v1810 = vpop.f32.mrf.mxu0
    %v1811 = vadd.f32 %v942, %v1810
    %1812 = vmatmul.f32.gmra.mxu0 %v561
    %v1813 = vpop.f32.mrf.mxu0
    %v1814 = vadd.f32 %v942, %v1813
    %1815 = vmatmul.f32.gmra.mxu0 %v566
    %v1816 = vpop.f32.mrf.mxu0
    %v1817 = vadd.f32 %v942, %v1816
    %1818 = vmatmul.f32.gmra.mxu0 %v571
    %v1819 = vpop.f32.mrf.mxu0
    %v1820 = vadd.f32 %v942, %v1819
    %1821 = vmatmul.f32.gmra.mxu0 %v576
    %v1822 = vpop.f32.mrf.mxu0
    %v1823 = vadd.f32 %v942, %v1822
    %1824 = vmatmul.f32.gmra.mxu0 %v581
    %v1825 = vpop.f32.mrf.mxu0
    %v1826 = vadd.f32 %v942, %v1825
    %1827 = vmatmul.f32.gmra.mxu0 %v586
    %v1828 = vpop.f32.mrf.mxu0
    %v1829 = vadd.f32 %v942, %v1828
    %1830 = vmatmul.f32.gmra.mxu0 %v591
    %v1831 = vpop.f32.mrf.mxu0
    %v1832 = vadd.f32 %v942, %v1831
    %1833 = vdwg.mxu0
    %1834 = vmatpush.msra.mxu0 %v755
    %1835 = vmatpush.msra.mxu0 %v750
    %1836 = vmatpush.msra.mxu0 %v745
    %1837 = vmatpush.msra.mxu0 %v740
    %1838 = vmatpush.msra.mxu0 %v735
    %1839 = vmatpush.msra.mxu0 %v730
    %1840 = vmatpush.msra.mxu0 %v725
    %1841 = vmatpush.msra.mxu0 %v720
    %1842 = vmatpush.msra.mxu0 %v715
    %1843 = vmatpush.msra.mxu0 %v710
    %1844 = vmatpush.msra.mxu0 %v705
    %1845 = vmatpush.msra.mxu0 %v700
    %1846 = vmatpush.msra.mxu0 %v695
    %1847 = vmatpush.msra.mxu0 %v690
    %1848 = vmatpush.msra.mxu0 %v685
    %1849 = vmatpush.msra.mxu0 %v680
    %1850 = vmatmul.f32.gmra.mxu0 %v557
    %v1851 = vpop.f32.mrf.mxu0
    %v1852 = vadd.f32 %v1811, %v1851
    %1853 = vmatmul.f32.gmra.mxu0 %v562
    %v1854 = vpop.f32.mrf.mxu0
    %v1855 = vadd.f32 %v1814, %v1854
    %1856 = vmatmul.f32.gmra.mxu0 %v567
    %v1857 = vpop.f32.mrf.mxu0
    %v1858 = vadd.f32 %v1817, %v1857
    %1859 = vmatmul.f32.gmra.mxu0 %v572
    %v1860 = vpop.f32.mrf.mxu0
    %v1861 = vadd.f32 %v1820, %v1860
    %1862 = vmatmul.f32.gmra.mxu0 %v577
    %v1863 = vpop.f32.mrf.mxu0
    %v1864 = vadd.f32 %v1823, %v1863
    %1865 = vmatmul.f32.gmra.mxu0 %v582
    %v1866 = vpop.f32.mrf.mxu0
    %v1867 = vadd.f32 %v1826, %v1866
    %1868 = vmatmul.f32.gmra.mxu0 %v587
    %v1869 = vpop.f32.mrf.mxu0
    %v1870 = vadd.f32 %v1829, %v1869
    %1871 = vmatmul.f32.gmra.mxu0 %v592
    %v1872 = vpop.f32.mrf.mxu0
    %v1873 = vadd.f32 %v1832, %v1872
    %1874 = vdwg.mxu0
    %1875 = vmatpush.msra.mxu0 %v835
    %1876 = vmatpush.msra.mxu0 %v830
    %1877 = vmatpush.msra.mxu0 %v825
    %1878 = vmatpush.msra.mxu0 %v820
    %1879 = vmatpush.msra.mxu0 %v815
    %1880 = vmatpush.msra.mxu0 %v810
    %1881 = vmatpush.msra.mxu0 %v805
    %1882 = vmatpush.msra.mxu0 %v800
    %1883 = vmatpush.msra.mxu0 %v795
    %1884 = vmatpush.msra.mxu0 %v790
    %1885 = vmatpush.msra.mxu0 %v785
    %1886 = vmatpush.msra.mxu0 %v780
    %1887 = vmatpush.msra.mxu0 %v775
    %1888 = vmatpush.msra.mxu0 %v770
    %1889 = vmatpush.msra.mxu0 %v765
    %1890 = vmatpush.msra.mxu0 %v760
    %1891 = vmatmul.f32.gmra.mxu0 %v558
    %v1892 = vpop.f32.mrf.mxu0
    %v1893 = vadd.f32 %v1852, %v1892
    %1894 = vmatmul.f32.gmra.mxu0 %v563
    %v1895 = vpop.f32.mrf.mxu0
    %v1896 = vadd.f32 %v1855, %v1895
    %1897 = vmatmul.f32.gmra.mxu0 %v568
    %v1898 = vpop.f32.mrf.mxu0
    %v1899 = vadd.f32 %v1858, %v1898
    %1900 = vmatmul.f32.gmra.mxu0 %v573
    %v1901 = vpop.f32.mrf.mxu0
    %v1902 = vadd.f32 %v1861, %v1901
    %1903 = vmatmul.f32.gmra.mxu0 %v578
    %v1904 = vpop.f32.mrf.mxu0
    %v1905 = vadd.f32 %v1864, %v1904
    %1906 = vmatmul.f32.gmra.mxu0 %v583
    %v1907 = vpop.f32.mrf.mxu0
    %v1908 = vadd.f32 %v1867, %v1907
    %1909 = vmatmul.f32.gmra.mxu0 %v588
    %v1910 = vpop.f32.mrf.mxu0
    %v1911 = vadd.f32 %v1870, %v1910
    %1912 = vmatmul.f32.gmra.mxu0 %v593
    %v1913 = vpop.f32.mrf.mxu0
    %v1914 = vadd.f32 %v1873, %v1913
    %1915 = vdwg.mxu0
    %1916 = vmatpush.msra.mxu0 %v915
    %1917 = vmatpush.msra.mxu0 %v910
    %1918 = vmatpush.msra.mxu0 %v905
    %1919 = vmatpush.msra.mxu0 %v900
    %1920 = vmatpush.msra.mxu0 %v895
    %1921 = vmatpush.msra.mxu0 %v890
    %1922 = vmatpush.msra.mxu0 %v885
    %1923 = vmatpush.msra.mxu0 %v880
    %1924 = vmatpush.msra.mxu0 %v875
    %1925 = vmatpush.msra.mxu0 %v870
    %1926 = vmatpush.msra.mxu0 %v865
    %1927 = vmatpush.msra.mxu0 %v860
    %1928 = vmatpush.msra.mxu0 %v855
    %1929 = vmatpush.msra.mxu0 %v850
    %1930 = vmatpush.msra.mxu0 %v845
    %1931 = vmatpush.msra.mxu0 %v840
    %1932 = vmatmul.f32.gmra.mxu0 %v559
    %v1933 = vpop.f32.mrf.mxu0
    %v1934 = vadd.f32 %v1893, %v1933
    %1935 = vmatmul.f32.gmra.mxu0 %v564
    %v1936 = vpop.f32.mrf.mxu0
    %v1937 = vadd.f32 %v1896, %v1936
    %1938 = vmatmul.f32.gmra.mxu0 %v569
    %v1939 = vpop.f32.mrf.mxu0
    %v1940 = vadd.f32 %v1899, %v1939
    %1941 = vmatmul.f32.gmra.mxu0 %v574
    %v1942 = vpop.f32.mrf.mxu0
    %v1943 = vadd.f32 %v1902, %v1942
    %1944 = vmatmul.f32.gmra.mxu0 %v579
    %v1945 = vpop.f32.mrf.mxu0
    %v1946 = vadd.f32 %v1905, %v1945
    %1947 = vmatmul.f32.gmra.mxu0 %v584
    %v1948 = vpop.f32.mrf.mxu0
    %v1949 = vadd.f32 %v1908, %v1948
    %1950 = vmatmul.f32.gmra.mxu0 %v589
    %v1951 = vpop.f32.mrf.mxu0
    %v1952 = vadd.f32 %v1911, %v1951
    %1953 = vmatmul.f32.gmra.mxu0 %v594
    %v1954 = vpop.f32.mrf.mxu0
    %v1955 = vadd.f32 %v1914, %v1954
    %1956 = vdwg.mxu0
    %1957 = vmatpush.msra.mxu0 0.0
    %1958 = vmatpush.msra.mxu0 0.0
    %1959 = vmatpush.msra.mxu0 0.0
    %1960 = vmatpush.msra.mxu0 0.0
    %1961 = vmatpush.msra.mxu0 0.0
    %1962 = vmatpush.msra.mxu0 0.0
    %1963 = vmatpush.msra.mxu0 0.0
    %1964 = vmatpush.msra.mxu0 0.0
    %1965 = vmatpush.msra.mxu0 0.0
    %1966 = vmatpush.msra.mxu0 0.0
    %1967 = vmatpush.msra.mxu0 0.0
    %1968 = vmatpush.msra.mxu0 0.0
    %1969 = vmatpush.msra.mxu0 %v935
    %1970 = vmatpush.msra.mxu0 %v930
    %1971 = vmatpush.msra.mxu0 %v925
    %1972 = vmatpush.msra.mxu0 %v920
    %1973 = vmatmul.f32.gmra.mxu0 %v950
    %v1974 = vpop.f32.mrf.mxu0
    %v1975 = vadd.f32 %v1934, %v1974
    %1976 = vmatmul.f32.gmra.mxu0 %v953
    %v1977 = vpop.f32.mrf.mxu0
    %v1978 = vadd.f32 %v1937, %v1977
    %1979 = vmatmul.f32.gmra.mxu0 %v956
    %v1980 = vpop.f32.mrf.mxu0
    %v1981 = vadd.f32 %v1940, %v1980
    %1982 = vmatmul.f32.gmra.mxu0 %v959
    %v1983 = vpop.f32.mrf.mxu0
    %v1984 = vadd.f32 %v1943, %v1983
    %1985 = vmatmul.f32.gmra.mxu0 %v962
    %v1986 = vpop.f32.mrf.mxu0
    %v1987 = vadd.f32 %v1946, %v1986
    %1988 = vmatmul.f32.gmra.mxu0 %v965
    %v1989 = vpop.f32.mrf.mxu0
    %v1990 = vadd.f32 %v1949, %v1989
    %1991 = vmatmul.f32.gmra.mxu0 %v968
    %v1992 = vpop.f32.mrf.mxu0
    %v1993 = vadd.f32 %v1952, %v1992
    %1994 = vmatmul.f32.gmra.mxu0 %v971
    %v1995 = vpop.f32.mrf.mxu0
    %v1996 = vadd.f32 %v1955, %v1995
    %1997 = vdwg.mxu0
    %v1998 = vmax.f32 %v1155, 0.0
    %v1999 = vmax.f32 %v1360, 0.0
    %v2000 = vmax.f32 %v1565, 0.0
    %v2001 = vmax.f32 %v1770, 0.0
    %v2002 = vmax.f32 %v1975, 0.0
    %v2003 = vmax.f32 %v1158, 0.0
    %v2004 = vmax.f32 %v1363, 0.0
    %v2005 = vmax.f32 %v1568, 0.0
    %v2006 = vmax.f32 %v1773, 0.0
    %v2007 = vmax.f32 %v1978, 0.0
    %v2008 = vmax.f32 %v1161, 0.0
    %v2009 = vmax.f32 %v1366, 0.0
    %v2010 = vmax.f32 %v1571, 0.0
    %v2011 = vmax.f32 %v1776, 0.0
    %v2012 = vmax.f32 %v1981, 0.0
    %v2013 = vmax.f32 %v1164, 0.0
    %v2014 = vmax.f32 %v1369, 0.0
    %v2015 = vmax.f32 %v1574, 0.0
    %v2016 = vmax.f32 %v1779, 0.0
    %v2017 = vmax.f32 %v1984, 0.0
    %v2018 = vmax.f32 %v1167, 0.0
    %v2019 = vmax.f32 %v1372, 0.0
    %v2020 = vmax.f32 %v1577, 0.0
    %v2021 = vmax.f32 %v1782, 0.0
    %v2022 = vmax.f32 %v1987, 0.0
    %v2023 = vmax.f32 %v1170, 0.0
    %v2024 = vmax.f32 %v1375, 0.0
    %v2025 = vmax.f32 %v1580, 0.0
    %v2026 = vmax.f32 %v1785, 0.0
    %v2027 = vmax.f32 %v1990, 0.0
    %v2028 = vmax.f32 %v1173, 0.0
    %v2029 = vmax.f32 %v1378, 0.0
    %v2030 = vmax.f32 %v1583, 0.0
    %v2031 = vmax.f32 %v1788, 0.0
    %v2032 = vmax.f32 %v1993, 0.0
    %v2033 = vmax.f32 %v1176, 0.0
    %v2034 = vmax.f32 %v1381, 0.0
    %v2035 = vmax.f32 %v1586, 0.0
    %v2036 = vmax.f32 %v1791, 0.0
    %v2037 = vmax.f32 %v1996, 0.0
    %v2038 = vld [vmem:[%s1] sm:$0xff]
    %v2039 = vld [vmem:[%s1 + $0x8] sm:$0xff]
    %v2040 = vld [vmem:[%s1 + $0x10] sm:$0xff]
    %v2041 = vld [vmem:[%s1 + $0x18] sm:$0xff]
    %v2042 = vld [vmem:[%s1 + $0x20] sm:$0xff]
    %v2043 = vld [vmem:[%s1 + $0x28] sm:$0xff]
    %v2044 = vld [vmem:[%s1 + $0x30] sm:$0xff]
    %v2045 = vld [vmem:[%s1 + $0x38] sm:$0xff]
    %v2046 = vld [vmem:[#allocation17] sm:$0x3]
    %2048 = vset.pattern.permute.xlu0 0
    %2049 = vperm.xlu0 %2048, %v2038
    %v2050 = vpop.permute.xlu0 %2049
    %2053 = vset.pattern.permute.xlu0 0
    %2054 = vperm.xlu0 %2053, %v2039
    %v2055 = vpop.permute.xlu0 %2054
    %2058 = vset.pattern.permute.xlu0 0
    %2059 = vperm.xlu0 %2058, %v2040
    %v2060 = vpop.permute.xlu0 %2059
    %2063 = vset.pattern.permute.xlu0 0
    %2064 = vperm.xlu0 %2063, %v2041
    %v2065 = vpop.permute.xlu0 %2064
    %2068 = vset.pattern.permute.xlu0 0
    %2069 = vperm.xlu0 %2068, %v2042
    %v2070 = vpop.permute.xlu0 %2069
    %2073 = vset.pattern.permute.xlu0 0
    %2074 = vperm.xlu0 %2073, %v2043
    %v2075 = vpop.permute.xlu0 %2074
    %2078 = vset.pattern.permute.xlu0 0
    %2079 = vperm.xlu0 %2078, %v2044
    %v2080 = vpop.permute.xlu0 %2079
    %2083 = vset.pattern.permute.xlu0 0
    %2084 = vperm.xlu0 %2083, %v2045
    %v2085 = vpop.permute.xlu0 %2084
    %v2087 = vperm.slane %v2046, 0
    %v2088 = vmul.f32 %v2050, %v2087
    %v2089 = vmul.f32 %v2055, %v2087
    %v2090 = vmul.f32 %v2060, %v2087
    %v2091 = vmul.f32 %v2065, %v2087
    %v2092 = vmul.f32 %v2070, %v2087
    %v2093 = vmul.f32 %v2075, %v2087
    %v2094 = vmul.f32 %v2080, %v2087
    %v2095 = vmul.f32 %v2085, %v2087
    %2096 = vset.pattern.permute.xlu0 1
    %2097 = vperm.xlu0 %2096, %v2038
    %v2098 = vpop.permute.xlu0 %2097
    %2100 = vset.pattern.permute.xlu0 1
    %2101 = vperm.xlu0 %2100, %v2039
    %v2102 = vpop.permute.xlu0 %2101
    %2104 = vset.pattern.permute.xlu0 1
    %2105 = vperm.xlu0 %2104, %v2040
    %v2106 = vpop.permute.xlu0 %2105
    %2108 = vset.pattern.permute.xlu0 1
    %2109 = vperm.xlu0 %2108, %v2041
    %v2110 = vpop.permute.xlu0 %2109
    %2112 = vset.pattern.permute.xlu0 1
    %2113 = vperm.xlu0 %2112, %v2042
    %v2114 = vpop.permute.xlu0 %2113
    %2116 = vset.pattern.permute.xlu0 1
    %2117 = vperm.xlu0 %2116, %v2043
    %v2118 = vpop.permute.xlu0 %2117
    %2120 = vset.pattern.permute.xlu0 1
    %2121 = vperm.xlu0 %2120, %v2044
    %v2122 = vpop.permute.xlu0 %2121
    %2124 = vset.pattern.permute.xlu0 1
    %2125 = vperm.xlu0 %2124, %v2045
    %v2126 = vpop.permute.xlu0 %2125
    %v2128 = vperm.slane %v2046, 1
    %v2129 = vmul.f32 %v2098, %v2128
    %v2130 = vmul.f32 %v2102, %v2128
    %v2131 = vmul.f32 %v2106, %v2128
    %v2132 = vmul.f32 %v2110, %v2128
    %v2133 = vmul.f32 %v2114, %v2128
    %v2134 = vmul.f32 %v2118, %v2128
    %v2135 = vmul.f32 %v2122, %v2128
    %v2136 = vmul.f32 %v2126, %v2128
    %v2137 = vadd.f32 %v2088, %v2129
    %v2138 = vadd.f32 %v2089, %v2130
    %v2139 = vadd.f32 %v2090, %v2131
    %v2140 = vadd.f32 %v2091, %v2132
    %v2141 = vadd.f32 %v2092, %v2133
    %v2142 = vadd.f32 %v2093, %v2134
    %v2143 = vadd.f32 %v2094, %v2135
    %v2144 = vadd.f32 %v2095, %v2136
    %v2145 = vld [vmem:[#allocation18] sm:$0x1]
    %v2147 = vperm.slane %v2145, 0
    %v2149 = vadd.f32 %v2137, %v2147
    %v2150 = vadd.f32 %v2138, %v2147
    %v2151 = vadd.f32 %v2139, %v2147
    %v2152 = vadd.f32 %v2140, %v2147
    %v2153 = vadd.f32 %v2141, %v2147
    %v2154 = vadd.f32 %v2142, %v2147
    %v2155 = vadd.f32 %v2143, %v2147
    %v2156 = vadd.f32 %v2144, %v2147
    %v2157 = vmax.f32 %v2149, 0.0
    %v2158 = vmax.f32 %v2150, 0.0
    %v2159 = vmax.f32 %v2151, 0.0
    %v2160 = vmax.f32 %v2152, 0.0
    %v2161 = vmax.f32 %v2153, 0.0
    %v2162 = vmax.f32 %v2154, 0.0
    %v2163 = vmax.f32 %v2155, 0.0
    %v2164 = vmax.f32 %v2156, 0.0
    %v2165 = vld [vmem:[#allocation12] sm:$0xff]
    %v2166 = vld [vmem:[#allocation12 + $0x8] sm:$0xff]
    %v2167 = vld [vmem:[#allocation12 + $0x10] sm:$0xff]
    %v2168 = vld [vmem:[#allocation12 + $0x18] sm:$0xff]
    %v2169 = vld [vmem:[#allocation12 + $0x20] sm:$0xff]
    %v2170 = vld [vmem:[#allocation12 + $0x28] sm:$0xff]
    %v2171 = vld [vmem:[#allocation12 + $0x30] sm:$0xff]
    %v2172 = vld [vmem:[#allocation12 + $0x38] sm:$0xff]
    %v2173 = vld [vmem:[#allocation12 + $0x40] sm:$0xff]
    %v2174 = vld [vmem:[#allocation12 + $0x48] sm:$0xff]
    %v2175 = vld [vmem:[#allocation12 + $0x50] sm:$0xff]
    %v2176 = vld [vmem:[#allocation12 + $0x58] sm:$0xff]
    %v2177 = vld [vmem:[#allocation12 + $0x60] sm:$0xff]
    %v2178 = vld [vmem:[#allocation12 + $0x68] sm:$0xff]
    %v2179 = vld [vmem:[#allocation12 + $0x70] sm:$0xff]
    %v2180 = vld [vmem:[#allocation12 + $0x78] sm:$0xff]
    %v2181 = vld [vmem:[#allocation12 + $0x80] sm:$0xff]
    %v2182 = vld [vmem:[#allocation12 + $0x88] sm:$0xff]
    %v2183 = vld [vmem:[#allocation12 + $0x90] sm:$0xff]
    %v2184 = vld [vmem:[#allocation12 + $0x98] sm:$0xff]
    %v2185 = vld [vmem:[#allocation12 + $0xa0] sm:$0xff]
    %v2186 = vld [vmem:[#allocation12 + $0xa8] sm:$0xff]
    %v2187 = vld [vmem:[#allocation12 + $0xb0] sm:$0xff]
    %v2188 = vld [vmem:[#allocation12 + $0xb8] sm:$0xff]
    %v2189 = vld [vmem:[#allocation12 + $0xc0] sm:$0xff]
    %v2190 = vld [vmem:[#allocation12 + $0xc8] sm:$0xff]
    %v2191 = vld [vmem:[#allocation12 + $0xd0] sm:$0xff]
    %v2192 = vld [vmem:[#allocation12 + $0xd8] sm:$0xff]
    %v2193 = vld [vmem:[#allocation12 + $0xe0] sm:$0xff]
    %v2194 = vld [vmem:[#allocation12 + $0xe8] sm:$0xff]
    %v2195 = vld [vmem:[#allocation12 + $0xf0] sm:$0xff]
    %v2196 = vld [vmem:[#allocation12 + $0xf8] sm:$0xff]
    %v2197 = vld [vmem:[#allocation12 + $0x100] sm:$0xff]
    %v2198 = vld [vmem:[#allocation12 + $0x108] sm:$0xff]
    %v2199 = vld [vmem:[#allocation12 + $0x110] sm:$0xff]
    %v2200 = vld [vmem:[#allocation12 + $0x118] sm:$0xff]
    %v2201 = vld [vmem:[#allocation12 + $0x120] sm:$0xff]
    %v2202 = vld [vmem:[#allocation12 + $0x128] sm:$0xff]
    %v2203 = vld [vmem:[#allocation12 + $0x130] sm:$0xff]
    %v2204 = vld [vmem:[#allocation12 + $0x138] sm:$0xff]
    %v2205 = vld [vmem:[#allocation12 + $0x140] sm:$0xff]
    %v2206 = vld [vmem:[#allocation12 + $0x148] sm:$0xff]
    %v2207 = vld [vmem:[#allocation12 + $0x150] sm:$0xff]
    %v2208 = vld [vmem:[#allocation12 + $0x158] sm:$0xff]
    %v2209 = vld [vmem:[#allocation12 + $0x160] sm:$0xff]
    %v2210 = vld [vmem:[#allocation12 + $0x168] sm:$0xff]
    %v2211 = vld [vmem:[#allocation12 + $0x170] sm:$0xff]
    %v2212 = vld [vmem:[#allocation12 + $0x178] sm:$0xff]
    %v2213 = vld [vmem:[#allocation12 + $0x180] sm:$0xff]
    %v2214 = vld [vmem:[#allocation12 + $0x188] sm:$0xff]
    %v2215 = vld [vmem:[#allocation12 + $0x190] sm:$0xff]
    %v2216 = vld [vmem:[#allocation12 + $0x198] sm:$0xff]
    %v2217 = vld [vmem:[#allocation12 + $0x1a0] sm:$0xff]
    %v2218 = vld [vmem:[#allocation12 + $0x1a8] sm:$0xff]
    %v2219 = vld [vmem:[#allocation12 + $0x1b0] sm:$0xff]
    %v2220 = vld [vmem:[#allocation12 + $0x1b8] sm:$0xff]
    %v2221 = vld [vmem:[#allocation12 + $0x1c0] sm:$0xff]
    %v2222 = vld [vmem:[#allocation12 + $0x1c8] sm:$0xff]
    %v2223 = vld [vmem:[#allocation12 + $0x1d0] sm:$0xff]
    %v2224 = vld [vmem:[#allocation12 + $0x1d8] sm:$0xff]
    %v2225 = vld [vmem:[#allocation12 + $0x1e0] sm:$0xff]
    %v2226 = vld [vmem:[#allocation12 + $0x1e8] sm:$0xff]
    %v2227 = vld [vmem:[#allocation12 + $0x1f0] sm:$0xff]
    %v2228 = vld [vmem:[#allocation12 + $0x1f8] sm:$0xff]
    %v2229 = vld [vmem:[#allocation12 + $0x200] sm:$0xff]
    %v2230 = vld [vmem:[#allocation12 + $0x208] sm:$0xff]
    %v2231 = vld [vmem:[#allocation12 + $0x210] sm:$0xff]
    %v2232 = vld [vmem:[#allocation12 + $0x218] sm:$0xff]
    %v2233 = vld [vmem:[#allocation12 + $0x220] sm:$0xff]
    %v2234 = vld [vmem:[#allocation12 + $0x228] sm:$0xff]
    %v2235 = vld [vmem:[#allocation12 + $0x230] sm:$0xff]
    %v2236 = vld [vmem:[#allocation12 + $0x238] sm:$0xff]
    %v2237 = vld [vmem:[#allocation12 + $0x240] sm:$0xff]
    %v2238 = vld [vmem:[#allocation12 + $0x248] sm:$0xff]
    %v2239 = vld [vmem:[#allocation12 + $0x250] sm:$0xff]
    %v2240 = vld [vmem:[#allocation12 + $0x258] sm:$0xff]
    %v2241 = vld [vmem:[#allocation12 + $0x260] sm:$0xff]
    %v2242 = vld [vmem:[#allocation12 + $0x268] sm:$0xff]
    %v2243 = vld [vmem:[#allocation12 + $0x270] sm:$0xff]
    %v2244 = vld [vmem:[#allocation12 + $0x278] sm:$0xff]
    %v2245 = vld [vmem:[#allocation12 + $0x280] sm:$0xff]
    %v2246 = vld [vmem:[#allocation12 + $0x288] sm:$0xff]
    %v2247 = vld [vmem:[#allocation12 + $0x290] sm:$0xff]
    %v2248 = vld [vmem:[#allocation12 + $0x298] sm:$0xff]
    %v2249 = vld [vmem:[#allocation12 + $0x2a0] sm:$0xff]
    %v2250 = vld [vmem:[#allocation12 + $0x2a8] sm:$0xff]
    %v2251 = vld [vmem:[#allocation12 + $0x2b0] sm:$0xff]
    %v2252 = vld [vmem:[#allocation12 + $0x2b8] sm:$0xff]
    %v2253 = vld [vmem:[#allocation12 + $0x2c0] sm:$0xff]
    %v2254 = vld [vmem:[#allocation12 + $0x2c8] sm:$0xff]
    %v2255 = vld [vmem:[#allocation12 + $0x2d0] sm:$0xff]
    %v2256 = vld [vmem:[#allocation12 + $0x2d8] sm:$0xff]
    %v2257 = vld [vmem:[#allocation12 + $0x2e0] sm:$0xff]
    %v2258 = vld [vmem:[#allocation12 + $0x2e8] sm:$0xff]
    %v2259 = vld [vmem:[#allocation12 + $0x2f0] sm:$0xff]
    %v2260 = vld [vmem:[#allocation12 + $0x2f8] sm:$0xff]
    %v2261 = vld [vmem:[#allocation12 + $0x300] sm:$0xff]
    %v2262 = vld [vmem:[#allocation12 + $0x308] sm:$0xff]
    %v2263 = vld [vmem:[#allocation12 + $0x310] sm:$0xff]
    %v2264 = vld [vmem:[#allocation12 + $0x318] sm:$0xff]
    %v2265 = vld [vmem:[#allocation12 + $0x320] sm:$0xff]
    %v2266 = vld [vmem:[#allocation12 + $0x328] sm:$0xff]
    %v2267 = vld [vmem:[#allocation12 + $0x330] sm:$0xff]
    %v2268 = vld [vmem:[#allocation12 + $0x338] sm:$0xff]
    %v2269 = vld [vmem:[#allocation12 + $0x340] sm:$0xff]
    %v2270 = vld [vmem:[#allocation12 + $0x348] sm:$0xff]
    %v2271 = vld [vmem:[#allocation12 + $0x350] sm:$0xff]
    %v2272 = vld [vmem:[#allocation12 + $0x358] sm:$0xff]
    %v2273 = vld [vmem:[#allocation12 + $0x360] sm:$0xff]
    %v2274 = vld [vmem:[#allocation12 + $0x368] sm:$0xff]
    %v2275 = vld [vmem:[#allocation12 + $0x370] sm:$0xff]
    %v2276 = vld [vmem:[#allocation12 + $0x378] sm:$0xff]
    %v2277 = vld [vmem:[#allocation12 + $0x380] sm:$0xff]
    %v2278 = vld [vmem:[#allocation12 + $0x388] sm:$0xff]
    %v2279 = vld [vmem:[#allocation12 + $0x390] sm:$0xff]
    %v2280 = vld [vmem:[#allocation12 + $0x398] sm:$0xff]
    %v2281 = vld [vmem:[#allocation12 + $0x3a0] sm:$0xff]
    %v2282 = vld [vmem:[#allocation12 + $0x3a8] sm:$0xff]
    %v2283 = vld [vmem:[#allocation12 + $0x3b0] sm:$0xff]
    %v2284 = vld [vmem:[#allocation12 + $0x3b8] sm:$0xff]
    %v2285 = vld [vmem:[#allocation12 + $0x3c0] sm:$0xff]
    %v2286 = vld [vmem:[#allocation12 + $0x3c8] sm:$0xff]
    %v2287 = vld [vmem:[#allocation12 + $0x3d0] sm:$0xff]
    %v2288 = vld [vmem:[#allocation12 + $0x3d8] sm:$0xff]
    %v2289 = vld [vmem:[#allocation12 + $0x3e0] sm:$0xff]
    %v2290 = vld [vmem:[#allocation12 + $0x3e8] sm:$0xff]
    %v2291 = vld [vmem:[#allocation12 + $0x3f0] sm:$0xff]
    %v2292 = vld [vmem:[#allocation12 + $0x3f8] sm:$0xff]
    %v2293 = vld [vmem:[#allocation12 + $0x400] sm:$0xff]
    %v2294 = vld [vmem:[#allocation12 + $0x408] sm:$0xff]
    %v2295 = vld [vmem:[#allocation12 + $0x410] sm:$0xff]
    %v2296 = vld [vmem:[#allocation12 + $0x418] sm:$0xff]
    %v2297 = vld [vmem:[#allocation12 + $0x420] sm:$0xff]
    %v2298 = vld [vmem:[#allocation12 + $0x428] sm:$0xff]
    %v2299 = vld [vmem:[#allocation12 + $0x430] sm:$0xff]
    %v2300 = vld [vmem:[#allocation12 + $0x438] sm:$0xff]
    %v2301 = vld [vmem:[#allocation12 + $0x440] sm:$0xff]
    %v2302 = vld [vmem:[#allocation12 + $0x448] sm:$0xff]
    %v2303 = vld [vmem:[#allocation12 + $0x450] sm:$0xff]
    %v2304 = vld [vmem:[#allocation12 + $0x458] sm:$0xff]
    %v2305 = vld [vmem:[#allocation12 + $0x460] sm:$0xff]
    %v2306 = vld [vmem:[#allocation12 + $0x468] sm:$0xff]
    %v2307 = vld [vmem:[#allocation12 + $0x470] sm:$0xff]
    %v2308 = vld [vmem:[#allocation12 + $0x478] sm:$0xff]
    %v2309 = vld [vmem:[#allocation12 + $0x480] sm:$0xff]
    %v2310 = vld [vmem:[#allocation12 + $0x488] sm:$0xff]
    %v2311 = vld [vmem:[#allocation12 + $0x490] sm:$0xff]
    %v2312 = vld [vmem:[#allocation12 + $0x498] sm:$0xff]
    %v2313 = vld [vmem:[#allocation12 + $0x4a0] sm:$0xff]
    %v2314 = vld [vmem:[#allocation12 + $0x4a8] sm:$0xff]
    %v2315 = vld [vmem:[#allocation12 + $0x4b0] sm:$0xff]
    %v2316 = vld [vmem:[#allocation12 + $0x4b8] sm:$0xff]
    %v2317 = vld [vmem:[#allocation12 + $0x4c0] sm:$0xff]
    %v2318 = vld [vmem:[#allocation12 + $0x4c8] sm:$0xff]
    %v2319 = vld [vmem:[#allocation12 + $0x4d0] sm:$0xff]
    %v2320 = vld [vmem:[#allocation12 + $0x4d8] sm:$0xff]
    %v2321 = vld [vmem:[#allocation12 + $0x4e0] sm:$0xff]
    %v2322 = vld [vmem:[#allocation12 + $0x4e8] sm:$0xff]
    %v2323 = vld [vmem:[#allocation12 + $0x4f0] sm:$0xff]
    %v2324 = vld [vmem:[#allocation12 + $0x4f8] sm:$0xff]
    %v2325 = vld [vmem:[#allocation12 + $0x500] sm:$0xff]
    %v2326 = vld [vmem:[#allocation12 + $0x508] sm:$0xff]
    %v2327 = vld [vmem:[#allocation12 + $0x510] sm:$0xff]
    %v2328 = vld [vmem:[#allocation12 + $0x518] sm:$0xff]
    %v2329 = vld [vmem:[#allocation12 + $0x520] sm:$0xff]
    %v2330 = vld [vmem:[#allocation12 + $0x528] sm:$0xff]
    %v2331 = vld [vmem:[#allocation12 + $0x530] sm:$0xff]
    %v2332 = vld [vmem:[#allocation12 + $0x538] sm:$0xff]
    %v2333 = vld [vmem:[#allocation12 + $0x540] sm:$0xff]
    %v2334 = vld [vmem:[#allocation12 + $0x548] sm:$0xff]
    %v2335 = vld [vmem:[#allocation12 + $0x550] sm:$0xff]
    %v2336 = vld [vmem:[#allocation12 + $0x558] sm:$0xff]
    %v2337 = vld [vmem:[#allocation12 + $0x560] sm:$0xff]
    %v2338 = vld [vmem:[#allocation12 + $0x568] sm:$0xff]
    %v2339 = vld [vmem:[#allocation12 + $0x570] sm:$0xff]
    %v2340 = vld [vmem:[#allocation12 + $0x578] sm:$0xff]
    %v2341 = vld [vmem:[#allocation12 + $0x580] sm:$0xff]
    %v2342 = vld [vmem:[#allocation12 + $0x588] sm:$0xff]
    %v2343 = vld [vmem:[#allocation12 + $0x590] sm:$0xff]
    %v2344 = vld [vmem:[#allocation12 + $0x598] sm:$0xff]
    %v2345 = vld [vmem:[#allocation12 + $0x5a0] sm:$0xff]
    %v2346 = vld [vmem:[#allocation12 + $0x5a8] sm:$0xff]
    %v2347 = vld [vmem:[#allocation12 + $0x5b0] sm:$0xff]
    %v2348 = vld [vmem:[#allocation12 + $0x5b8] sm:$0xff]
    %v2349 = vld [vmem:[#allocation12 + $0x5c0] sm:$0xff]
    %v2350 = vld [vmem:[#allocation12 + $0x5c8] sm:$0xff]
    %v2351 = vld [vmem:[#allocation12 + $0x5d0] sm:$0xff]
    %v2352 = vld [vmem:[#allocation12 + $0x5d8] sm:$0xff]
    %v2353 = vld [vmem:[#allocation12 + $0x5e0] sm:$0xff]
    %v2354 = vld [vmem:[#allocation12 + $0x5e8] sm:$0xff]
    %v2355 = vld [vmem:[#allocation12 + $0x5f0] sm:$0xff]
    %v2356 = vld [vmem:[#allocation12 + $0x5f8] sm:$0xff]
    %v2357 = vld [vmem:[#allocation12 + $0x600] sm:$0xff]
    %v2358 = vld [vmem:[#allocation12 + $0x608] sm:$0xff]
    %v2359 = vld [vmem:[#allocation12 + $0x610] sm:$0xff]
    %v2360 = vld [vmem:[#allocation12 + $0x618] sm:$0xff]
    %v2361 = vld [vmem:[#allocation12 + $0x620] sm:$0xff]
    %v2362 = vld [vmem:[#allocation12 + $0x628] sm:$0xff]
    %v2363 = vld [vmem:[#allocation12 + $0x630] sm:$0xff]
    %v2364 = vld [vmem:[#allocation12 + $0x638] sm:$0xff]
    %v2365 = vld [vmem:[#allocation12 + $0x640] sm:$0xff]
    %v2366 = vld [vmem:[#allocation12 + $0x648] sm:$0xff]
    %v2367 = vld [vmem:[#allocation12 + $0x650] sm:$0xff]
    %v2368 = vld [vmem:[#allocation12 + $0x658] sm:$0xff]
    %v2369 = vld [vmem:[#allocation14] sm:$0xff]
    %v2370 = vld [vmem:[#allocation14 + $0x8] sm:$0xff]
    %v2371 = vld [vmem:[#allocation14 + $0x10] sm:$0xff]
    %v2372 = vld [vmem:[#allocation14 + $0x18] sm:$0xff]
    %v2373 = vld [vmem:[#allocation14 + $0x20] sm:$0xff]
    %v2374 = vld [vmem:[#allocation14 + $0x28] sm:$0xff]
    %v2375 = vld [vmem:[#allocation14 + $0x30] sm:$0xff]
    %v2376 = vld [vmem:[#allocation14 + $0x38] sm:$0xff]
    %v2377 = vld [vmem:[#allocation14 + $0x40] sm:$0xff]
    %v2378 = vld [vmem:[#allocation14 + $0x48] sm:$0xff]
    %v2379 = vld [vmem:[#allocation14 + $0x50] sm:$0xff]
    %v2380 = vld [vmem:[#allocation14 + $0x58] sm:$0xff]
    %v2382 = vsel %vm948, %v2157, 0
    %v2385 = vsel %vm948, %v2158, 0
    %v2388 = vsel %vm948, %v2159, 0
    %v2391 = vsel %vm948, %v2160, 0
    %v2394 = vsel %vm948, %v2161, 0
    %v2397 = vsel %vm948, %v2162, 0
    %v2400 = vsel %vm948, %v2163, 0
    %v2403 = vsel %vm948, %v2164, 0
    %2405 = vmatpush.msra.mxu0 0.0
    %2406 = vmatpush.msra.mxu0 0.0
    %2407 = vmatpush.msra.mxu0 0.0
    %2408 = vmatpush.msra.mxu0 0.0
    %2409 = vmatpush.msra.mxu0 0.0
    %2410 = vmatpush.msra.mxu0 0.0
    %2411 = vmatpush.msra.mxu0 0.0
    %2412 = vmatpush.msra.mxu0 0.0
    %2413 = vmatpush.msra.mxu0 0.0
    %2414 = vmatpush.msra.mxu0 0.0
    %2415 = vmatpush.msra.mxu0 0.0
    %2416 = vmatpush.msra.mxu0 0.0
    %2417 = vmatpush.msra.mxu0 %v2378
    %2418 = vmatpush.msra.mxu0 %v2375
    %2419 = vmatpush.msra.mxu0 %v2372
    %2420 = vmatpush.msra.mxu0 %v2369
    %2421 = vmatmul.f32.gmra.mxu0 %v2382
    %v2422 = vpop.f32.mrf.mxu0
    %v2423 = vadd.f32 0.0, %v2422
    %2424 = vmatmul.f32.gmra.mxu0 %v2385
    %v2425 = vpop.f32.mrf.mxu0
    %v2426 = vadd.f32 0.0, %v2425
    %2427 = vmatmul.f32.gmra.mxu0 %v2388
    %v2428 = vpop.f32.mrf.mxu0
    %v2429 = vadd.f32 0.0, %v2428
    %2430 = vmatmul.f32.gmra.mxu0 %v2391
    %v2431 = vpop.f32.mrf.mxu0
    %v2432 = vadd.f32 0.0, %v2431
    %2433 = vmatmul.f32.gmra.mxu0 %v2394
    %v2434 = vpop.f32.mrf.mxu0
    %v2435 = vadd.f32 0.0, %v2434
    %2436 = vmatmul.f32.gmra.mxu0 %v2397
    %v2437 = vpop.f32.mrf.mxu0
    %v2438 = vadd.f32 0.0, %v2437
    %2439 = vmatmul.f32.gmra.mxu0 %v2400
    %v2440 = vpop.f32.mrf.mxu0
    %v2441 = vadd.f32 0.0, %v2440
    %2442 = vmatmul.f32.gmra.mxu0 %v2403
    %v2443 = vpop.f32.mrf.mxu0
    %v2444 = vadd.f32 0.0, %v2443
    %2445 = vdwg.mxu0
    %2446 = vmatpush.msra.mxu0 0.0
    %2447 = vmatpush.msra.mxu0 0.0
    %2448 = vmatpush.msra.mxu0 0.0
    %2449 = vmatpush.msra.mxu0 0.0
    %2450 = vmatpush.msra.mxu0 0.0
    %2451 = vmatpush.msra.mxu0 0.0
    %2452 = vmatpush.msra.mxu0 0.0
    %2453 = vmatpush.msra.mxu0 0.0
    %2454 = vmatpush.msra.mxu0 0.0
    %2455 = vmatpush.msra.mxu0 0.0
    %2456 = vmatpush.msra.mxu0 0.0
    %2457 = vmatpush.msra.mxu0 0.0
    %2458 = vmatpush.msra.mxu0 %v2379
    %2459 = vmatpush.msra.mxu0 %v2376
    %2460 = vmatpush.msra.mxu0 %v2373
    %2461 = vmatpush.msra.mxu0 %v2370
    %2462 = vmatmul.f32.gmra.mxu0 %v2382
    %v2463 = vpop.f32.mrf.mxu0
    %v2464 = vadd.f32 0.0, %v2463
    %2465 = vmatmul.f32.gmra.mxu0 %v2385
    %v2466 = vpop.f32.mrf.mxu0
    %v2467 = vadd.f32 0.0, %v2466
    %2468 = vmatmul.f32.gmra.mxu0 %v2388
    %v2469 = vpop.f32.mrf.mxu0
    %v2470 = vadd.f32 0.0, %v2469
    %2471 = vmatmul.f32.gmra.mxu0 %v2391
    %v2472 = vpop.f32.mrf.mxu0
    %v2473 = vadd.f32 0.0, %v2472
    %2474 = vmatmul.f32.gmra.mxu0 %v2394
    %v2475 = vpop.f32.mrf.mxu0
    %v2476 = vadd.f32 0.0, %v2475
    %2477 = vmatmul.f32.gmra.mxu0 %v2397
    %v2478 = vpop.f32.mrf.mxu0
    %v2479 = vadd.f32 0.0, %v2478
    %2480 = vmatmul.f32.gmra.mxu0 %v2400
    %v2481 = vpop.f32.mrf.mxu0
    %v2482 = vadd.f32 0.0, %v2481
    %2483 = vmatmul.f32.gmra.mxu0 %v2403
    %v2484 = vpop.f32.mrf.mxu0
    %v2485 = vadd.f32 0.0, %v2484
    %2486 = vdwg.mxu0
    %2487 = vmatpush.msra.mxu0 0.0
    %2488 = vmatpush.msra.mxu0 0.0
    %2489 = vmatpush.msra.mxu0 0.0
    %2490 = vmatpush.msra.mxu0 0.0
    %2491 = vmatpush.msra.mxu0 0.0
    %2492 = vmatpush.msra.mxu0 0.0
    %2493 = vmatpush.msra.mxu0 0.0
    %2494 = vmatpush.msra.mxu0 0.0
    %2495 = vmatpush.msra.mxu0 0.0
    %2496 = vmatpush.msra.mxu0 0.0
    %2497 = vmatpush.msra.mxu0 0.0
    %2498 = vmatpush.msra.mxu0 0.0
    %2499 = vmatpush.msra.mxu0 %v2380
    %2500 = vmatpush.msra.mxu0 %v2377
    %2501 = vmatpush.msra.mxu0 %v2374
    %2502 = vmatpush.msra.mxu0 %v2371
    %2503 = vmatmul.f32.gmra.mxu0 %v2382
    %v2504 = vpop.f32.mrf.mxu0
    %v2505 = vadd.f32 0.0, %v2504
    %2506 = vmatmul.f32.gmra.mxu0 %v2385
    %v2507 = vpop.f32.mrf.mxu0
    %v2508 = vadd.f32 0.0, %v2507
    %2509 = vmatmul.f32.gmra.mxu0 %v2388
    %v2510 = vpop.f32.mrf.mxu0
    %v2511 = vadd.f32 0.0, %v2510
    %2512 = vmatmul.f32.gmra.mxu0 %v2391
    %v2513 = vpop.f32.mrf.mxu0
    %v2514 = vadd.f32 0.0, %v2513
    %2515 = vmatmul.f32.gmra.mxu0 %v2394
    %v2516 = vpop.f32.mrf.mxu0
    %v2517 = vadd.f32 0.0, %v2516
    %2518 = vmatmul.f32.gmra.mxu0 %v2397
    %v2519 = vpop.f32.mrf.mxu0
    %v2520 = vadd.f32 0.0, %v2519
    %2521 = vmatmul.f32.gmra.mxu0 %v2400
    %v2522 = vpop.f32.mrf.mxu0
    %v2523 = vadd.f32 0.0, %v2522
    %2524 = vmatmul.f32.gmra.mxu0 %v2403
    %v2525 = vpop.f32.mrf.mxu0
    %v2526 = vadd.f32 0.0, %v2525
    %2527 = vdwg.mxu0
    %v2529 = vsel %vm948, %v2002, 0
    %v2532 = vsel %vm948, %v2007, 0
    %v2535 = vsel %vm948, %v2012, 0
    %v2538 = vsel %vm948, %v2017, 0
    %v2541 = vsel %vm948, %v2022, 0
    %v2544 = vsel %vm948, %v2027, 0
    %v2547 = vsel %vm948, %v2032, 0
    %v2550 = vsel %vm948, %v2037, 0
    %2552 = vmatpush.msra.mxu0 %v2210
    %2553 = vmatpush.msra.mxu0 %v2207
    %2554 = vmatpush.msra.mxu0 %v2204
    %2555 = vmatpush.msra.mxu0 %v2201
    %2556 = vmatpush.msra.mxu0 %v2198
    %2557 = vmatpush.msra.mxu0 %v2195
    %2558 = vmatpush.msra.mxu0 %v2192
    %2559 = vmatpush.msra.mxu0 %v2189
    %2560 = vmatpush.msra.mxu0 %v2186
    %2561 = vmatpush.msra.mxu0 %v2183
    %2562 = vmatpush.msra.mxu0 %v2180
    %2563 = vmatpush.msra.mxu0 %v2177
    %2564 = vmatpush.msra.mxu0 %v2174
    %2565 = vmatpush.msra.mxu0 %v2171
    %2566 = vmatpush.msra.mxu0 %v2168
    %2567 = vmatpush.msra.mxu0 %v2165
    %2568 = vmatmul.f32.gmra.mxu0 %v1998
    %v2569 = vpop.f32.mrf.mxu0
    %v2570 = vadd.f32 %v2423, %v2569
    %2571 = vmatmul.f32.gmra.mxu0 %v2003
    %v2572 = vpop.f32.mrf.mxu0
    %v2573 = vadd.f32 %v2426, %v2572
    %2574 = vmatmul.f32.gmra.mxu0 %v2008
    %v2575 = vpop.f32.mrf.mxu0
    %v2576 = vadd.f32 %v2429, %v2575
    %2577 = vmatmul.f32.gmra.mxu0 %v2013
    %v2578 = vpop.f32.mrf.mxu0
    %v2579 = vadd.f32 %v2432, %v2578
    %2580 = vmatmul.f32.gmra.mxu0 %v2018
    %v2581 = vpop.f32.mrf.mxu0
    %v2582 = vadd.f32 %v2435, %v2581
    %2583 = vmatmul.f32.gmra.mxu0 %v2023
    %v2584 = vpop.f32.mrf.mxu0
    %v2585 = vadd.f32 %v2438, %v2584
    %2586 = vmatmul.f32.gmra.mxu0 %v2028
    %v2587 = vpop.f32.mrf.mxu0
    %v2588 = vadd.f32 %v2441, %v2587
    %2589 = vmatmul.f32.gmra.mxu0 %v2033
    %v2590 = vpop.f32.mrf.mxu0
    %v2591 = vadd.f32 %v2444, %v2590
    %2592 = vdwg.mxu0
    %2593 = vmatpush.msra.mxu0 %v2258
    %2594 = vmatpush.msra.mxu0 %v2255
    %2595 = vmatpush.msra.mxu0 %v2252
    %2596 = vmatpush.msra.mxu0 %v2249
    %2597 = vmatpush.msra.mxu0 %v2246
    %2598 = vmatpush.msra.mxu0 %v2243
    %2599 = vmatpush.msra.mxu0 %v2240
    %2600 = vmatpush.msra.mxu0 %v2237
    %2601 = vmatpush.msra.mxu0 %v2234
    %2602 = vmatpush.msra.mxu0 %v2231
    %2603 = vmatpush.msra.mxu0 %v2228
    %2604 = vmatpush.msra.mxu0 %v2225
    %2605 = vmatpush.msra.mxu0 %v2222
    %2606 = vmatpush.msra.mxu0 %v2219
    %2607 = vmatpush.msra.mxu0 %v2216
    %2608 = vmatpush.msra.mxu0 %v2213
    %2609 = vmatmul.f32.gmra.mxu0 %v1999
    %v2610 = vpop.f32.mrf.mxu0
    %v2611 = vadd.f32 %v2570, %v2610
    %2612 = vmatmul.f32.gmra.mxu0 %v2004
    %v2613 = vpop.f32.mrf.mxu0
    %v2614 = vadd.f32 %v2573, %v2613
    %2615 = vmatmul.f32.gmra.mxu0 %v2009
    %v2616 = vpop.f32.mrf.mxu0
    %v2617 = vadd.f32 %v2576, %v2616
    %2618 = vmatmul.f32.gmra.mxu0 %v2014
    %v2619 = vpop.f32.mrf.mxu0
    %v2620 = vadd.f32 %v2579, %v2619
    %2621 = vmatmul.f32.gmra.mxu0 %v2019
    %v2622 = vpop.f32.mrf.mxu0
    %v2623 = vadd.f32 %v2582, %v2622
    %2624 = vmatmul.f32.gmra.mxu0 %v2024
    %v2625 = vpop.f32.mrf.mxu0
    %v2626 = vadd.f32 %v2585, %v2625
    %2627 = vmatmul.f32.gmra.mxu0 %v2029
    %v2628 = vpop.f32.mrf.mxu0
    %v2629 = vadd.f32 %v2588, %v2628
    %2630 = vmatmul.f32.gmra.mxu0 %v2034
    %v2631 = vpop.f32.mrf.mxu0
    %v2632 = vadd.f32 %v2591, %v2631
    %2633 = vdwg.mxu0
    %2634 = vmatpush.msra.mxu0 %v2306
    %2635 = vmatpush.msra.mxu0 %v2303
    %2636 = vmatpush.msra.mxu0 %v2300
    %2637 = vmatpush.msra.mxu0 %v2297
    %2638 = vmatpush.msra.mxu0 %v2294
    %2639 = vmatpush.msra.mxu0 %v2291
    %2640 = vmatpush.msra.mxu0 %v2288
    %2641 = vmatpush.msra.mxu0 %v2285
    %2642 = vmatpush.msra.mxu0 %v2282
    %2643 = vmatpush.msra.mxu0 %v2279
    %2644 = vmatpush.msra.mxu0 %v2276
    %2645 = vmatpush.msra.mxu0 %v2273
    %2646 = vmatpush.msra.mxu0 %v2270
    %2647 = vmatpush.msra.mxu0 %v2267
    %2648 = vmatpush.msra.mxu0 %v2264
    %2649 = vmatpush.msra.mxu0 %v2261
    %2650 = vmatmul.f32.gmra.mxu0 %v2000
    %v2651 = vpop.f32.mrf.mxu0
    %v2652 = vadd.f32 %v2611, %v2651
    %2653 = vmatmul.f32.gmra.mxu0 %v2005
    %v2654 = vpop.f32.mrf.mxu0
    %v2655 = vadd.f32 %v2614, %v2654
    %2656 = vmatmul.f32.gmra.mxu0 %v2010
    %v2657 = vpop.f32.mrf.mxu0
    %v2658 = vadd.f32 %v2617, %v2657
    %2659 = vmatmul.f32.gmra.mxu0 %v2015
    %v2660 = vpop.f32.mrf.mxu0
    %v2661 = vadd.f32 %v2620, %v2660
    %2662 = vmatmul.f32.gmra.mxu0 %v2020
    %v2663 = vpop.f32.mrf.mxu0
    %v2664 = vadd.f32 %v2623, %v2663
    %2665 = vmatmul.f32.gmra.mxu0 %v2025
    %v2666 = vpop.f32.mrf.mxu0
    %v2667 = vadd.f32 %v2626, %v2666
    %2668 = vmatmul.f32.gmra.mxu0 %v2030
    %v2669 = vpop.f32.mrf.mxu0
    %v2670 = vadd.f32 %v2629, %v2669
    %2671 = vmatmul.f32.gmra.mxu0 %v2035
    %v2672 = vpop.f32.mrf.mxu0
    %v2673 = vadd.f32 %v2632, %v2672
    %2674 = vdwg.mxu0
    %2675 = vmatpush.msra.mxu0 %v2354
    %2676 = vmatpush.msra.mxu0 %v2351
    %2677 = vmatpush.msra.mxu0 %v2348
    %2678 = vmatpush.msra.mxu0 %v2345
    %2679 = vmatpush.msra.mxu0 %v2342
    %2680 = vmatpush.msra.mxu0 %v2339
    %2681 = vmatpush.msra.mxu0 %v2336
    %2682 = vmatpush.msra.mxu0 %v2333
    %2683 = vmatpush.msra.mxu0 %v2330
    %2684 = vmatpush.msra.mxu0 %v2327
    %2685 = vmatpush.msra.mxu0 %v2324
    %2686 = vmatpush.msra.mxu0 %v2321
    %2687 = vmatpush.msra.mxu0 %v2318
    %2688 = vmatpush.msra.mxu0 %v2315
    %2689 = vmatpush.msra.mxu0 %v2312
    %2690 = vmatpush.msra.mxu0 %v2309
    %2691 = vmatmul.f32.gmra.mxu0 %v2001
    %v2692 = vpop.f32.mrf.mxu0
    %v2693 = vadd.f32 %v2652, %v2692
    %2694 = vmatmul.f32.gmra.mxu0 %v2006
    %v2695 = vpop.f32.mrf.mxu0
    %v2696 = vadd.f32 %v2655, %v2695
    %2697 = vmatmul.f32.gmra.mxu0 %v2011
    %v2698 = vpop.f32.mrf.mxu0
    %v2699 = vadd.f32 %v2658, %v2698
    %2700 = vmatmul.f32.gmra.mxu0 %v2016
    %v2701 = vpop.f32.mrf.mxu0
    %v2702 = vadd.f32 %v2661, %v2701
    %2703 = vmatmul.f32.gmra.mxu0 %v2021
    %v2704 = vpop.f32.mrf.mxu0
    %v2705 = vadd.f32 %v2664, %v2704
    %2706 = vmatmul.f32.gmra.mxu0 %v2026
    %v2707 = vpop.f32.mrf.mxu0
    %v2708 = vadd.f32 %v2667, %v2707
    %2709 = vmatmul.f32.gmra.mxu0 %v2031
    %v2710 = vpop.f32.mrf.mxu0
    %v2711 = vadd.f32 %v2670, %v2710
    %2712 = vmatmul.f32.gmra.mxu0 %v2036
    %v2713 = vpop.f32.mrf.mxu0
    %v2714 = vadd.f32 %v2673, %v2713
    %2715 = vdwg.mxu0
    %2716 = vmatpush.msra.mxu0 0.0
    %2717 = vmatpush.msra.mxu0 0.0
    %2718 = vmatpush.msra.mxu0 0.0
    %2719 = vmatpush.msra.mxu0 0.0
    %2720 = vmatpush.msra.mxu0 0.0
    %2721 = vmatpush.msra.mxu0 0.0
    %2722 = vmatpush.msra.mxu0 0.0
    %2723 = vmatpush.msra.mxu0 0.0
    %2724 = vmatpush.msra.mxu0 0.0
    %2725 = vmatpush.msra.mxu0 0.0
    %2726 = vmatpush.msra.mxu0 0.0
    %2727 = vmatpush.msra.mxu0 0.0
    %2728 = vmatpush.msra.mxu0 %v2366
    %2729 = vmatpush.msra.mxu0 %v2363
    %2730 = vmatpush.msra.mxu0 %v2360
    %2731 = vmatpush.msra.mxu0 %v2357
    %2732 = vmatmul.f32.gmra.mxu0 %v2529
    %v2733 = vpop.f32.mrf.mxu0
    %v2734 = vadd.f32 %v2693, %v2733
    %2735 = vmatmul.f32.gmra.mxu0 %v2532
    %v2736 = vpop.f32.mrf.mxu0
    %v2737 = vadd.f32 %v2696, %v2736
    %2738 = vmatmul.f32.gmra.mxu0 %v2535
    %v2739 = vpop.f32.mrf.mxu0
    %v2740 = vadd.f32 %v2699, %v2739
    %2741 = vmatmul.f32.gmra.mxu0 %v2538
    %v2742 = vpop.f32.mrf.mxu0
    %v2743 = vadd.f32 %v2702, %v2742
    %2744 = vmatmul.f32.gmra.mxu0 %v2541
    %v2745 = vpop.f32.mrf.mxu0
    %v2746 = vadd.f32 %v2705, %v2745
    %2747 = vmatmul.f32.gmra.mxu0 %v2544
    %v2748 = vpop.f32.mrf.mxu0
    %v2749 = vadd.f32 %v2708, %v2748
    %2750 = vmatmul.f32.gmra.mxu0 %v2547
    %v2751 = vpop.f32.mrf.mxu0
    %v2752 = vadd.f32 %v2711, %v2751
    %2753 = vmatmul.f32.gmra.mxu0 %v2550
    %v2754 = vpop.f32.mrf.mxu0
    %v2755 = vadd.f32 %v2714, %v2754
    %2756 = vdwg.mxu0
    %2757 = vmatpush.msra.mxu0 %v2211
    %2758 = vmatpush.msra.mxu0 %v2208
    %2759 = vmatpush.msra.mxu0 %v2205
    %2760 = vmatpush.msra.mxu0 %v2202
    %2761 = vmatpush.msra.mxu0 %v2199
    %2762 = vmatpush.msra.mxu0 %v2196
    %2763 = vmatpush.msra.mxu0 %v2193
    %2764 = vmatpush.msra.mxu0 %v2190
    %2765 = vmatpush.msra.mxu0 %v2187
    %2766 = vmatpush.msra.mxu0 %v2184
    %2767 = vmatpush.msra.mxu0 %v2181
    %2768 = vmatpush.msra.mxu0 %v2178
    %2769 = vmatpush.msra.mxu0 %v2175
    %2770 = vmatpush.msra.mxu0 %v2172
    %2771 = vmatpush.msra.mxu0 %v2169
    %2772 = vmatpush.msra.mxu0 %v2166
    %2773 = vmatmul.f32.gmra.mxu0 %v1998
    %v2774 = vpop.f32.mrf.mxu0
    %v2775 = vadd.f32 %v2464, %v2774
    %2776 = vmatmul.f32.gmra.mxu0 %v2003
    %v2777 = vpop.f32.mrf.mxu0
    %v2778 = vadd.f32 %v2467, %v2777
    %2779 = vmatmul.f32.gmra.mxu0 %v2008
    %v2780 = vpop.f32.mrf.mxu0
    %v2781 = vadd.f32 %v2470, %v2780
    %2782 = vmatmul.f32.gmra.mxu0 %v2013
    %v2783 = vpop.f32.mrf.mxu0
    %v2784 = vadd.f32 %v2473, %v2783
    %2785 = vmatmul.f32.gmra.mxu0 %v2018
    %v2786 = vpop.f32.mrf.mxu0
    %v2787 = vadd.f32 %v2476, %v2786
    %2788 = vmatmul.f32.gmra.mxu0 %v2023
    %v2789 = vpop.f32.mrf.mxu0
    %v2790 = vadd.f32 %v2479, %v2789
    %2791 = vmatmul.f32.gmra.mxu0 %v2028
    %v2792 = vpop.f32.mrf.mxu0
    %v2793 = vadd.f32 %v2482, %v2792
    %2794 = vmatmul.f32.gmra.mxu0 %v2033
    %v2795 = vpop.f32.mrf.mxu0
    %v2796 = vadd.f32 %v2485, %v2795
    %2797 = vdwg.mxu0
    %2798 = vmatpush.msra.mxu0 %v2259
    %2799 = vmatpush.msra.mxu0 %v2256
    %2800 = vmatpush.msra.mxu0 %v2253
    %2801 = vmatpush.msra.mxu0 %v2250
    %2802 = vmatpush.msra.mxu0 %v2247
    %2803 = vmatpush.msra.mxu0 %v2244
    %2804 = vmatpush.msra.mxu0 %v2241
    %2805 = vmatpush.msra.mxu0 %v2238
    %2806 = vmatpush.msra.mxu0 %v2235
    %2807 = vmatpush.msra.mxu0 %v2232
    %2808 = vmatpush.msra.mxu0 %v2229
    %2809 = vmatpush.msra.mxu0 %v2226
    %2810 = vmatpush.msra.mxu0 %v2223
    %2811 = vmatpush.msra.mxu0 %v2220
    %2812 = vmatpush.msra.mxu0 %v2217
    %2813 = vmatpush.msra.mxu0 %v2214
    %2814 = vmatmul.f32.gmra.mxu0 %v1999
    %v2815 = vpop.f32.mrf.mxu0
    %v2816 = vadd.f32 %v2775, %v2815
    %2817 = vmatmul.f32.gmra.mxu0 %v2004
    %v2818 = vpop.f32.mrf.mxu0
    %v2819 = vadd.f32 %v2778, %v2818
    %2820 = vmatmul.f32.gmra.mxu0 %v2009
    %v2821 = vpop.f32.mrf.mxu0
    %v2822 = vadd.f32 %v2781, %v2821
    %2823 = vmatmul.f32.gmra.mxu0 %v2014
    %v2824 = vpop.f32.mrf.mxu0
    %v2825 = vadd.f32 %v2784, %v2824
    %2826 = vmatmul.f32.gmra.mxu0 %v2019
    %v2827 = vpop.f32.mrf.mxu0
    %v2828 = vadd.f32 %v2787, %v2827
    %2829 = vmatmul.f32.gmra.mxu0 %v2024
    %v2830 = vpop.f32.mrf.mxu0
    %v2831 = vadd.f32 %v2790, %v2830
    %2832 = vmatmul.f32.gmra.mxu0 %v2029
    %v2833 = vpop.f32.mrf.mxu0
    %v2834 = vadd.f32 %v2793, %v2833
    %2835 = vmatmul.f32.gmra.mxu0 %v2034
    %v2836 = vpop.f32.mrf.mxu0
    %v2837 = vadd.f32 %v2796, %v2836
    %2838 = vdwg.mxu0
    %2839 = vmatpush.msra.mxu0 %v2307
    %2840 = vmatpush.msra.mxu0 %v2304
    %2841 = vmatpush.msra.mxu0 %v2301
    %2842 = vmatpush.msra.mxu0 %v2298
    %2843 = vmatpush.msra.mxu0 %v2295
    %2844 = vmatpush.msra.mxu0 %v2292
    %2845 = vmatpush.msra.mxu0 %v2289
    %2846 = vmatpush.msra.mxu0 %v2286
    %2847 = vmatpush.msra.mxu0 %v2283
    %2848 = vmatpush.msra.mxu0 %v2280
    %2849 = vmatpush.msra.mxu0 %v2277
    %2850 = vmatpush.msra.mxu0 %v2274
    %2851 = vmatpush.msra.mxu0 %v2271
    %2852 = vmatpush.msra.mxu0 %v2268
    %2853 = vmatpush.msra.mxu0 %v2265
    %2854 = vmatpush.msra.mxu0 %v2262
    %2855 = vmatmul.f32.gmra.mxu0 %v2000
    %v2856 = vpop.f32.mrf.mxu0
    %v2857 = vadd.f32 %v2816, %v2856
    %2858 = vmatmul.f32.gmra.mxu0 %v2005
    %v2859 = vpop.f32.mrf.mxu0
    %v2860 = vadd.f32 %v2819, %v2859
    %2861 = vmatmul.f32.gmra.mxu0 %v2010
    %v2862 = vpop.f32.mrf.mxu0
    %v2863 = vadd.f32 %v2822, %v2862
    %2864 = vmatmul.f32.gmra.mxu0 %v2015
    %v2865 = vpop.f32.mrf.mxu0
    %v2866 = vadd.f32 %v2825, %v2865
    %2867 = vmatmul.f32.gmra.mxu0 %v2020
    %v2868 = vpop.f32.mrf.mxu0
    %v2869 = vadd.f32 %v2828, %v2868
    %2870 = vmatmul.f32.gmra.mxu0 %v2025
    %v2871 = vpop.f32.mrf.mxu0
    %v2872 = vadd.f32 %v2831, %v2871
    %2873 = vmatmul.f32.gmra.mxu0 %v2030
    %v2874 = vpop.f32.mrf.mxu0
    %v2875 = vadd.f32 %v2834, %v2874
    %2876 = vmatmul.f32.gmra.mxu0 %v2035
    %v2877 = vpop.f32.mrf.mxu0
    %v2878 = vadd.f32 %v2837, %v2877
    %2879 = vdwg.mxu0
    %2880 = vmatpush.msra.mxu0 %v2355
    %2881 = vmatpush.msra.mxu0 %v2352
    %2882 = vmatpush.msra.mxu0 %v2349
    %2883 = vmatpush.msra.mxu0 %v2346
    %2884 = vmatpush.msra.mxu0 %v2343
    %2885 = vmatpush.msra.mxu0 %v2340
    %2886 = vmatpush.msra.mxu0 %v2337
    %2887 = vmatpush.msra.mxu0 %v2334
    %2888 = vmatpush.msra.mxu0 %v2331
    %2889 = vmatpush.msra.mxu0 %v2328
    %2890 = vmatpush.msra.mxu0 %v2325
    %2891 = vmatpush.msra.mxu0 %v2322
    %2892 = vmatpush.msra.mxu0 %v2319
    %2893 = vmatpush.msra.mxu0 %v2316
    %2894 = vmatpush.msra.mxu0 %v2313
    %2895 = vmatpush.msra.mxu0 %v2310
    %2896 = vmatmul.f32.gmra.mxu0 %v2001
    %v2897 = vpop.f32.mrf.mxu0
    %v2898 = vadd.f32 %v2857, %v2897
    %2899 = vmatmul.f32.gmra.mxu0 %v2006
    %v2900 = vpop.f32.mrf.mxu0
    %v2901 = vadd.f32 %v2860, %v2900
    %2902 = vmatmul.f32.gmra.mxu0 %v2011
    %v2903 = vpop.f32.mrf.mxu0
    %v2904 = vadd.f32 %v2863, %v2903
    %2905 = vmatmul.f32.gmra.mxu0 %v2016
    %v2906 = vpop.f32.mrf.mxu0
    %v2907 = vadd.f32 %v2866, %v2906
    %2908 = vmatmul.f32.gmra.mxu0 %v2021
    %v2909 = vpop.f32.mrf.mxu0
    %v2910 = vadd.f32 %v2869, %v2909
    %2911 = vmatmul.f32.gmra.mxu0 %v2026
    %v2912 = vpop.f32.mrf.mxu0
    %v2913 = vadd.f32 %v2872, %v2912
    %2914 = vmatmul.f32.gmra.mxu0 %v2031
    %v2915 = vpop.f32.mrf.mxu0
    %v2916 = vadd.f32 %v2875, %v2915
    %2917 = vmatmul.f32.gmra.mxu0 %v2036
    %v2918 = vpop.f32.mrf.mxu0
    %v2919 = vadd.f32 %v2878, %v2918
    %2920 = vdwg.mxu0
    %2921 = vmatpush.msra.mxu0 0.0
    %2922 = vmatpush.msra.mxu0 0.0
    %2923 = vmatpush.msra.mxu0 0.0
    %2924 = vmatpush.msra.mxu0 0.0
    %2925 = vmatpush.msra.mxu0 0.0
    %2926 = vmatpush.msra.mxu0 0.0
    %2927 = vmatpush.msra.mxu0 0.0
    %2928 = vmatpush.msra.mxu0 0.0
    %2929 = vmatpush.msra.mxu0 0.0
    %2930 = vmatpush.msra.mxu0 0.0
    %2931 = vmatpush.msra.mxu0 0.0
    %2932 = vmatpush.msra.mxu0 0.0
    %2933 = vmatpush.msra.mxu0 %v2367
    %2934 = vmatpush.msra.mxu0 %v2364
    %2935 = vmatpush.msra.mxu0 %v2361
    %2936 = vmatpush.msra.mxu0 %v2358
    %2937 = vmatmul.f32.gmra.mxu0 %v2529
    %v2938 = vpop.f32.mrf.mxu0
    %v2939 = vadd.f32 %v2898, %v2938
    %2940 = vmatmul.f32.gmra.mxu0 %v2532
    %v2941 = vpop.f32.mrf.mxu0
    %v2942 = vadd.f32 %v2901, %v2941
    %2943 = vmatmul.f32.gmra.mxu0 %v2535
    %v2944 = vpop.f32.mrf.mxu0
    %v2945 = vadd.f32 %v2904, %v2944
    %2946 = vmatmul.f32.gmra.mxu0 %v2538
    %v2947 = vpop.f32.mrf.mxu0
    %v2948 = vadd.f32 %v2907, %v2947
    %2949 = vmatmul.f32.gmra.mxu0 %v2541
    %v2950 = vpop.f32.mrf.mxu0
    %v2951 = vadd.f32 %v2910, %v2950
    %2952 = vmatmul.f32.gmra.mxu0 %v2544
    %v2953 = vpop.f32.mrf.mxu0
    %v2954 = vadd.f32 %v2913, %v2953
    %2955 = vmatmul.f32.gmra.mxu0 %v2547
    %v2956 = vpop.f32.mrf.mxu0
    %v2957 = vadd.f32 %v2916, %v2956
    %2958 = vmatmul.f32.gmra.mxu0 %v2550
    %v2959 = vpop.f32.mrf.mxu0
    %v2960 = vadd.f32 %v2919, %v2959
    %2961 = vdwg.mxu0
    %2962 = vmatpush.msra.mxu0 %v2212
    %2963 = vmatpush.msra.mxu0 %v2209
    %2964 = vmatpush.msra.mxu0 %v2206
    %2965 = vmatpush.msra.mxu0 %v2203
    %2966 = vmatpush.msra.mxu0 %v2200
    %2967 = vmatpush.msra.mxu0 %v2197
    %2968 = vmatpush.msra.mxu0 %v2194
    %2969 = vmatpush.msra.mxu0 %v2191
    %2970 = vmatpush.msra.mxu0 %v2188
    %2971 = vmatpush.msra.mxu0 %v2185
    %2972 = vmatpush.msra.mxu0 %v2182
    %2973 = vmatpush.msra.mxu0 %v2179
    %2974 = vmatpush.msra.mxu0 %v2176
    %2975 = vmatpush.msra.mxu0 %v2173
    %2976 = vmatpush.msra.mxu0 %v2170
    %2977 = vmatpush.msra.mxu0 %v2167
    %2978 = vmatmul.f32.gmra.mxu0 %v1998
    %v2979 = vpop.f32.mrf.mxu0
    %v2980 = vadd.f32 %v2505, %v2979
    %2981 = vmatmul.f32.gmra.mxu0 %v2003
    %v2982 = vpop.f32.mrf.mxu0
    %v2983 = vadd.f32 %v2508, %v2982
    %2984 = vmatmul.f32.gmra.mxu0 %v2008
    %v2985 = vpop.f32.mrf.mxu0
    %v2986 = vadd.f32 %v2511, %v2985
    %2987 = vmatmul.f32.gmra.mxu0 %v2013
    %v2988 = vpop.f32.mrf.mxu0
    %v2989 = vadd.f32 %v2514, %v2988
    %2990 = vmatmul.f32.gmra.mxu0 %v2018
    %v2991 = vpop.f32.mrf.mxu0
    %v2992 = vadd.f32 %v2517, %v2991
    %2993 = vmatmul.f32.gmra.mxu0 %v2023
    %v2994 = vpop.f32.mrf.mxu0
    %v2995 = vadd.f32 %v2520, %v2994
    %2996 = vmatmul.f32.gmra.mxu0 %v2028
    %v2997 = vpop.f32.mrf.mxu0
    %v2998 = vadd.f32 %v2523, %v2997
    %2999 = vmatmul.f32.gmra.mxu0 %v2033
    %v3000 = vpop.f32.mrf.mxu0
    %v3001 = vadd.f32 %v2526, %v3000
    %3002 = vdwg.mxu0
    %3003 = vmatpush.msra.mxu0 %v2260
    %3004 = vmatpush.msra.mxu0 %v2257
    %3005 = vmatpush.msra.mxu0 %v2254
    %3006 = vmatpush.msra.mxu0 %v2251
    %3007 = vmatpush.msra.mxu0 %v2248
    %3008 = vmatpush.msra.mxu0 %v2245
    %3009 = vmatpush.msra.mxu0 %v2242
    %3010 = vmatpush.msra.mxu0 %v2239
    %3011 = vmatpush.msra.mxu0 %v2236
    %3012 = vmatpush.msra.mxu0 %v2233
    %3013 = vmatpush.msra.mxu0 %v2230
    %3014 = vmatpush.msra.mxu0 %v2227
    %3015 = vmatpush.msra.mxu0 %v2224
    %3016 = vmatpush.msra.mxu0 %v2221
    %3017 = vmatpush.msra.mxu0 %v2218
    %3018 = vmatpush.msra.mxu0 %v2215
    %3019 = vmatmul.f32.gmra.mxu0 %v1999
    %v3020 = vpop.f32.mrf.mxu0
    %v3021 = vadd.f32 %v2980, %v3020
    %3022 = vmatmul.f32.gmra.mxu0 %v2004
    %v3023 = vpop.f32.mrf.mxu0
    %v3024 = vadd.f32 %v2983, %v3023
    %3025 = vmatmul.f32.gmra.mxu0 %v2009
    %v3026 = vpop.f32.mrf.mxu0
    %v3027 = vadd.f32 %v2986, %v3026
    %3028 = vmatmul.f32.gmra.mxu0 %v2014
    %v3029 = vpop.f32.mrf.mxu0
    %v3030 = vadd.f32 %v2989, %v3029
    %3031 = vmatmul.f32.gmra.mxu0 %v2019
    %v3032 = vpop.f32.mrf.mxu0
    %v3033 = vadd.f32 %v2992, %v3032
    %3034 = vmatmul.f32.gmra.mxu0 %v2024
    %v3035 = vpop.f32.mrf.mxu0
    %v3036 = vadd.f32 %v2995, %v3035
    %3037 = vmatmul.f32.gmra.mxu0 %v2029
    %v3038 = vpop.f32.mrf.mxu0
    %v3039 = vadd.f32 %v2998, %v3038
    %3040 = vmatmul.f32.gmra.mxu0 %v2034
    %v3041 = vpop.f32.mrf.mxu0
    %v3042 = vadd.f32 %v3001, %v3041
    %3043 = vdwg.mxu0
    %3044 = vmatpush.msra.mxu0 %v2308
    %3045 = vmatpush.msra.mxu0 %v2305
    %3046 = vmatpush.msra.mxu0 %v2302
    %3047 = vmatpush.msra.mxu0 %v2299
    %3048 = vmatpush.msra.mxu0 %v2296
    %3049 = vmatpush.msra.mxu0 %v2293
    %3050 = vmatpush.msra.mxu0 %v2290
    %3051 = vmatpush.msra.mxu0 %v2287
    %3052 = vmatpush.msra.mxu0 %v2284
    %3053 = vmatpush.msra.mxu0 %v2281
    %3054 = vmatpush.msra.mxu0 %v2278
    %3055 = vmatpush.msra.mxu0 %v2275
    %3056 = vmatpush.msra.mxu0 %v2272
    %3057 = vmatpush.msra.mxu0 %v2269
    %3058 = vmatpush.msra.mxu0 %v2266
    %3059 = vmatpush.msra.mxu0 %v2263
    %3060 = vmatmul.f32.gmra.mxu0 %v2000
    %v3061 = vpop.f32.mrf.mxu0
    %v3062 = vadd.f32 %v3021, %v3061
    %3063 = vmatmul.f32.gmra.mxu0 %v2005
    %v3064 = vpop.f32.mrf.mxu0
    %v3065 = vadd.f32 %v3024, %v3064
    %3066 = vmatmul.f32.gmra.mxu0 %v2010
    %v3067 = vpop.f32.mrf.mxu0
    %v3068 = vadd.f32 %v3027, %v3067
    %3069 = vmatmul.f32.gmra.mxu0 %v2015
    %v3070 = vpop.f32.mrf.mxu0
    %v3071 = vadd.f32 %v3030, %v3070
    %3072 = vmatmul.f32.gmra.mxu0 %v2020
    %v3073 = vpop.f32.mrf.mxu0
    %v3074 = vadd.f32 %v3033, %v3073
    %3075 = vmatmul.f32.gmra.mxu0 %v2025
    %v3076 = vpop.f32.mrf.mxu0
    %v3077 = vadd.f32 %v3036, %v3076
    %3078 = vmatmul.f32.gmra.mxu0 %v2030
    %v3079 = vpop.f32.mrf.mxu0
    %v3080 = vadd.f32 %v3039, %v3079
    %3081 = vmatmul.f32.gmra.mxu0 %v2035
    %v3082 = vpop.f32.mrf.mxu0
    %v3083 = vadd.f32 %v3042, %v3082
    %3084 = vdwg.mxu0
    %3085 = vmatpush.msra.mxu0 %v2356
    %3086 = vmatpush.msra.mxu0 %v2353
    %3087 = vmatpush.msra.mxu0 %v2350
    %3088 = vmatpush.msra.mxu0 %v2347
    %3089 = vmatpush.msra.mxu0 %v2344
    %3090 = vmatpush.msra.mxu0 %v2341
    %3091 = vmatpush.msra.mxu0 %v2338
    %3092 = vmatpush.msra.mxu0 %v2335
    %3093 = vmatpush.msra.mxu0 %v2332
    %3094 = vmatpush.msra.mxu0 %v2329
    %3095 = vmatpush.msra.mxu0 %v2326
    %3096 = vmatpush.msra.mxu0 %v2323
    %3097 = vmatpush.msra.mxu0 %v2320
    %3098 = vmatpush.msra.mxu0 %v2317
    %3099 = vmatpush.msra.mxu0 %v2314
    %3100 = vmatpush.msra.mxu0 %v2311
    %3101 = vmatmul.f32.gmra.mxu0 %v2001
    %v3102 = vpop.f32.mrf.mxu0
    %v3103 = vadd.f32 %v3062, %v3102
    %3104 = vmatmul.f32.gmra.mxu0 %v2006
    %v3105 = vpop.f32.mrf.mxu0
    %v3106 = vadd.f32 %v3065, %v3105
    %3107 = vmatmul.f32.gmra.mxu0 %v2011
    %v3108 = vpop.f32.mrf.mxu0
    %v3109 = vadd.f32 %v3068, %v3108
    %3110 = vmatmul.f32.gmra.mxu0 %v2016
    %v3111 = vpop.f32.mrf.mxu0
    %v3112 = vadd.f32 %v3071, %v3111
    %3113 = vmatmul.f32.gmra.mxu0 %v2021
    %v3114 = vpop.f32.mrf.mxu0
    %v3115 = vadd.f32 %v3074, %v3114
    %3116 = vmatmul.f32.gmra.mxu0 %v2026
    %v3117 = vpop.f32.mrf.mxu0
    %v3118 = vadd.f32 %v3077, %v3117
    %3119 = vmatmul.f32.gmra.mxu0 %v2031
    %v3120 = vpop.f32.mrf.mxu0
    %v3121 = vadd.f32 %v3080, %v3120
    %3122 = vmatmul.f32.gmra.mxu0 %v2036
    %v3123 = vpop.f32.mrf.mxu0
    %v3124 = vadd.f32 %v3083, %v3123
    %3125 = vdwg.mxu0
    %3126 = vmatpush.msra.mxu0 0.0
    %3127 = vmatpush.msra.mxu0 0.0
    %3128 = vmatpush.msra.mxu0 0.0
    %3129 = vmatpush.msra.mxu0 0.0
    %3130 = vmatpush.msra.mxu0 0.0
    %3131 = vmatpush.msra.mxu0 0.0
    %3132 = vmatpush.msra.mxu0 0.0
    %3133 = vmatpush.msra.mxu0 0.0
    %3134 = vmatpush.msra.mxu0 0.0
    %3135 = vmatpush.msra.mxu0 0.0
    %3136 = vmatpush.msra.mxu0 0.0
    %3137 = vmatpush.msra.mxu0 0.0
    %3138 = vmatpush.msra.mxu0 %v2368
    %3139 = vmatpush.msra.mxu0 %v2365
    %3140 = vmatpush.msra.mxu0 %v2362
    %3141 = vmatpush.msra.mxu0 %v2359
    %3142 = vmatmul.f32.gmra.mxu0 %v2529
    %v3143 = vpop.f32.mrf.mxu0
    %v3144 = vadd.f32 %v3103, %v3143
    %3145 = vmatmul.f32.gmra.mxu0 %v2532
    %v3146 = vpop.f32.mrf.mxu0
    %v3147 = vadd.f32 %v3106, %v3146
    %3148 = vmatmul.f32.gmra.mxu0 %v2535
    %v3149 = vpop.f32.mrf.mxu0
    %v3150 = vadd.f32 %v3109, %v3149
    %3151 = vmatmul.f32.gmra.mxu0 %v2538
    %v3152 = vpop.f32.mrf.mxu0
    %v3153 = vadd.f32 %v3112, %v3152
    %3154 = vmatmul.f32.gmra.mxu0 %v2541
    %v3155 = vpop.f32.mrf.mxu0
    %v3156 = vadd.f32 %v3115, %v3155
    %3157 = vmatmul.f32.gmra.mxu0 %v2544
    %v3158 = vpop.f32.mrf.mxu0
    %v3159 = vadd.f32 %v3118, %v3158
    %3160 = vmatmul.f32.gmra.mxu0 %v2547
    %v3161 = vpop.f32.mrf.mxu0
    %v3162 = vadd.f32 %v3121, %v3161
    %3163 = vmatmul.f32.gmra.mxu0 %v2550
    %v3164 = vpop.f32.mrf.mxu0
    %v3165 = vadd.f32 %v3124, %v3164
    %3166 = vdwg.mxu0
    %v3167 = vld [vmem:[#allocation15] sm:$0x7]
    %v3169 = vperm.slane %v3167, 0
    %v3170 = vperm.slane %v3167, 1
    %v3171 = vperm.slane %v3167, 2
    %v3175 = vadd.f32 %v2734, %v3169
    %v3176 = vadd.f32 %v2939, %v3170
    %v3177 = vadd.f32 %v3144, %v3171
    %v3178 = vadd.f32 %v2737, %v3169
    %v3179 = vadd.f32 %v2942, %v3170
    %v3180 = vadd.f32 %v3147, %v3171
    %v3181 = vadd.f32 %v2740, %v3169
    %v3182 = vadd.f32 %v2945, %v3170
    %v3183 = vadd.f32 %v3150, %v3171
    %v3184 = vadd.f32 %v2743, %v3169
    %v3185 = vadd.f32 %v2948, %v3170
    %v3186 = vadd.f32 %v3153, %v3171
    %v3187 = vadd.f32 %v2746, %v3169
    %v3188 = vadd.f32 %v2951, %v3170
    %v3189 = vadd.f32 %v3156, %v3171
    %v3190 = vadd.f32 %v2749, %v3169
    %v3191 = vadd.f32 %v2954, %v3170
    %v3192 = vadd.f32 %v3159, %v3171
    %v3193 = vadd.f32 %v2752, %v3169
    %v3194 = vadd.f32 %v2957, %v3170
    %v3195 = vadd.f32 %v3162, %v3171
    %v3196 = vadd.f32 %v2755, %v3169
    %v3197 = vadd.f32 %v2960, %v3170
    %v3198 = vadd.f32 %v3165, %v3171
    %v3199 = vld [vmem:[#allocation20] sm:$0xff]
    %v3200 = vld [vmem:[#allocation20 + $0x8] sm:$0xff]
    %v3201 = vld [vmem:[#allocation20 + $0x10] sm:$0xff]
    %v3202 = vld [vmem:[#allocation20 + $0x18] sm:$0xff]
    %v3203 = vld [vmem:[#allocation20 + $0x20] sm:$0xff]
    %v3204 = vld [vmem:[#allocation20 + $0x28] sm:$0xff]
    %v3205 = vld [vmem:[#allocation20 + $0x30] sm:$0xff]
    %v3206 = vld [vmem:[#allocation20 + $0x38] sm:$0xff]
    %v3207 = vld [vmem:[#allocation20 + $0x40] sm:$0xff]
    %v3208 = vld [vmem:[#allocation20 + $0x48] sm:$0xff]
    %v3209 = vld [vmem:[#allocation20 + $0x50] sm:$0xff]
    %v3210 = vld [vmem:[#allocation20 + $0x58] sm:$0xff]
    %v3211 = vld [vmem:[#allocation20 + $0x60] sm:$0xff]
    %v3212 = vld [vmem:[#allocation20 + $0x68] sm:$0xff]
    %v3213 = vld [vmem:[#allocation20 + $0x70] sm:$0xff]
    %v3214 = vld [vmem:[#allocation20 + $0x78] sm:$0xff]
    %v3215 = vld [vmem:[#allocation20 + $0x80] sm:$0xff]
    %v3216 = vld [vmem:[#allocation20 + $0x88] sm:$0xff]
    %v3217 = vld [vmem:[#allocation20 + $0x90] sm:$0xff]
    %v3218 = vld [vmem:[#allocation20 + $0x98] sm:$0xff]
    %v3219 = vld [vmem:[#allocation20 + $0xa0] sm:$0xff]
    %v3220 = vld [vmem:[#allocation20 + $0xa8] sm:$0xff]
    %v3221 = vld [vmem:[#allocation20 + $0xb0] sm:$0xff]
    %v3222 = vld [vmem:[#allocation20 + $0xb8] sm:$0xff]
    %v3223 = vld [vmem:[#allocation20 + $0xc0] sm:$0xff]
    %v3224 = vld [vmem:[#allocation20 + $0xc8] sm:$0xff]
    %v3225 = vld [vmem:[#allocation20 + $0xd0] sm:$0xff]
    %v3226 = vld [vmem:[#allocation20 + $0xd8] sm:$0xff]
    %v3227 = vld [vmem:[#allocation20 + $0xe0] sm:$0xff]
    %v3228 = vld [vmem:[#allocation20 + $0xe8] sm:$0xff]
    %v3229 = vld [vmem:[#allocation20 + $0xf0] sm:$0xff]
    %v3230 = vld [vmem:[#allocation20 + $0xf8] sm:$0xff]
    %v3231 = vld [vmem:[#allocation20 + $0x100] sm:$0xff]
    %v3232 = vld [vmem:[#allocation20 + $0x108] sm:$0xff]
    %v3233 = vld [vmem:[#allocation20 + $0x110] sm:$0xff]
    %v3234 = vld [vmem:[#allocation20 + $0x118] sm:$0xff]
    %v3235 = vld [vmem:[#allocation20 + $0x120] sm:$0xff]
    %v3236 = vld [vmem:[#allocation20 + $0x128] sm:$0xff]
    %v3237 = vld [vmem:[#allocation20 + $0x130] sm:$0xff]
    %v3238 = vld [vmem:[#allocation20 + $0x138] sm:$0xff]
    %v3239 = vld [vmem:[#allocation20 + $0x140] sm:$0xff]
    %v3240 = vld [vmem:[#allocation20 + $0x148] sm:$0xff]
    %v3241 = vld [vmem:[#allocation20 + $0x150] sm:$0xff]
    %v3242 = vld [vmem:[#allocation20 + $0x158] sm:$0xff]
    %v3243 = vld [vmem:[#allocation20 + $0x160] sm:$0xff]
    %v3244 = vld [vmem:[#allocation20 + $0x168] sm:$0xff]
    %v3245 = vld [vmem:[#allocation20 + $0x170] sm:$0xff]
    %v3246 = vld [vmem:[#allocation20 + $0x178] sm:$0xff]
    %v3247 = vld [vmem:[#allocation21] sm:$0x1]
    %v3249 = vperm.slane %v3247, 0
    %3251 = vmatpush.msra.mxu0 %v3244
    %3252 = vmatpush.msra.mxu0 %v3241
    %3253 = vmatpush.msra.mxu0 %v3238
    %3254 = vmatpush.msra.mxu0 %v3235
    %3255 = vmatpush.msra.mxu0 %v3232
    %3256 = vmatpush.msra.mxu0 %v3229
    %3257 = vmatpush.msra.mxu0 %v3226
    %3258 = vmatpush.msra.mxu0 %v3223
    %3259 = vmatpush.msra.mxu0 %v3220
    %3260 = vmatpush.msra.mxu0 %v3217
    %3261 = vmatpush.msra.mxu0 %v3214
    %3262 = vmatpush.msra.mxu0 %v3211
    %3263 = vmatpush.msra.mxu0 %v3208
    %3264 = vmatpush.msra.mxu0 %v3205
    %3265 = vmatpush.msra.mxu0 %v3202
    %3266 = vmatpush.msra.mxu0 %v3199
    %3267 = vmatmul.f32.gmra.mxu0 0.0
    %v3268 = vpop.f32.mrf.mxu0
    %v3269 = vadd.f32 0.0, %v3268
    %3270 = vdwg.mxu0
    %3271 = vmatpush.msra.mxu0 %v3245
    %3272 = vmatpush.msra.mxu0 %v3242
    %3273 = vmatpush.msra.mxu0 %v3239
    %3274 = vmatpush.msra.mxu0 %v3236
    %3275 = vmatpush.msra.mxu0 %v3233
    %3276 = vmatpush.msra.mxu0 %v3230
    %3277 = vmatpush.msra.mxu0 %v3227
    %3278 = vmatpush.msra.mxu0 %v3224
    %3279 = vmatpush.msra.mxu0 %v3221
    %3280 = vmatpush.msra.mxu0 %v3218
    %3281 = vmatpush.msra.mxu0 %v3215
    %3282 = vmatpush.msra.mxu0 %v3212
    %3283 = vmatpush.msra.mxu0 %v3209
    %3284 = vmatpush.msra.mxu0 %v3206
    %3285 = vmatpush.msra.mxu0 %v3203
    %3286 = vmatpush.msra.mxu0 %v3200
    %3287 = vmatmul.f32.gmra.mxu0 0.0
    %v3288 = vpop.f32.mrf.mxu0
    %v3289 = vadd.f32 0.0, %v3288
    %3290 = vdwg.mxu0
    %3291 = vmatpush.msra.mxu0 %v3246
    %3292 = vmatpush.msra.mxu0 %v3243
    %3293 = vmatpush.msra.mxu0 %v3240
    %3294 = vmatpush.msra.mxu0 %v3237
    %3295 = vmatpush.msra.mxu0 %v3234
    %3296 = vmatpush.msra.mxu0 %v3231
    %3297 = vmatpush.msra.mxu0 %v3228
    %3298 = vmatpush.msra.mxu0 %v3225
    %3299 = vmatpush.msra.mxu0 %v3222
    %3300 = vmatpush.msra.mxu0 %v3219
    %3301 = vmatpush.msra.mxu0 %v3216
    %3302 = vmatpush.msra.mxu0 %v3213
    %3303 = vmatpush.msra.mxu0 %v3210
    %3304 = vmatpush.msra.mxu0 %v3207
    %3305 = vmatpush.msra.mxu0 %v3204
    %3306 = vmatpush.msra.mxu0 %v3201
    %3307 = vmatmul.f32.gmra.mxu0 0.0
    %v3308 = vpop.f32.mrf.mxu0
    %v3309 = vadd.f32 0.0, %v3308
    %3310 = vdwg.mxu0
    %v3311 = vadd.f32 %v3175, %v3269
    %v3312 = vxor.u32 %v3311, 2147483648
    %v3313 = vmul.f32 %v3312, 1.442695
    %v3314 = vpow.pop %v3313
    %v3315 = vadd.f32 %v3314, 1.0
    %v3316 = vrcp.pop %v3315
    %v3317 = vmul.f32 %v3315, %v3316
    %v3318 = vsub.f32 1.0, %v3317
    %v3319 = vmul.f32 %v3316, %v3318
    %v3320 = vadd.f32 %v3316, %v3319
    %vm3321 = vweird.f32 %v3315
    %vm3322 = vweird.f32 %v3316
    %vm3323 = vmor %vm3321, %vm3322
    %v3324 = vsel %vm3323, %v3316, %v3320
    %v3325 = vand.u32 2147483647, %v3315
    %vm3326 = vcmp.eq.f32.partialorder %v3325, 8.507059e+37
    %v3327 = vand.u32 %v3315, 2147483648
    %v3328 = vor.u32 1.1754944e-38, %v3327
    %v3329 = vsel %vm3326, %v3328, %v3324
    %v3330 = vmul.f32 1.0, %v3329
    %v3331 = vadd.f32 %v3176, %v3289
    %v3332 = vxor.u32 %v3331, 2147483648
    %v3333 = vmul.f32 %v3332, 1.442695
    %v3334 = vpow.pop %v3333
    %v3335 = vadd.f32 %v3334, 1.0
    %v3336 = vrcp.pop %v3335
    %v3337 = vmul.f32 %v3335, %v3336
    %v3338 = vsub.f32 1.0, %v3337
    %v3339 = vmul.f32 %v3336, %v3338
    %v3340 = vadd.f32 %v3336, %v3339
    %vm3341 = vweird.f32 %v3335
    %vm3342 = vweird.f32 %v3336
    %vm3343 = vmor %vm3341, %vm3342
    %v3344 = vsel %vm3343, %v3336, %v3340
    %v3345 = vand.u32 2147483647, %v3335
    %vm3346 = vcmp.eq.f32.partialorder %v3345, 8.507059e+37
    %v3347 = vand.u32 %v3335, 2147483648
    %v3348 = vor.u32 1.1754944e-38, %v3347
    %v3349 = vsel %vm3346, %v3348, %v3344
    %v3350 = vmul.f32 1.0, %v3349
    %v3351 = vadd.f32 %v3309, %v3249
    %v3352 = vmul.f32 %v3330, %v3351
    %v3353 = vadd.f32 %v3177, %v3352
    %v3354 = vtanh.pop %v3353
    %v3355 = vsub.f32 1.0, %v3350
    %v3356 = vmul.f32 %v3355, %v3354
    %v3357 = vmul.f32 %v3350, 0.0
    %v3358 = vadd.f32 %v3356, %v3357
    %3359 = vst [vmem:[#allocation2] sm:$0xff] %v3358
    %3360 = vmatpush.msra.mxu0 %v3244
    %3361 = vmatpush.msra.mxu0 %v3241
    %3362 = vmatpush.msra.mxu0 %v3238
    %3363 = vmatpush.msra.mxu0 %v3235
    %3364 = vmatpush.msra.mxu0 %v3232
    %3365 = vmatpush.msra.mxu0 %v3229
    %3366 = vmatpush.msra.mxu0 %v3226
    %3367 = vmatpush.msra.mxu0 %v3223
    %3368 = vmatpush.msra.mxu0 %v3220
    %3369 = vmatpush.msra.mxu0 %v3217
    %3370 = vmatpush.msra.mxu0 %v3214
    %3371 = vmatpush.msra.mxu0 %v3211
    %3372 = vmatpush.msra.mxu0 %v3208
    %3373 = vmatpush.msra.mxu0 %v3205
    %3374 = vmatpush.msra.mxu0 %v3202
    %3375 = vmatpush.msra.mxu0 %v3199
    %3376 = vmatmul.f32.gmra.mxu0 %v3358
    %v3377 = vpop.f32.mrf.mxu0
    %v3378 = vadd.f32 0.0, %v3377
    %3379 = vdwg.mxu0
    %3380 = vmatpush.msra.mxu0 %v3245
    %3381 = vmatpush.msra.mxu0 %v3242
    %3382 = vmatpush.msra.mxu0 %v3239
    %3383 = vmatpush.msra.mxu0 %v3236
    %3384 = vmatpush.msra.mxu0 %v3233
    %3385 = vmatpush.msra.mxu0 %v3230
    %3386 = vmatpush.msra.mxu0 %v3227
    %3387 = vmatpush.msra.mxu0 %v3224
    %3388 = vmatpush.msra.mxu0 %v3221
    %3389 = vmatpush.msra.mxu0 %v3218
    %3390 = vmatpush.msra.mxu0 %v3215
    %3391 = vmatpush.msra.mxu0 %v3212
    %3392 = vmatpush.msra.mxu0 %v3209
    %3393 = vmatpush.msra.mxu0 %v3206
    %3394 = vmatpush.msra.mxu0 %v3203
    %3395 = vmatpush.msra.mxu0 %v3200
    %3396 = vmatmul.f32.gmra.mxu0 %v3358
    %v3397 = vpop.f32.mrf.mxu0
    %v3398 = vadd.f32 0.0, %v3397
    %3399 = vdwg.mxu0
    %3400 = vmatpush.msra.mxu0 %v3246
    %3401 = vmatpush.msra.mxu0 %v3243
    %3402 = vmatpush.msra.mxu0 %v3240
    %3403 = vmatpush.msra.mxu0 %v3237
    %3404 = vmatpush.msra.mxu0 %v3234
    %3405 = vmatpush.msra.mxu0 %v3231
    %3406 = vmatpush.msra.mxu0 %v3228
    %3407 = vmatpush.msra.mxu0 %v3225
    %3408 = vmatpush.msra.mxu0 %v3222
    %3409 = vmatpush.msra.mxu0 %v3219
    %3410 = vmatpush.msra.mxu0 %v3216
    %3411 = vmatpush.msra.mxu0 %v3213
    %3412 = vmatpush.msra.mxu0 %v3210
    %3413 = vmatpush.msra.mxu0 %v3207
    %3414 = vmatpush.msra.mxu0 %v3204
    %3415 = vmatpush.msra.mxu0 %v3201
    %3416 = vmatmul.f32.gmra.mxu0 %v3358
    %v3417 = vpop.f32.mrf.mxu0
    %v3418 = vadd.f32 0.0, %v3417
    %3419 = vdwg.mxu0
    %v3420 = vadd.f32 %v3178, %v3378
    %v3421 = vxor.u32 %v3420, 2147483648
    %v3422 = vmul.f32 %v3421, 1.442695
    %v3423 = vpow.pop %v3422
    %v3424 = vadd.f32 %v3423, 1.0
    %v3425 = vrcp.pop %v3424
    %v3426 = vmul.f32 %v3424, %v3425
    %v3427 = vsub.f32 1.0, %v3426
    %v3428 = vmul.f32 %v3425, %v3427
    %v3429 = vadd.f32 %v3425, %v3428
    %vm3430 = vweird.f32 %v3424
    %vm3431 = vweird.f32 %v3425
    %vm3432 = vmor %vm3430, %vm3431
    %v3433 = vsel %vm3432, %v3425, %v3429
    %v3434 = vand.u32 2147483647, %v3424
    %vm3435 = vcmp.eq.f32.partialorder %v3434, 8.507059e+37
    %v3436 = vand.u32 %v3424, 2147483648
    %v3437 = vor.u32 1.1754944e-38, %v3436
    %v3438 = vsel %vm3435, %v3437, %v3433
    %v3439 = vmul.f32 1.0, %v3438
    %v3440 = vadd.f32 %v3179, %v3398
    %v3441 = vxor.u32 %v3440, 2147483648
    %v3442 = vmul.f32 %v3441, 1.442695
    %v3443 = vpow.pop %v3442
    %v3444 = vadd.f32 %v3443, 1.0
    %v3445 = vrcp.pop %v3444
    %v3446 = vmul.f32 %v3444, %v3445
    %v3447 = vsub.f32 1.0, %v3446
    %v3448 = vmul.f32 %v3445, %v3447
    %v3449 = vadd.f32 %v3445, %v3448
    %vm3450 = vweird.f32 %v3444
    %vm3451 = vweird.f32 %v3445
    %vm3452 = vmor %vm3450, %vm3451
    %v3453 = vsel %vm3452, %v3445, %v3449
    %v3454 = vand.u32 2147483647, %v3444
    %vm3455 = vcmp.eq.f32.partialorder %v3454, 8.507059e+37
    %v3456 = vand.u32 %v3444, 2147483648
    %v3457 = vor.u32 1.1754944e-38, %v3456
    %v3458 = vsel %vm3455, %v3457, %v3453
    %v3459 = vmul.f32 1.0, %v3458
    %v3460 = vadd.f32 %v3418, %v3249
    %v3461 = vmul.f32 %v3439, %v3460
    %v3462 = vadd.f32 %v3180, %v3461
    %v3463 = vtanh.pop %v3462
    %v3464 = vsub.f32 1.0, %v3459
    %v3465 = vmul.f32 %v3464, %v3463
    %v3466 = vmul.f32 %v3459, %v3358
    %v3467 = vadd.f32 %v3465, %v3466
    %s3468 = scalar_lea.vmem [#allocation2], 8
    %3469 = vst [vmem:[%s3468] sm:$0xff] %v3467
    %3470 = vmatpush.msra.mxu0 %v3244
    %3471 = vmatpush.msra.mxu0 %v3241
    %3472 = vmatpush.msra.mxu0 %v3238
    %3473 = vmatpush.msra.mxu0 %v3235
    %3474 = vmatpush.msra.mxu0 %v3232
    %3475 = vmatpush.msra.mxu0 %v3229
    %3476 = vmatpush.msra.mxu0 %v3226
    %3477 = vmatpush.msra.mxu0 %v3223
    %3478 = vmatpush.msra.mxu0 %v3220
    %3479 = vmatpush.msra.mxu0 %v3217
    %3480 = vmatpush.msra.mxu0 %v3214
    %3481 = vmatpush.msra.mxu0 %v3211
    %3482 = vmatpush.msra.mxu0 %v3208
    %3483 = vmatpush.msra.mxu0 %v3205
    %3484 = vmatpush.msra.mxu0 %v3202
    %3485 = vmatpush.msra.mxu0 %v3199
    %3486 = vmatmul.f32.gmra.mxu0 %v3467
    %v3487 = vpop.f32.mrf.mxu0
    %v3488 = vadd.f32 0.0, %v3487
    %3489 = vdwg.mxu0
    %3490 = vmatpush.msra.mxu0 %v3245
    %3491 = vmatpush.msra.mxu0 %v3242
    %3492 = vmatpush.msra.mxu0 %v3239
    %3493 = vmatpush.msra.mxu0 %v3236
    %3494 = vmatpush.msra.mxu0 %v3233
    %3495 = vmatpush.msra.mxu0 %v3230
    %3496 = vmatpush.msra.mxu0 %v3227
    %3497 = vmatpush.msra.mxu0 %v3224
    %3498 = vmatpush.msra.mxu0 %v3221
    %3499 = vmatpush.msra.mxu0 %v3218
    %3500 = vmatpush.msra.mxu0 %v3215
    %3501 = vmatpush.msra.mxu0 %v3212
    %3502 = vmatpush.msra.mxu0 %v3209
    %3503 = vmatpush.msra.mxu0 %v3206
    %3504 = vmatpush.msra.mxu0 %v3203
    %3505 = vmatpush.msra.mxu0 %v3200
    %3506 = vmatmul.f32.gmra.mxu0 %v3467
    %v3507 = vpop.f32.mrf.mxu0
    %v3508 = vadd.f32 0.0, %v3507
    %3509 = vdwg.mxu0
    %3510 = vmatpush.msra.mxu0 %v3246
    %3511 = vmatpush.msra.mxu0 %v3243
    %3512 = vmatpush.msra.mxu0 %v3240
    %3513 = vmatpush.msra.mxu0 %v3237
    %3514 = vmatpush.msra.mxu0 %v3234
    %3515 = vmatpush.msra.mxu0 %v3231
    %3516 = vmatpush.msra.mxu0 %v3228
    %3517 = vmatpush.msra.mxu0 %v3225
    %3518 = vmatpush.msra.mxu0 %v3222
    %3519 = vmatpush.msra.mxu0 %v3219
    %3520 = vmatpush.msra.mxu0 %v3216
    %3521 = vmatpush.msra.mxu0 %v3213
    %3522 = vmatpush.msra.mxu0 %v3210
    %3523 = vmatpush.msra.mxu0 %v3207
    %3524 = vmatpush.msra.mxu0 %v3204
    %3525 = vmatpush.msra.mxu0 %v3201
    %3526 = vmatmul.f32.gmra.mxu0 %v3467
    %v3527 = vpop.f32.mrf.mxu0
    %v3528 = vadd.f32 0.0, %v3527
    %3529 = vdwg.mxu0
    %v3530 = vadd.f32 %v3181, %v3488
    %v3531 = vxor.u32 %v3530, 2147483648
    %v3532 = vmul.f32 %v3531, 1.442695
    %v3533 = vpow.pop %v3532
    %v3534 = vadd.f32 %v3533, 1.0
    %v3535 = vrcp.pop %v3534
    %v3536 = vmul.f32 %v3534, %v3535
    %v3537 = vsub.f32 1.0, %v3536
    %v3538 = vmul.f32 %v3535, %v3537
    %v3539 = vadd.f32 %v3535, %v3538
    %vm3540 = vweird.f32 %v3534
    %vm3541 = vweird.f32 %v3535
    %vm3542 = vmor %vm3540, %vm3541
    %v3543 = vsel %vm3542, %v3535, %v3539
    %v3544 = vand.u32 2147483647, %v3534
    %vm3545 = vcmp.eq.f32.partialorder %v3544, 8.507059e+37
    %v3546 = vand.u32 %v3534, 2147483648
    %v3547 = vor.u32 1.1754944e-38, %v3546
    %v3548 = vsel %vm3545, %v3547, %v3543
    %v3549 = vmul.f32 1.0, %v3548
    %v3550 = vadd.f32 %v3182, %v3508
    %v3551 = vxor.u32 %v3550, 2147483648
    %v3552 = vmul.f32 %v3551, 1.442695
    %v3553 = vpow.pop %v3552
    %v3554 = vadd.f32 %v3553, 1.0
    %v3555 = vrcp.pop %v3554
    %v3556 = vmul.f32 %v3554, %v3555
    %v3557 = vsub.f32 1.0, %v3556
    %v3558 = vmul.f32 %v3555, %v3557
    %v3559 = vadd.f32 %v3555, %v3558
    %vm3560 = vweird.f32 %v3554
    %vm3561 = vweird.f32 %v3555
    %vm3562 = vmor %vm3560, %vm3561
    %v3563 = vsel %vm3562, %v3555, %v3559
    %v3564 = vand.u32 2147483647, %v3554
    %vm3565 = vcmp.eq.f32.partialorder %v3564, 8.507059e+37
    %v3566 = vand.u32 %v3554, 2147483648
    %v3567 = vor.u32 1.1754944e-38, %v3566
    %v3568 = vsel %vm3565, %v3567, %v3563
    %v3569 = vmul.f32 1.0, %v3568
    %v3570 = vadd.f32 %v3528, %v3249
    %v3571 = vmul.f32 %v3549, %v3570
    %v3572 = vadd.f32 %v3183, %v3571
    %v3573 = vtanh.pop %v3572
    %v3574 = vsub.f32 1.0, %v3569
    %v3575 = vmul.f32 %v3574, %v3573
    %v3576 = vmul.f32 %v3569, %v3467
    %v3577 = vadd.f32 %v3575, %v3576
    %s3578 = scalar_lea.vmem [#allocation2], 16
    %3579 = vst [vmem:[%s3578] sm:$0xff] %v3577
    %3580 = vmatpush.msra.mxu0 %v3244
    %3581 = vmatpush.msra.mxu0 %v3241
    %3582 = vmatpush.msra.mxu0 %v3238
    %3583 = vmatpush.msra.mxu0 %v3235
    %3584 = vmatpush.msra.mxu0 %v3232
    %3585 = vmatpush.msra.mxu0 %v3229
    %3586 = vmatpush.msra.mxu0 %v3226
    %3587 = vmatpush.msra.mxu0 %v3223
    %3588 = vmatpush.msra.mxu0 %v3220
    %3589 = vmatpush.msra.mxu0 %v3217
    %3590 = vmatpush.msra.mxu0 %v3214
    %3591 = vmatpush.msra.mxu0 %v3211
    %3592 = vmatpush.msra.mxu0 %v3208
    %3593 = vmatpush.msra.mxu0 %v3205
    %3594 = vmatpush.msra.mxu0 %v3202
    %3595 = vmatpush.msra.mxu0 %v3199
    %3596 = vmatmul.f32.gmra.mxu0 %v3577
    %v3597 = vpop.f32.mrf.mxu0
    %v3598 = vadd.f32 0.0, %v3597
    %3599 = vdwg.mxu0
    %3600 = vmatpush.msra.mxu0 %v3245
    %3601 = vmatpush.msra.mxu0 %v3242
    %3602 = vmatpush.msra.mxu0 %v3239
    %3603 = vmatpush.msra.mxu0 %v3236
    %3604 = vmatpush.msra.mxu0 %v3233
    %3605 = vmatpush.msra.mxu0 %v3230
    %3606 = vmatpush.msra.mxu0 %v3227
    %3607 = vmatpush.msra.mxu0 %v3224
    %3608 = vmatpush.msra.mxu0 %v3221
    %3609 = vmatpush.msra.mxu0 %v3218
    %3610 = vmatpush.msra.mxu0 %v3215
    %3611 = vmatpush.msra.mxu0 %v3212
    %3612 = vmatpush.msra.mxu0 %v3209
    %3613 = vmatpush.msra.mxu0 %v3206
    %3614 = vmatpush.msra.mxu0 %v3203
    %3615 = vmatpush.msra.mxu0 %v3200
    %3616 = vmatmul.f32.gmra.mxu0 %v3577
    %v3617 = vpop.f32.mrf.mxu0
    %v3618 = vadd.f32 0.0, %v3617
    %3619 = vdwg.mxu0
    %3620 = vmatpush.msra.mxu0 %v3246
    %3621 = vmatpush.msra.mxu0 %v3243
    %3622 = vmatpush.msra.mxu0 %v3240
    %3623 = vmatpush.msra.mxu0 %v3237
    %3624 = vmatpush.msra.mxu0 %v3234
    %3625 = vmatpush.msra.mxu0 %v3231
    %3626 = vmatpush.msra.mxu0 %v3228
    %3627 = vmatpush.msra.mxu0 %v3225
    %3628 = vmatpush.msra.mxu0 %v3222
    %3629 = vmatpush.msra.mxu0 %v3219
    %3630 = vmatpush.msra.mxu0 %v3216
    %3631 = vmatpush.msra.mxu0 %v3213
    %3632 = vmatpush.msra.mxu0 %v3210
    %3633 = vmatpush.msra.mxu0 %v3207
    %3634 = vmatpush.msra.mxu0 %v3204
    %3635 = vmatpush.msra.mxu0 %v3201
    %3636 = vmatmul.f32.gmra.mxu0 %v3577
    %v3637 = vpop.f32.mrf.mxu0
    %v3638 = vadd.f32 0.0, %v3637
    %3639 = vdwg.mxu0
    %v3640 = vadd.f32 %v3184, %v3598
    %v3641 = vxor.u32 %v3640, 2147483648
    %v3642 = vmul.f32 %v3641, 1.442695
    %v3643 = vpow.pop %v3642
    %v3644 = vadd.f32 %v3643, 1.0
    %v3645 = vrcp.pop %v3644
    %v3646 = vmul.f32 %v3644, %v3645
    %v3647 = vsub.f32 1.0, %v3646
    %v3648 = vmul.f32 %v3645, %v3647
    %v3649 = vadd.f32 %v3645, %v3648
    %vm3650 = vweird.f32 %v3644
    %vm3651 = vweird.f32 %v3645
    %vm3652 = vmor %vm3650, %vm3651
    %v3653 = vsel %vm3652, %v3645, %v3649
    %v3654 = vand.u32 2147483647, %v3644
    %vm3655 = vcmp.eq.f32.partialorder %v3654, 8.507059e+37
    %v3656 = vand.u32 %v3644, 2147483648
    %v3657 = vor.u32 1.1754944e-38, %v3656
    %v3658 = vsel %vm3655, %v3657, %v3653
    %v3659 = vmul.f32 1.0, %v3658
    %v3660 = vadd.f32 %v3185, %v3618
    %v3661 = vxor.u32 %v3660, 2147483648
    %v3662 = vmul.f32 %v3661, 1.442695
    %v3663 = vpow.pop %v3662
    %v3664 = vadd.f32 %v3663, 1.0
    %v3665 = vrcp.pop %v3664
    %v3666 = vmul.f32 %v3664, %v3665
    %v3667 = vsub.f32 1.0, %v3666
    %v3668 = vmul.f32 %v3665, %v3667
    %v3669 = vadd.f32 %v3665, %v3668
    %vm3670 = vweird.f32 %v3664
    %vm3671 = vweird.f32 %v3665
    %vm3672 = vmor %vm3670, %vm3671
    %v3673 = vsel %vm3672, %v3665, %v3669
    %v3674 = vand.u32 2147483647, %v3664
    %vm3675 = vcmp.eq.f32.partialorder %v3674, 8.507059e+37
    %v3676 = vand.u32 %v3664, 2147483648
    %v3677 = vor.u32 1.1754944e-38, %v3676
    %v3678 = vsel %vm3675, %v3677, %v3673
    %v3679 = vmul.f32 1.0, %v3678
    %v3680 = vadd.f32 %v3638, %v3249
    %v3681 = vmul.f32 %v3659, %v3680
    %v3682 = vadd.f32 %v3186, %v3681
    %v3683 = vtanh.pop %v3682
    %v3684 = vsub.f32 1.0, %v3679
    %v3685 = vmul.f32 %v3684, %v3683
    %v3686 = vmul.f32 %v3679, %v3577
    %v3687 = vadd.f32 %v3685, %v3686
    %s3688 = scalar_lea.vmem [#allocation2], 24
    %3689 = vst [vmem:[%s3688] sm:$0xff] %v3687
    %3690 = vmatpush.msra.mxu0 %v3244
    %3691 = vmatpush.msra.mxu0 %v3241
    %3692 = vmatpush.msra.mxu0 %v3238
    %3693 = vmatpush.msra.mxu0 %v3235
    %3694 = vmatpush.msra.mxu0 %v3232
    %3695 = vmatpush.msra.mxu0 %v3229
    %3696 = vmatpush.msra.mxu0 %v3226
    %3697 = vmatpush.msra.mxu0 %v3223
    %3698 = vmatpush.msra.mxu0 %v3220
    %3699 = vmatpush.msra.mxu0 %v3217
    %3700 = vmatpush.msra.mxu0 %v3214
    %3701 = vmatpush.msra.mxu0 %v3211
    %3702 = vmatpush.msra.mxu0 %v3208
    %3703 = vmatpush.msra.mxu0 %v3205
    %3704 = vmatpush.msra.mxu0 %v3202
    %3705 = vmatpush.msra.mxu0 %v3199
    %3706 = vmatmul.f32.gmra.mxu0 %v3687
    %v3707 = vpop.f32.mrf.mxu0
    %v3708 = vadd.f32 0.0, %v3707
    %3709 = vdwg.mxu0
    %3710 = vmatpush.msra.mxu0 %v3245
    %3711 = vmatpush.msra.mxu0 %v3242
    %3712 = vmatpush.msra.mxu0 %v3239
    %3713 = vmatpush.msra.mxu0 %v3236
    %3714 = vmatpush.msra.mxu0 %v3233
    %3715 = vmatpush.msra.mxu0 %v3230
    %3716 = vmatpush.msra.mxu0 %v3227
    %3717 = vmatpush.msra.mxu0 %v3224
    %3718 = vmatpush.msra.mxu0 %v3221
    %3719 = vmatpush.msra.mxu0 %v3218
    %3720 = vmatpush.msra.mxu0 %v3215
    %3721 = vmatpush.msra.mxu0 %v3212
    %3722 = vmatpush.msra.mxu0 %v3209
    %3723 = vmatpush.msra.mxu0 %v3206
    %3724 = vmatpush.msra.mxu0 %v3203
    %3725 = vmatpush.msra.mxu0 %v3200
    %3726 = vmatmul.f32.gmra.mxu0 %v3687
    %v3727 = vpop.f32.mrf.mxu0
    %v3728 = vadd.f32 0.0, %v3727
    %3729 = vdwg.mxu0
    %3730 = vmatpush.msra.mxu0 %v3246
    %3731 = vmatpush.msra.mxu0 %v3243
    %3732 = vmatpush.msra.mxu0 %v3240
    %3733 = vmatpush.msra.mxu0 %v3237
    %3734 = vmatpush.msra.mxu0 %v3234
    %3735 = vmatpush.msra.mxu0 %v3231
    %3736 = vmatpush.msra.mxu0 %v3228
    %3737 = vmatpush.msra.mxu0 %v3225
    %3738 = vmatpush.msra.mxu0 %v3222
    %3739 = vmatpush.msra.mxu0 %v3219
    %3740 = vmatpush.msra.mxu0 %v3216
    %3741 = vmatpush.msra.mxu0 %v3213
    %3742 = vmatpush.msra.mxu0 %v3210
    %3743 = vmatpush.msra.mxu0 %v3207
    %3744 = vmatpush.msra.mxu0 %v3204
    %3745 = vmatpush.msra.mxu0 %v3201
    %3746 = vmatmul.f32.gmra.mxu0 %v3687
    %v3747 = vpop.f32.mrf.mxu0
    %v3748 = vadd.f32 0.0, %v3747
    %3749 = vdwg.mxu0
    %v3750 = vadd.f32 %v3187, %v3708
    %v3751 = vxor.u32 %v3750, 2147483648
    %v3752 = vmul.f32 %v3751, 1.442695
    %v3753 = vpow.pop %v3752
    %v3754 = vadd.f32 %v3753, 1.0
    %v3755 = vrcp.pop %v3754
    %v3756 = vmul.f32 %v3754, %v3755
    %v3757 = vsub.f32 1.0, %v3756
    %v3758 = vmul.f32 %v3755, %v3757
    %v3759 = vadd.f32 %v3755, %v3758
    %vm3760 = vweird.f32 %v3754
    %vm3761 = vweird.f32 %v3755
    %vm3762 = vmor %vm3760, %vm3761
    %v3763 = vsel %vm3762, %v3755, %v3759
    %v3764 = vand.u32 2147483647, %v3754
    %vm3765 = vcmp.eq.f32.partialorder %v3764, 8.507059e+37
    %v3766 = vand.u32 %v3754, 2147483648
    %v3767 = vor.u32 1.1754944e-38, %v3766
    %v3768 = vsel %vm3765, %v3767, %v3763
    %v3769 = vmul.f32 1.0, %v3768
    %v3770 = vadd.f32 %v3188, %v3728
    %v3771 = vxor.u32 %v3770, 2147483648
    %v3772 = vmul.f32 %v3771, 1.442695
    %v3773 = vpow.pop %v3772
    %v3774 = vadd.f32 %v3773, 1.0
    %v3775 = vrcp.pop %v3774
    %v3776 = vmul.f32 %v3774, %v3775
    %v3777 = vsub.f32 1.0, %v3776
    %v3778 = vmul.f32 %v3775, %v3777
    %v3779 = vadd.f32 %v3775, %v3778
    %vm3780 = vweird.f32 %v3774
    %vm3781 = vweird.f32 %v3775
    %vm3782 = vmor %vm3780, %vm3781
    %v3783 = vsel %vm3782, %v3775, %v3779
    %v3784 = vand.u32 2147483647, %v3774
    %vm3785 = vcmp.eq.f32.partialorder %v3784, 8.507059e+37
    %v3786 = vand.u32 %v3774, 2147483648
    %v3787 = vor.u32 1.1754944e-38, %v3786
    %v3788 = vsel %vm3785, %v3787, %v3783
    %v3789 = vmul.f32 1.0, %v3788
    %v3790 = vadd.f32 %v3748, %v3249
    %v3791 = vmul.f32 %v3769, %v3790
    %v3792 = vadd.f32 %v3189, %v3791
    %v3793 = vtanh.pop %v3792
    %v3794 = vsub.f32 1.0, %v3789
    %v3795 = vmul.f32 %v3794, %v3793
    %v3796 = vmul.f32 %v3789, %v3687
    %v3797 = vadd.f32 %v3795, %v3796
    %s3798 = scalar_lea.vmem [#allocation2], 32
    %3799 = vst [vmem:[%s3798] sm:$0xff] %v3797
    %3800 = vmatpush.msra.mxu0 %v3244
    %3801 = vmatpush.msra.mxu0 %v3241
    %3802 = vmatpush.msra.mxu0 %v3238
    %3803 = vmatpush.msra.mxu0 %v3235
    %3804 = vmatpush.msra.mxu0 %v3232
    %3805 = vmatpush.msra.mxu0 %v3229
    %3806 = vmatpush.msra.mxu0 %v3226
    %3807 = vmatpush.msra.mxu0 %v3223
    %3808 = vmatpush.msra.mxu0 %v3220
    %3809 = vmatpush.msra.mxu0 %v3217
    %3810 = vmatpush.msra.mxu0 %v3214
    %3811 = vmatpush.msra.mxu0 %v3211
    %3812 = vmatpush.msra.mxu0 %v3208
    %3813 = vmatpush.msra.mxu0 %v3205
    %3814 = vmatpush.msra.mxu0 %v3202
    %3815 = vmatpush.msra.mxu0 %v3199
    %3816 = vmatmul.f32.gmra.mxu0 %v3797
    %v3817 = vpop.f32.mrf.mxu0
    %v3818 = vadd.f32 0.0, %v3817
    %3819 = vdwg.mxu0
    %3820 = vmatpush.msra.mxu0 %v3245
    %3821 = vmatpush.msra.mxu0 %v3242
    %3822 = vmatpush.msra.mxu0 %v3239
    %3823 = vmatpush.msra.mxu0 %v3236
    %3824 = vmatpush.msra.mxu0 %v3233
    %3825 = vmatpush.msra.mxu0 %v3230
    %3826 = vmatpush.msra.mxu0 %v3227
    %3827 = vmatpush.msra.mxu0 %v3224
    %3828 = vmatpush.msra.mxu0 %v3221
    %3829 = vmatpush.msra.mxu0 %v3218
    %3830 = vmatpush.msra.mxu0 %v3215
    %3831 = vmatpush.msra.mxu0 %v3212
    %3832 = vmatpush.msra.mxu0 %v3209
    %3833 = vmatpush.msra.mxu0 %v3206
    %3834 = vmatpush.msra.mxu0 %v3203
    %3835 = vmatpush.msra.mxu0 %v3200
    %3836 = vmatmul.f32.gmra.mxu0 %v3797
    %v3837 = vpop.f32.mrf.mxu0
    %v3838 = vadd.f32 0.0, %v3837
    %3839 = vdwg.mxu0
    %3840 = vmatpush.msra.mxu0 %v3246
    %3841 = vmatpush.msra.mxu0 %v3243
    %3842 = vmatpush.msra.mxu0 %v3240
    %3843 = vmatpush.msra.mxu0 %v3237
    %3844 = vmatpush.msra.mxu0 %v3234
    %3845 = vmatpush.msra.mxu0 %v3231
    %3846 = vmatpush.msra.mxu0 %v3228
    %3847 = vmatpush.msra.mxu0 %v3225
    %3848 = vmatpush.msra.mxu0 %v3222
    %3849 = vmatpush.msra.mxu0 %v3219
    %3850 = vmatpush.msra.mxu0 %v3216
    %3851 = vmatpush.msra.mxu0 %v3213
    %3852 = vmatpush.msra.mxu0 %v3210
    %3853 = vmatpush.msra.mxu0 %v3207
    %3854 = vmatpush.msra.mxu0 %v3204
    %3855 = vmatpush.msra.mxu0 %v3201
    %3856 = vmatmul.f32.gmra.mxu0 %v3797
    %v3857 = vpop.f32.mrf.mxu0
    %v3858 = vadd.f32 0.0, %v3857
    %3859 = vdwg.mxu0
    %v3860 = vadd.f32 %v3190, %v3818
    %v3861 = vxor.u32 %v3860, 2147483648
    %v3862 = vmul.f32 %v3861, 1.442695
    %v3863 = vpow.pop %v3862
    %v3864 = vadd.f32 %v3863, 1.0
    %v3865 = vrcp.pop %v3864
    %v3866 = vmul.f32 %v3864, %v3865
    %v3867 = vsub.f32 1.0, %v3866
    %v3868 = vmul.f32 %v3865, %v3867
    %v3869 = vadd.f32 %v3865, %v3868
    %vm3870 = vweird.f32 %v3864
    %vm3871 = vweird.f32 %v3865
    %vm3872 = vmor %vm3870, %vm3871
    %v3873 = vsel %vm3872, %v3865, %v3869
    %v3874 = vand.u32 2147483647, %v3864
    %vm3875 = vcmp.eq.f32.partialorder %v3874, 8.507059e+37
    %v3876 = vand.u32 %v3864, 2147483648
    %v3877 = vor.u32 1.1754944e-38, %v3876
    %v3878 = vsel %vm3875, %v3877, %v3873
    %v3879 = vmul.f32 1.0, %v3878
    %v3880 = vadd.f32 %v3191, %v3838
    %v3881 = vxor.u32 %v3880, 2147483648
    %v3882 = vmul.f32 %v3881, 1.442695
    %v3883 = vpow.pop %v3882
    %v3884 = vadd.f32 %v3883, 1.0
    %v3885 = vrcp.pop %v3884
    %v3886 = vmul.f32 %v3884, %v3885
    %v3887 = vsub.f32 1.0, %v3886
    %v3888 = vmul.f32 %v3885, %v3887
    %v3889 = vadd.f32 %v3885, %v3888
    %vm3890 = vweird.f32 %v3884
    %vm3891 = vweird.f32 %v3885
    %vm3892 = vmor %vm3890, %vm3891
    %v3893 = vsel %vm3892, %v3885, %v3889
    %v3894 = vand.u32 2147483647, %v3884
    %vm3895 = vcmp.eq.f32.partialorder %v3894, 8.507059e+37
    %v3896 = vand.u32 %v3884, 2147483648
    %v3897 = vor.u32 1.1754944e-38, %v3896
    %v3898 = vsel %vm3895, %v3897, %v3893
    %v3899 = vmul.f32 1.0, %v3898
    %v3900 = vadd.f32 %v3858, %v3249
    %v3901 = vmul.f32 %v3879, %v3900
    %v3902 = vadd.f32 %v3192, %v3901
    %v3903 = vtanh.pop %v3902
    %v3904 = vsub.f32 1.0, %v3899
    %v3905 = vmul.f32 %v3904, %v3903
    %v3906 = vmul.f32 %v3899, %v3797
    %v3907 = vadd.f32 %v3905, %v3906
    %s3908 = scalar_lea.vmem [#allocation2], 40
    %3909 = vst [vmem:[%s3908] sm:$0xff] %v3907
    %3910 = vmatpush.msra.mxu0 %v3244
    %3911 = vmatpush.msra.mxu0 %v3241
    %3912 = vmatpush.msra.mxu0 %v3238
    %3913 = vmatpush.msra.mxu0 %v3235
    %3914 = vmatpush.msra.mxu0 %v3232
    %3915 = vmatpush.msra.mxu0 %v3229
    %3916 = vmatpush.msra.mxu0 %v3226
    %3917 = vmatpush.msra.mxu0 %v3223
    %3918 = vmatpush.msra.mxu0 %v3220
    %3919 = vmatpush.msra.mxu0 %v3217
    %3920 = vmatpush.msra.mxu0 %v3214
    %3921 = vmatpush.msra.mxu0 %v3211
    %3922 = vmatpush.msra.mxu0 %v3208
    %3923 = vmatpush.msra.mxu0 %v3205
    %3924 = vmatpush.msra.mxu0 %v3202
    %3925 = vmatpush.msra.mxu0 %v3199
    %3926 = vmatmul.f32.gmra.mxu0 %v3907
    %v3927 = vpop.f32.mrf.mxu0
    %v3928 = vadd.f32 0.0, %v3927
    %3929 = vdwg.mxu0
    %3930 = vmatpush.msra.mxu0 %v3245
    %3931 = vmatpush.msra.mxu0 %v3242
    %3932 = vmatpush.msra.mxu0 %v3239
    %3933 = vmatpush.msra.mxu0 %v3236
    %3934 = vmatpush.msra.mxu0 %v3233
    %3935 = vmatpush.msra.mxu0 %v3230
    %3936 = vmatpush.msra.mxu0 %v3227
    %3937 = vmatpush.msra.mxu0 %v3224
    %3938 = vmatpush.msra.mxu0 %v3221
    %3939 = vmatpush.msra.mxu0 %v3218
    %3940 = vmatpush.msra.mxu0 %v3215
    %3941 = vmatpush.msra.mxu0 %v3212
    %3942 = vmatpush.msra.mxu0 %v3209
    %3943 = vmatpush.msra.mxu0 %v3206
    %3944 = vmatpush.msra.mxu0 %v3203
    %3945 = vmatpush.msra.mxu0 %v3200
    %3946 = vmatmul.f32.gmra.mxu0 %v3907
    %v3947 = vpop.f32.mrf.mxu0
    %v3948 = vadd.f32 0.0, %v3947
    %3949 = vdwg.mxu0
    %3950 = vmatpush.msra.mxu0 %v3246
    %3951 = vmatpush.msra.mxu0 %v3243
    %3952 = vmatpush.msra.mxu0 %v3240
    %3953 = vmatpush.msra.mxu0 %v3237
    %3954 = vmatpush.msra.mxu0 %v3234
    %3955 = vmatpush.msra.mxu0 %v3231
    %3956 = vmatpush.msra.mxu0 %v3228
    %3957 = vmatpush.msra.mxu0 %v3225
    %3958 = vmatpush.msra.mxu0 %v3222
    %3959 = vmatpush.msra.mxu0 %v3219
    %3960 = vmatpush.msra.mxu0 %v3216
    %3961 = vmatpush.msra.mxu0 %v3213
    %3962 = vmatpush.msra.mxu0 %v3210
    %3963 = vmatpush.msra.mxu0 %v3207
    %3964 = vmatpush.msra.mxu0 %v3204
    %3965 = vmatpush.msra.mxu0 %v3201
    %3966 = vmatmul.f32.gmra.mxu0 %v3907
    %v3967 = vpop.f32.mrf.mxu0
    %v3968 = vadd.f32 0.0, %v3967
    %3969 = vdwg.mxu0
    %v3970 = vadd.f32 %v3193, %v3928
    %v3971 = vxor.u32 %v3970, 2147483648
    %v3972 = vmul.f32 %v3971, 1.442695
    %v3973 = vpow.pop %v3972
    %v3974 = vadd.f32 %v3973, 1.0
    %v3975 = vrcp.pop %v3974
    %v3976 = vmul.f32 %v3974, %v3975
    %v3977 = vsub.f32 1.0, %v3976
    %v3978 = vmul.f32 %v3975, %v3977
    %v3979 = vadd.f32 %v3975, %v3978
    %vm3980 = vweird.f32 %v3974
    %vm3981 = vweird.f32 %v3975
    %vm3982 = vmor %vm3980, %vm3981
    %v3983 = vsel %vm3982, %v3975, %v3979
    %v3984 = vand.u32 2147483647, %v3974
    %vm3985 = vcmp.eq.f32.partialorder %v3984, 8.507059e+37
    %v3986 = vand.u32 %v3974, 2147483648
    %v3987 = vor.u32 1.1754944e-38, %v3986
    %v3988 = vsel %vm3985, %v3987, %v3983
    %v3989 = vmul.f32 1.0, %v3988
    %v3990 = vadd.f32 %v3194, %v3948
    %v3991 = vxor.u32 %v3990, 2147483648
    %v3992 = vmul.f32 %v3991, 1.442695
    %v3993 = vpow.pop %v3992
    %v3994 = vadd.f32 %v3993, 1.0
    %v3995 = vrcp.pop %v3994
    %v3996 = vmul.f32 %v3994, %v3995
    %v3997 = vsub.f32 1.0, %v3996
    %v3998 = vmul.f32 %v3995, %v3997
    %v3999 = vadd.f32 %v3995, %v3998
    %vm4000 = vweird.f32 %v3994
    %vm4001 = vweird.f32 %v3995
    %vm4002 = vmor %vm4000, %vm4001
    %v4003 = vsel %vm4002, %v3995, %v3999
    %v4004 = vand.u32 2147483647, %v3994
    %vm4005 = vcmp.eq.f32.partialorder %v4004, 8.507059e+37
    %v4006 = vand.u32 %v3994, 2147483648
    %v4007 = vor.u32 1.1754944e-38, %v4006
    %v4008 = vsel %vm4005, %v4007, %v4003
    %v4009 = vmul.f32 1.0, %v4008
    %v4010 = vadd.f32 %v3968, %v3249
    %v4011 = vmul.f32 %v3989, %v4010
    %v4012 = vadd.f32 %v3195, %v4011
    %v4013 = vtanh.pop %v4012
    %v4014 = vsub.f32 1.0, %v4009
    %v4015 = vmul.f32 %v4014, %v4013
    %v4016 = vmul.f32 %v4009, %v3907
    %v4017 = vadd.f32 %v4015, %v4016
    %s4018 = scalar_lea.vmem [#allocation2], 48
    %4019 = vst [vmem:[%s4018] sm:$0xff] %v4017
    %4020 = vmatpush.msra.mxu0 %v3244
    %4021 = vmatpush.msra.mxu0 %v3241
    %4022 = vmatpush.msra.mxu0 %v3238
    %4023 = vmatpush.msra.mxu0 %v3235
    %4024 = vmatpush.msra.mxu0 %v3232
    %4025 = vmatpush.msra.mxu0 %v3229
    %4026 = vmatpush.msra.mxu0 %v3226
    %4027 = vmatpush.msra.mxu0 %v3223
    %4028 = vmatpush.msra.mxu0 %v3220
    %4029 = vmatpush.msra.mxu0 %v3217
    %4030 = vmatpush.msra.mxu0 %v3214
    %4031 = vmatpush.msra.mxu0 %v3211
    %4032 = vmatpush.msra.mxu0 %v3208
    %4033 = vmatpush.msra.mxu0 %v3205
    %4034 = vmatpush.msra.mxu0 %v3202
    %4035 = vmatpush.msra.mxu0 %v3199
    %4036 = vmatmul.f32.gmra.mxu0 %v4017
    %v4037 = vpop.f32.mrf.mxu0
    %v4038 = vadd.f32 0.0, %v4037
    %4039 = vdwg.mxu0
    %4040 = vmatpush.msra.mxu0 %v3245
    %4041 = vmatpush.msra.mxu0 %v3242
    %4042 = vmatpush.msra.mxu0 %v3239
    %4043 = vmatpush.msra.mxu0 %v3236
    %4044 = vmatpush.msra.mxu0 %v3233
    %4045 = vmatpush.msra.mxu0 %v3230
    %4046 = vmatpush.msra.mxu0 %v3227
    %4047 = vmatpush.msra.mxu0 %v3224
    %4048 = vmatpush.msra.mxu0 %v3221
    %4049 = vmatpush.msra.mxu0 %v3218
    %4050 = vmatpush.msra.mxu0 %v3215
    %4051 = vmatpush.msra.mxu0 %v3212
    %4052 = vmatpush.msra.mxu0 %v3209
    %4053 = vmatpush.msra.mxu0 %v3206
    %4054 = vmatpush.msra.mxu0 %v3203
    %4055 = vmatpush.msra.mxu0 %v3200
    %4056 = vmatmul.f32.gmra.mxu0 %v4017
    %v4057 = vpop.f32.mrf.mxu0
    %v4058 = vadd.f32 0.0, %v4057
    %4059 = vdwg.mxu0
    %4060 = vmatpush.msra.mxu0 %v3246
    %4061 = vmatpush.msra.mxu0 %v3243
    %4062 = vmatpush.msra.mxu0 %v3240
    %4063 = vmatpush.msra.mxu0 %v3237
    %4064 = vmatpush.msra.mxu0 %v3234
    %4065 = vmatpush.msra.mxu0 %v3231
    %4066 = vmatpush.msra.mxu0 %v3228
    %4067 = vmatpush.msra.mxu0 %v3225
    %4068 = vmatpush.msra.mxu0 %v3222
    %4069 = vmatpush.msra.mxu0 %v3219
    %4070 = vmatpush.msra.mxu0 %v3216
    %4071 = vmatpush.msra.mxu0 %v3213
    %4072 = vmatpush.msra.mxu0 %v3210
    %4073 = vmatpush.msra.mxu0 %v3207
    %4074 = vmatpush.msra.mxu0 %v3204
    %4075 = vmatpush.msra.mxu0 %v3201
    %4076 = vmatmul.f32.gmra.mxu0 %v4017
    %v4077 = vpop.f32.mrf.mxu0
    %v4078 = vadd.f32 0.0, %v4077
    %4079 = vdwg.mxu0
    %v4080 = vadd.f32 %v3196, %v4038
    %v4081 = vxor.u32 %v4080, 2147483648
    %v4082 = vmul.f32 %v4081, 1.442695
    %v4083 = vpow.pop %v4082
    %v4084 = vadd.f32 %v4083, 1.0
    %v4085 = vrcp.pop %v4084
    %v4086 = vmul.f32 %v4084, %v4085
    %v4087 = vsub.f32 1.0, %v4086
    %v4088 = vmul.f32 %v4085, %v4087
    %v4089 = vadd.f32 %v4085, %v4088
    %vm4090 = vweird.f32 %v4084
    %vm4091 = vweird.f32 %v4085
    %vm4092 = vmor %vm4090, %vm4091
    %v4093 = vsel %vm4092, %v4085, %v4089
    %v4094 = vand.u32 2147483647, %v4084
    %vm4095 = vcmp.eq.f32.partialorder %v4094, 8.507059e+37
    %v4096 = vand.u32 %v4084, 2147483648
    %v4097 = vor.u32 1.1754944e-38, %v4096
    %v4098 = vsel %vm4095, %v4097, %v4093
    %v4099 = vmul.f32 1.0, %v4098
    %v4100 = vadd.f32 %v3197, %v4058
    %v4101 = vxor.u32 %v4100, 2147483648
    %v4102 = vmul.f32 %v4101, 1.442695
    %v4103 = vpow.pop %v4102
    %v4104 = vadd.f32 %v4103, 1.0
    %v4105 = vrcp.pop %v4104
    %v4106 = vmul.f32 %v4104, %v4105
    %v4107 = vsub.f32 1.0, %v4106
    %v4108 = vmul.f32 %v4105, %v4107
    %v4109 = vadd.f32 %v4105, %v4108
    %vm4110 = vweird.f32 %v4104
    %vm4111 = vweird.f32 %v4105
    %vm4112 = vmor %vm4110, %vm4111
    %v4113 = vsel %vm4112, %v4105, %v4109
    %v4114 = vand.u32 2147483647, %v4104
    %vm4115 = vcmp.eq.f32.partialorder %v4114, 8.507059e+37
    %v4116 = vand.u32 %v4104, 2147483648
    %v4117 = vor.u32 1.1754944e-38, %v4116
    %v4118 = vsel %vm4115, %v4117, %v4113
    %v4119 = vmul.f32 1.0, %v4118
    %v4120 = vadd.f32 %v4078, %v3249
    %v4121 = vmul.f32 %v4099, %v4120
    %v4122 = vadd.f32 %v3198, %v4121
    %v4123 = vtanh.pop %v4122
    %v4124 = vsub.f32 1.0, %v4119
    %v4125 = vmul.f32 %v4124, %v4123
    %v4126 = vmul.f32 %v4119, %v4017
    %v4127 = vadd.f32 %v4125, %v4126
    %s4128 = scalar_lea.vmem [#allocation2], 56
    %4129 = vst [vmem:[%s4128] sm:$0xff] %v4127
    %v4130 = vld [vmem:[#allocation2] sm:$0xff]
    %v4131 = vld [vmem:[#allocation2 + $0x8] sm:$0xff]
    %v4132 = vld [vmem:[#allocation2 + $0x10] sm:$0xff]
    %v4133 = vld [vmem:[#allocation2 + $0x18] sm:$0xff]
    %v4134 = vld [vmem:[#allocation2 + $0x20] sm:$0xff]
    %v4135 = vld [vmem:[#allocation2 + $0x28] sm:$0xff]
    %v4136 = vld [vmem:[#allocation2 + $0x30] sm:$0xff]
    %v4137 = vld [vmem:[#allocation2 + $0x38] sm:$0xff]
    %v4138 = vld [vmem:[#allocation23] sm:$0xff]
    %v4139 = vld [vmem:[#allocation23 + $0x8] sm:$0xff]
    %v4140 = vld [vmem:[#allocation23 + $0x10] sm:$0xff]
    %v4141 = vld [vmem:[#allocation23 + $0x18] sm:$0xff]
    %v4142 = vld [vmem:[#allocation23 + $0x20] sm:$0xff]
    %v4143 = vld [vmem:[#allocation23 + $0x28] sm:$0xff]
    %v4144 = vld [vmem:[#allocation23 + $0x30] sm:$0xff]
    %v4145 = vld [vmem:[#allocation23 + $0x38] sm:$0xff]
    %v4146 = vld [vmem:[#allocation23 + $0x40] sm:$0xff]
    %v4147 = vld [vmem:[#allocation23 + $0x48] sm:$0xff]
    %v4148 = vld [vmem:[#allocation23 + $0x50] sm:$0xff]
    %v4149 = vld [vmem:[#allocation23 + $0x58] sm:$0xff]
    %v4150 = vld [vmem:[#allocation23 + $0x60] sm:$0xff]
    %v4151 = vld [vmem:[#allocation23 + $0x68] sm:$0xff]
    %v4152 = vld [vmem:[#allocation23 + $0x70] sm:$0xff]
    %v4153 = vld [vmem:[#allocation23 + $0x78] sm:$0xff]
    %v4154 = vld [vmem:[#allocation24] sm:$0x1]
    %v4156 = vperm.slane %v4154, 0
    %4158 = vmatpush.msra.mxu0 %v4153
    %4159 = vmatpush.msra.mxu0 %v4152
    %4160 = vmatpush.msra.mxu0 %v4151
    %4161 = vmatpush.msra.mxu0 %v4150
    %4162 = vmatpush.msra.mxu0 %v4149
    %4163 = vmatpush.msra.mxu0 %v4148
    %4164 = vmatpush.msra.mxu0 %v4147
    %4165 = vmatpush.msra.mxu0 %v4146
    %4166 = vmatpush.msra.mxu0 %v4145
    %4167 = vmatpush.msra.mxu0 %v4144
    %4168 = vmatpush.msra.mxu0 %v4143
    %4169 = vmatpush.msra.mxu0 %v4142
    %4170 = vmatpush.msra.mxu0 %v4141
    %4171 = vmatpush.msra.mxu0 %v4140
    %4172 = vmatpush.msra.mxu0 %v4139
    %4173 = vmatpush.msra.mxu0 %v4138
    %4174 = vmatmul.f32.gmra.mxu0 %v4130
    %v4175 = vpop.f32.mrf.mxu0
    %v4176 = vadd.f32 %v4156, %v4175
    %4177 = vmatmul.f32.gmra.mxu0 %v4131
    %v4178 = vpop.f32.mrf.mxu0
    %v4179 = vadd.f32 %v4156, %v4178
    %4180 = vmatmul.f32.gmra.mxu0 %v4132
    %v4181 = vpop.f32.mrf.mxu0
    %v4182 = vadd.f32 %v4156, %v4181
    %4183 = vmatmul.f32.gmra.mxu0 %v4133
    %v4184 = vpop.f32.mrf.mxu0
    %v4185 = vadd.f32 %v4156, %v4184
    %4186 = vmatmul.f32.gmra.mxu0 %v4134
    %v4187 = vpop.f32.mrf.mxu0
    %v4188 = vadd.f32 %v4156, %v4187
    %4189 = vmatmul.f32.gmra.mxu0 %v4135
    %v4190 = vpop.f32.mrf.mxu0
    %v4191 = vadd.f32 %v4156, %v4190
    %4192 = vmatmul.f32.gmra.mxu0 %v4136
    %v4193 = vpop.f32.mrf.mxu0
    %v4194 = vadd.f32 %v4156, %v4193
    %4195 = vmatmul.f32.gmra.mxu0 %v4137
    %v4196 = vpop.f32.mrf.mxu0
    %v4197 = vadd.f32 %v4156, %v4196
    %4198 = vdwg.mxu0
    %4199 = vst [vmem:[#allocation26] sm:$0xff] %v4176
    %4200 = vst [vmem:[#allocation26 + $0x8] sm:$0xff] %v4179
    %4201 = vst [vmem:[#allocation26 + $0x10] sm:$0xff] %v4182
    %4202 = vst [vmem:[#allocation26 + $0x18] sm:$0xff] %v4185
    %4203 = vst [vmem:[#allocation26 + $0x20] sm:$0xff] %v4188
    %4204 = vst [vmem:[#allocation26 + $0x28] sm:$0xff] %v4191
    %4205 = vst [vmem:[#allocation26 + $0x30] sm:$0xff] %v4194
    %4206 = vst [vmem:[#allocation26 + $0x38] sm:$0xff] %v4197
    // Predicated region
    $region118: #{tpu_custom_call.1} parent=1 // pred_check
      _
    $region119: #{tpu_custom_call.1} parent=1 // pred_check_branch
      %4208 = sbr.rel (0) target = $region121
    $region120: #{tpu_custom_call.1} parent=1 // pred_region
      %4210 = vsyncadd [#allocation5], 0
      %s4211 = sshll.u32 [#allocation26], 4
      %s4212 = int_to_ptr.vmem [resolvable:$true] %s4211
      %s4213 = sshll.u32 %s15, 4
      %s4214 = int_to_ptr.hbm [resolvable:$true] %s4213
      %4219 = dma.vmem_to_hbm [thread:$0]  %s4212, 1024, %s4214, [#allocation5], 128, 128, 8
    $region121: #{tpu_custom_call.1} parent=1 // pred_fallthru
      _
    // Predicated region
    $region122: #{tpu_custom_call.1} parent=1 // pred_check
      _
    $region123: #{tpu_custom_call.1} parent=1 // pred_check_branch
      %4221 = sbr.rel (0) target = $region125
    $region124: #{tpu_custom_call.1} parent=1 // pred_region
      %4223 = dma.done [#allocation5], 1024
    $region125: #{tpu_custom_call.1} parent=1 // pred_fallthru
      _
    %4224 = vsyncpa [#allocation4], 1
    %4225 = vsyncpa [#allocation7], 1
    %4226 = vsyncpa [#allocation10], 1
    %4227 = vsyncpa [#allocation13], 1
    %4228 = vsyncpa [#allocation16], 1
    %4229 = vsyncpa [#allocation19], 1
    %4230 = vsyncpa [#allocation22], 1
    %4231 = vsyncpa [#allocation25], 1
    %4232 = vsyncpa [#allocation5], 1

</llo_original>
